<compile_context>
chip_gen: v7x
topology: tpu7x:2x2x1
jax: 0.10.0
libtpu: 0.0.40
codegen_flags: <defaults>
</compile_context>

<pallas_src>
import functools

import numpy as np
import jax
import jax.numpy as jnp
from jax import lax
from jax.experimental import pallas as pl
from jax.experimental.pallas import tpu as pltpu


def _round_up(n, m):
    return ((n + m - 1) // m) * m


# ------------------------------ fused kernel -------------------------------

def _net_kernel(x_ref, t1_ref, b1_ref, r1_ref, c1_ref,
                t2_ref, b2_ref, r2_ref, c2_ref,
                w1p_ref, bf1_ref, w2p_ref, bf2_ref, w3p_ref, bf3_ref,
                out_ref, fc_ref):
    """TILE_B images per grid step: per-image convs/pools, batched FC stack."""
    f32 = jnp.float32
    bf16 = jnp.bfloat16

    def mm(a, b):
        # bf16 operands on the MXU, f32 accumulation (weights already bf16).
        return jnp.dot(a.astype(bf16), b.astype(bf16), preferred_element_type=f32)

    TB = x_ref.shape[0]            # images per grid step
    KH1 = t1_ref.shape[0]          # conv1 kernel height (5)
    KH2 = t2_ref.shape[0]          # conv2 kernel height (5)
    OH1 = r1_ref.shape[2]          # conv1 output rows (24)
    OH2 = r2_ref.shape[2]          # conv2 output rows (8)
    NR = w1p_ref.shape[0]          # pooled2 rows folded into fc1 (4)

    def per_image(b, carry):
        xb = x_ref[b]              # (H, IC*W) f32, image rows x (channel,width) lanes

        # conv1 + bias + ReLU: KH row-shifted Toeplitz matmuls, lane-dense out.
        # (Row-shift slices are unaligned sublane starts; small relayout cost,
        #  exact.  pltpu.roll(xb, -di, 0) is an alternative if the dump shows
        #  copies.)
        acc = mm(xb[0:OH1, :], t1_ref[0])
        for di in range(1, KH1):
            acc = acc + mm(xb[di:di + OH1, :], t1_ref[di])
        y1 = jnp.maximum(acc + b1_ref[...], 0.0)                      # (24, 144)

        # 2x2 max-pool via exact 0/1 selection matmuls (kept on MXU per the
        # review's fallback; strided slices would be the VPU alternative).
        rmax = jnp.maximum(mm(r1_ref[0], y1), mm(r1_ref[1], y1))      # (12, 144)
        p1 = jnp.maximum(mm(rmax, c1_ref[0]), mm(rmax, c1_ref[1]))    # (12, 72)

        # conv2 + bias + ReLU
        acc2 = mm(p1[0:OH2, :], t2_ref[0])
        for di in range(1, KH2):
            acc2 = acc2 + mm(p1[di:di + OH2, :], t2_ref[di])
        y2 = jnp.maximum(acc2 + b2_ref[...], 0.0)                     # (8, 128)

        # 2x2 max-pool
        rmax2 = jnp.maximum(mm(r2_ref[0], y2), mm(r2_ref[1], y2))     # (4, 128)
        p2 = jnp.maximum(mm(rmax2, c2_ref[0]), mm(rmax2, c2_ref[1]))  # (4, 64)

        fc_ref[b] = p2             # stage pooled features for the batched FC
        return carry

    lax.fori_loop(0, TB, per_image, 0)

    # ---- FC stack with batch on the MXU M axis (flatten folded into w1p) ----
    h = mm(fc_ref[:, 0, :], w1p_ref[0])
    for r in range(1, NR):
        h = h + mm(fc_ref[:, r, :], w1p_ref[r])
    h = jnp.maximum(h + bf1_ref[...], 0.0)                            # (TB, 120)
    h = jnp.maximum(mm(h, w2p_ref[...]) + bf2_ref[...], 0.0)          # (TB, 84)
    o = mm(h, w3p_ref[...]) + bf3_ref[...]                            # (TB, 128) padded logits
    out_ref[...] = o.astype(out_ref.dtype)


# --------------------------- one-time weight packing ------------------------

def prepare_params(params, H=28, W=28):
    """Pack PyTorch-layout params into kernel-ready constants (done once)."""
    w1 = np.asarray(params["conv1_w"], np.float32)   # (OC1, IC, KH, KW)
    b1 = np.asarray(params["conv1_b"], np.float32)
    w2 = np.asarray(params["conv2_w"], np.float32)   # (OC2, OC1, KH, KW)
    b2 = np.asarray(params["conv2_b"], np.float32)
    fc1w = np.asarray(params["fc1_w"], np.float32)   # (120, OC2*4*4)
    fc1b = np.asarray(params["fc1_b"], np.float32)
    fc2w = np.asarray(params["fc2_w"], np.float32)   # (84, 120)
    fc2b = np.asarray(params["fc2_b"], np.float32)
    fc3w = np.asarray(params["fc3_w"], np.float32)   # (NC, 84)
    fc3b = np.asarray(params["fc3_b"], np.float32)

    OC1, IC, KH, KW = w1.shape
    OC2 = w2.shape[0]
    OH1, OW1 = H - KH + 1, W - KW + 1        # 24, 24
    PH1, PW1 = OH1 // 2, OW1 // 2            # 12, 12
    OH2, OW2 = PH1 - KH + 1, PW1 - KW + 1    # 8, 8
    PH2, PW2 = OH2 // 2, OW2 // 2            # 4, 4
    assert fc1w.shape[1] == OC2 * PH2 * PW2

    # conv1: per-kernel-row Toeplitz; lanes in = ic*W + w_in, lanes out = oc*OW1 + w_out
    t1 = np.zeros((KH, IC * W, OC1 * OW1), np.float32)
    for di in range(KH):
        for oc in range(OC1):
            for ic in range(IC):
                for jo in range(OW1):
                    for dj in range(KW):
                        t1[di, ic * W + jo + dj, oc * OW1 + jo] = w1[oc, ic, di, dj]
    bias1 = np.repeat(b1, OW1)[None, :]                       # (1, OC1*OW1)

    # conv2: lanes in = ic*PW1 + w_in, lanes out = oc*OW2 + w_out
    t2 = np.zeros((KH, OC1 * PW1, OC2 * OW2), np.float32)
    for di in range(KH):
        for oc in range(OC2):
            for ic in range(OC1):
                for jo in range(OW2):
                    for dj in range(KW):
                        t2[di, ic * PW1 + jo + dj, oc * OW2 + jo] = w2[oc, ic, di, dj]
    bias2 = np.repeat(b2, OW2)[None, :]                       # (1, OC2*OW2)

    # even/odd 0/1 selection matrices for the 2x2 max pools (exact in bf16)
    def row_sel(out_rows, in_rows):
        r = np.zeros((2, out_rows, in_rows), np.float32)
        for ip in range(out_rows):
            r[0, ip, 2 * ip] = 1.0
            r[1, ip, 2 * ip + 1] = 1.0
        return r

    def col_sel(channels, in_w, out_w):
        c = np.zeros((2, channels * in_w, channels * out_w), np.float32)
        for ch in range(channels):
            for jp in range(out_w):
                c[0, ch * in_w + 2 * jp, ch * out_w + jp] = 1.0
                c[1, ch * in_w + 2 * jp + 1, ch * out_w + jp] = 1.0
        return c

    r1 = row_sel(PH1, OH1)           # (2, 12, 24)
    c1 = col_sel(OC1, OW1, PW1)      # (2, 144, 72)
    r2 = row_sel(PH2, OH2)           # (2, 4, 8)
    c2 = col_sel(OC2, OW2, PW2)      # (2, 128, 64)

    # fc1: fold torch's NCHW .view(-1, 16*4*4) into a pre-permuted weight
    # indexed by (pooled_row, oc*PW2 + pooled_col, out_feature)
    nf1 = fc1w.shape[0]
    w1p = np.zeros((PH2, OC2 * PW2, nf1), np.float32)
    for ip in range(PH2):
        for oc in range(OC2):
            for jp in range(PW2):
                w1p[ip, oc * PW2 + jp, :] = fc1w[:, oc * PH2 * PW2 + ip * PW2 + jp]

    # fc3: pad the output lane axis to 128 so the kernel writes lane-dense blocks
    NC = fc3w.shape[0]
    n_pad = max(128, _round_up(NC, 128))
    w3p = np.zeros((fc3w.shape[1], n_pad), np.float32)
    w3p[:, :NC] = fc3w.T
    b3p = np.zeros((1, n_pad), np.float32)
    b3p[0, :NC] = fc3b

    as_mx = lambda a: jnp.asarray(a, jnp.bfloat16)   # MXU operands -> bf16
    as_ep = lambda a: jnp.asarray(a, jnp.float32)    # VPU epilogue constants -> f32
    return {
        "t1": as_mx(t1), "bias1": as_ep(bias1), "r1": as_mx(r1), "c1": as_mx(c1),
        "t2": as_mx(t2), "bias2": as_ep(bias2), "r2": as_mx(r2), "c2": as_mx(c2),
        "w1p": as_mx(w1p), "bf1": as_ep(fc1b[None, :]),
        "w2p": as_mx(np.ascontiguousarray(fc2w.T)), "bf2": as_ep(fc2b[None, :]),
        "w3p": as_mx(w3p), "bf3": as_ep(b3p),
    }


# -------------------------------- forward ----------------------------------

_WEIGHT_ORDER = ("t1", "bias1", "r1", "c1", "t2", "bias2", "r2", "c2",
                 "w1p", "bf1", "w2p", "bf2", "w3p", "bf3")


def net_forward(x_nchw, packed, *, num_classes, tile_b=32):
    B, IC, H, W = x_nchw.shape
    n_pad = packed["bf3"].shape[1]
    assert num_classes <= n_pad

    # Batch tile: multiple of 8 (sublane-aligned), capped at the padded batch.
    # tile_b ~ 32 is a good default on all gens; VMEM footprint stays < 1 MiB
    # so no per-generation vmem_limit_bytes tuning is required.
    tb = _round_up(max(1, min(tile_b, B)), 8)
    Bp = _round_up(B, tb)

    # NCHW -> (B, H, IC*W); free reshape for IC == 1. Pad batch with zeros.
    x = jnp.transpose(x_nchw, (0, 2, 1, 3)).reshape(B, H, IC * W)
    if Bp != B:
        x = jnp.pad(x, ((0, Bp - B), (0, 0), (0, 0)))

    w_args = [packed[k] for k in _WEIGHT_ORDER]

    def full_spec(arr):
        return pl.BlockSpec(arr.shape, lambda g, n=arr.ndim: (0,) * n)

    ph2, c2w2 = packed["w1p"].shape[0], packed["w1p"].shape[1]

    out = pl.pallas_call(
        _net_kernel,
        out_shape=jax.ShapeDtypeStruct((Bp, n_pad), jnp.float32),
        grid=(Bp // tb,),
        in_specs=[pl.BlockSpec((tb, H, IC * W), lambda g: (g, 0, 0))]
                 + [full_spec(a) for a in w_args],
        out_specs=pl.BlockSpec((tb, n_pad), lambda g: (g, 0)),
        scratch_shapes=[pltpu.VMEM((tb, ph2, c2w2), jnp.float32)],
        compiler_params=pltpu.CompilerParams(
            dimension_semantics=("parallel",)),
    )(x, *w_args)
    return out[:B, :num_classes]


# ------------------------------ params / check ------------------------------

def init_params(key, n_channels=1, num_classes=10):
    ks = jax.random.split(key, 10)
    f32 = jnp.float32
    return {
        "conv1_w": 0.1 * jax.random.normal(ks[0], (6, n_channels, 5, 5), f32),
        "conv1_b": 0.1 * jax.random.normal(ks[1], (6,), f32),
        "conv2_w": 0.1 * jax.random.normal(ks[2], (16, 6, 5, 5), f32),
        "conv2_b": 0.1 * jax.random.normal(ks[3], (16,), f32),
        "fc1_w": 0.1 * jax.random.normal(ks[4], (120, 16 * 4 * 4), f32),
        "fc1_b": 0.1 * jax.random.normal(ks[5], (120,), f32),
        "fc2_w": 0.1 * jax.random.normal(ks[6], (84, 120), f32),
        "fc2_b": 0.1 * jax.random.normal(ks[7], (84,), f32),
        "fc3_w": 0.1 * jax.random.normal(ks[8], (num_classes, 84), f32),
        "fc3_b": 0.1 * jax.random.normal(ks[9], (num_classes,), f32),
    }


def _reference_forward(x_nchw, params):
    """Pure-JAX f32 reference (no Pallas) matching the PyTorch module."""
    x = jnp.transpose(x_nchw, (0, 2, 3, 1))

    def conv_relu(x, w, b):
        B, H, W, C = x.shape
        OC, IC, KH, KW = w.shape
        OH, OW = H - KH + 1, W - KW + 1
        cols = [x[:, i:i + OH, j:j + OW, :] for i in range(KH) for j in range(KW)]
        p = jnp.stack(cols, axis=3).reshape(B * OH * OW, KH * KW * IC)
        wf = jnp.transpose(w, (2, 3, 1, 0)).reshape(KH * KW * IC, OC)
        return jnp.maximum(p @ wf + b, 0.0).reshape(B, OH, OW, OC)

    def pool(x):
        return jnp.maximum(jnp.maximum(x[:, 0::2, 0::2, :], x[:, 0::2, 1::2, :]),
                           jnp.maximum(x[:, 1::2, 0::2, :], x[:, 1::2, 1::2, :]))

    x = pool(conv_relu(x, params["conv1_w"], params["conv1_b"]))
    x = pool(conv_relu(x, params["conv2_w"], params["conv2_b"]))
    B = x.shape[0]
    x = jnp.transpose(x, (0, 3, 1, 2)).reshape(B, -1)
    x = jnp.maximum(x @ params["fc1_w"].T + params["fc1_b"], 0.0)
    x = jnp.maximum(x @ params["fc2_w"].T + params["fc2_b"], 0.0)
    return x @ params["fc3_w"].T + params["fc3_b"]


if __name__ == "__main__":
    key = jax.random.PRNGKey(0)
    kx, kp = jax.random.split(key)
    B, NC = 20, 10
    # 28x28 input so the flatten matches 16*4*4 (LeNet/MNIST geometry);
    # B=20 with tile_b=8 exercises batch padding and a multi-step parallel grid.
    x = jax.random.normal(kx, (B, 1, 28, 28), jnp.float32)
    params = init_params(kp, n_channels=1, num_classes=NC)
    packed = prepare_params(params)       # one-time weight packing (bf16 MXU operands)

    fwd = jax.jit(functools.partial(net_forward, num_classes=NC, tile_b=8))
    out = jax.block_until_ready(fwd(x, packed))
    assert out.shape == (B, NC) and out.dtype == jnp.float32

    ref = jax.block_until_ready(jax.jit(_reference_forward)(x, params))
    # bf16 matmul operands vs f32 reference -> loosened tolerance (review note).
    np.testing.assert_allclose(np.asarray(out), np.asarray(ref), rtol=5e-2, atol=5e-2)
    print("KERNEL_OK")
</pallas_src>

<mosaic_0001>
module attributes {stable_mosaic.version = 11 : i64} {
  func.func @_net_kernel(%arg0: i32, %arg1: memref<8x28x28xf32, #tpu.memory_space<vmem>>, %arg2: memref<5x28x144xbf16, #tpu.memory_space<vmem>>, %arg3: memref<1x144xf32, #tpu.memory_space<vmem>>, %arg4: memref<2x12x24xbf16, #tpu.memory_space<vmem>>, %arg5: memref<2x144x72xbf16, #tpu.memory_space<vmem>>, %arg6: memref<5x72x128xbf16, #tpu.memory_space<vmem>>, %arg7: memref<1x128xf32, #tpu.memory_space<vmem>>, %arg8: memref<2x4x8xbf16, #tpu.memory_space<vmem>>, %arg9: memref<2x128x64xbf16, #tpu.memory_space<vmem>>, %arg10: memref<4x64x120xbf16, #tpu.memory_space<vmem>>, %arg11: memref<1x120xf32, #tpu.memory_space<vmem>>, %arg12: memref<120x84xbf16, #tpu.memory_space<vmem>>, %arg13: memref<1x84xf32, #tpu.memory_space<vmem>>, %arg14: memref<84x128xbf16, #tpu.memory_space<vmem>>, %arg15: memref<1x128xf32, #tpu.memory_space<vmem>>, %arg16: memref<8x128xf32, #tpu.memory_space<vmem>>, %arg17: memref<8x4x64xf32, #tpu.memory_space<vmem>>) attributes {dimension_semantics = [#tpu.dimension_semantics<parallel>], iteration_bounds = array<i64: 3>, scalar_prefetch = 0 : i64, scratch_operands = 1 : i64, tpu.core_type = #tpu.core_type<tc>, window_params = [{transform_indices = @transform_0, window_bounds = array<i64: 8, 28, 28>}, {pipeline_mode = #tpu.pipeline_mode<synchronous>, transform_indices = @transform_1, window_bounds = array<i64: 5, 28, 144>}, {pipeline_mode = #tpu.pipeline_mode<synchronous>, transform_indices = @transform_2, window_bounds = array<i64: 1, 144>}, {pipeline_mode = #tpu.pipeline_mode<synchronous>, transform_indices = @transform_3, window_bounds = array<i64: 2, 12, 24>}, {pipeline_mode = #tpu.pipeline_mode<synchronous>, transform_indices = @transform_4, window_bounds = array<i64: 2, 144, 72>}, {pipeline_mode = #tpu.pipeline_mode<synchronous>, transform_indices = @transform_5, window_bounds = array<i64: 5, 72, 128>}, {pipeline_mode = #tpu.pipeline_mode<synchronous>, transform_indices = @transform_6, window_bounds = array<i64: 1, 128>}, {pipeline_mode = #tpu.pipeline_mode<synchronous>, transform_indices = @transform_7, window_bounds = array<i64: 2, 4, 8>}, {pipeline_mode = #tpu.pipeline_mode<synchronous>, transform_indices = @transform_8, window_bounds = array<i64: 2, 128, 64>}, {pipeline_mode = #tpu.pipeline_mode<synchronous>, transform_indices = @transform_9, window_bounds = array<i64: 4, 64, 120>}, {pipeline_mode = #tpu.pipeline_mode<synchronous>, transform_indices = @transform_10, window_bounds = array<i64: 1, 120>}, {pipeline_mode = #tpu.pipeline_mode<synchronous>, transform_indices = @transform_11, window_bounds = array<i64: 120, 84>}, {pipeline_mode = #tpu.pipeline_mode<synchronous>, transform_indices = @transform_12, window_bounds = array<i64: 1, 84>}, {pipeline_mode = #tpu.pipeline_mode<synchronous>, transform_indices = @transform_13, window_bounds = array<i64: 84, 128>}, {pipeline_mode = #tpu.pipeline_mode<synchronous>, transform_indices = @transform_14, window_bounds = array<i64: 1, 128>}, {transform_indices = @transform_15, window_bounds = array<i64: 8, 128>}]} {
    %c0_i32 = arith.constant 0 : i32
    %c8_i32 = arith.constant 8 : i32
    %0 = arith.addi %c0_i32, %c8_i32 : i32
    %c1_i32 = arith.constant 1 : i32
    scf.for %arg18 = %c0_i32 to %0 step %c1_i32  : i32 {
      %48 = arith.index_cast %arg18 : i32 to index
      %c0_40 = arith.constant 0 : index
      %c0_41 = arith.constant 0 : index
      %49 = vector.load %arg1[%48, %c0_40, %c0_41] : memref<8x28x28xf32, #tpu.memory_space<vmem>>, vector<1x28x28xf32>
      %50 = vector.shape_cast %49 : vector<1x28x28xf32> to vector<28x28xf32>
      %51 = vector.extract_strided_slice %50 {offsets = [0, 0], sizes = [24, 28], strides = [1, 1]} : vector<28x28xf32> to vector<24x28xf32>
      %c0_42 = arith.constant 0 : index
      %c0_43 = arith.constant 0 : index
      %c0_44 = arith.constant 0 : index
      %52 = vector.load %arg2[%c0_42, %c0_43, %c0_44] : memref<5x28x144xbf16, #tpu.memory_space<vmem>>, vector<1x28x144xbf16>
      %53 = vector.shape_cast %52 : vector<1x28x144xbf16> to vector<28x144xbf16>
      %54 = arith.truncf %51 : vector<24x28xf32> to vector<24x28xbf16>
      %cst_45 = arith.constant dense<0.000000e+00> : vector<24x144xf32>
      %55 = tpu.matmul %54, %53, %cst_45 {dimension_numbers = #tpu.dot_dimension_numbers<[1], [0], [0], [1], [0, 0, 1, 1], [], []>} : vector<24x28xbf16>, vector<28x144xbf16>, vector<24x144xf32> -> vector<24x144xf32>
      %56 = vector.extract_strided_slice %50 {offsets = [1, 0], sizes = [24, 28], strides = [1, 1]} : vector<28x28xf32> to vector<24x28xf32>
      %c1_46 = arith.constant 1 : index
      %c0_47 = arith.constant 0 : index
      %c0_48 = arith.constant 0 : index
      %57 = vector.load %arg2[%c1_46, %c0_47, %c0_48] : memref<5x28x144xbf16, #tpu.memory_space<vmem>>, vector<1x28x144xbf16>
      %58 = vector.shape_cast %57 : vector<1x28x144xbf16> to vector<28x144xbf16>
      %59 = arith.truncf %56 : vector<24x28xf32> to vector<24x28xbf16>
      %cst_49 = arith.constant dense<0.000000e+00> : vector<24x144xf32>
      %60 = tpu.matmul %59, %58, %cst_49 {dimension_numbers = #tpu.dot_dimension_numbers<[1], [0], [0], [1], [0, 0, 1, 1], [], []>} : vector<24x28xbf16>, vector<28x144xbf16>, vector<24x144xf32> -> vector<24x144xf32>
      %61 = arith.addf %55, %60 : vector<24x144xf32>
      %62 = vector.extract_strided_slice %50 {offsets = [2, 0], sizes = [24, 28], strides = [1, 1]} : vector<28x28xf32> to vector<24x28xf32>
      %c2_50 = arith.constant 2 : index
      %c0_51 = arith.constant 0 : index
      %c0_52 = arith.constant 0 : index
      %63 = vector.load %arg2[%c2_50, %c0_51, %c0_52] : memref<5x28x144xbf16, #tpu.memory_space<vmem>>, vector<1x28x144xbf16>
      %64 = vector.shape_cast %63 : vector<1x28x144xbf16> to vector<28x144xbf16>
      %65 = arith.truncf %62 : vector<24x28xf32> to vector<24x28xbf16>
      %cst_53 = arith.constant dense<0.000000e+00> : vector<24x144xf32>
      %66 = tpu.matmul %65, %64, %cst_53 {dimension_numbers = #tpu.dot_dimension_numbers<[1], [0], [0], [1], [0, 0, 1, 1], [], []>} : vector<24x28xbf16>, vector<28x144xbf16>, vector<24x144xf32> -> vector<24x144xf32>
      %67 = arith.addf %61, %66 : vector<24x144xf32>
      %68 = vector.extract_strided_slice %50 {offsets = [3, 0], sizes = [24, 28], strides = [1, 1]} : vector<28x28xf32> to vector<24x28xf32>
      %c3_54 = arith.constant 3 : index
      %c0_55 = arith.constant 0 : index
      %c0_56 = arith.constant 0 : index
      %69 = vector.load %arg2[%c3_54, %c0_55, %c0_56] : memref<5x28x144xbf16, #tpu.memory_space<vmem>>, vector<1x28x144xbf16>
      %70 = vector.shape_cast %69 : vector<1x28x144xbf16> to vector<28x144xbf16>
      %71 = arith.truncf %68 : vector<24x28xf32> to vector<24x28xbf16>
      %cst_57 = arith.constant dense<0.000000e+00> : vector<24x144xf32>
      %72 = tpu.matmul %71, %70, %cst_57 {dimension_numbers = #tpu.dot_dimension_numbers<[1], [0], [0], [1], [0, 0, 1, 1], [], []>} : vector<24x28xbf16>, vector<28x144xbf16>, vector<24x144xf32> -> vector<24x144xf32>
      %73 = arith.addf %67, %72 : vector<24x144xf32>
      %74 = vector.extract_strided_slice %50 {offsets = [4, 0], sizes = [24, 28], strides = [1, 1]} : vector<28x28xf32> to vector<24x28xf32>
      %c4 = arith.constant 4 : index
      %c0_58 = arith.constant 0 : index
      %c0_59 = arith.constant 0 : index
      %75 = vector.load %arg2[%c4, %c0_58, %c0_59] : memref<5x28x144xbf16, #tpu.memory_space<vmem>>, vector<1x28x144xbf16>
      %76 = vector.shape_cast %75 : vector<1x28x144xbf16> to vector<28x144xbf16>
      %77 = arith.truncf %74 : vector<24x28xf32> to vector<24x28xbf16>
      %cst_60 = arith.constant dense<0.000000e+00> : vector<24x144xf32>
      %78 = tpu.matmul %77, %76, %cst_60 {dimension_numbers = #tpu.dot_dimension_numbers<[1], [0], [0], [1], [0, 0, 1, 1], [], []>} : vector<24x28xbf16>, vector<28x144xbf16>, vector<24x144xf32> -> vector<24x144xf32>
      %79 = arith.addf %73, %78 : vector<24x144xf32>
      %c0_61 = arith.constant 0 : index
      %c0_62 = arith.constant 0 : index
      %80 = vector.load %arg3[%c0_61, %c0_62] : memref<1x144xf32, #tpu.memory_space<vmem>>, vector<1x144xf32>
      %81 = vector.broadcast %80 : vector<1x144xf32> to vector<24x144xf32>
      %82 = arith.addf %79, %81 : vector<24x144xf32>
      %cst_63 = arith.constant 0.000000e+00 : f32
      %83 = vector.broadcast %cst_63 : f32 to vector<24x144xf32>
      %84 = arith.maximumf %82, %83 : vector<24x144xf32>
      %c0_64 = arith.constant 0 : index
      %c0_65 = arith.constant 0 : index
      %c0_66 = arith.constant 0 : index
      %85 = vector.load %arg4[%c0_64, %c0_65, %c0_66] : memref<2x12x24xbf16, #tpu.memory_space<vmem>>, vector<1x12x24xbf16>
      %86 = vector.shape_cast %85 : vector<1x12x24xbf16> to vector<12x24xbf16>
      %87 = arith.truncf %84 : vector<24x144xf32> to vector<24x144xbf16>
      %cst_67 = arith.constant dense<0.000000e+00> : vector<12x144xf32>
      %88 = tpu.matmul %86, %87, %cst_67 {dimension_numbers = #tpu.dot_dimension_numbers<[1], [0], [0], [1], [0, 0, 1, 1], [], []>} : vector<12x24xbf16>, vector<24x144xbf16>, vector<12x144xf32> -> vector<12x144xf32>
      %c1_68 = arith.constant 1 : index
      %c0_69 = arith.constant 0 : index
      %c0_70 = arith.constant 0 : index
      %89 = vector.load %arg4[%c1_68, %c0_69, %c0_70] : memref<2x12x24xbf16, #tpu.memory_space<vmem>>, vector<1x12x24xbf16>
      %90 = vector.shape_cast %89 : vector<1x12x24xbf16> to vector<12x24xbf16>
      %91 = arith.truncf %84 : vector<24x144xf32> to vector<24x144xbf16>
      %cst_71 = arith.constant dense<0.000000e+00> : vector<12x144xf32>
      %92 = tpu.matmul %90, %91, %cst_71 {dimension_numbers = #tpu.dot_dimension_numbers<[1], [0], [0], [1], [0, 0, 1, 1], [], []>} : vector<12x24xbf16>, vector<24x144xbf16>, vector<12x144xf32> -> vector<12x144xf32>
      %93 = arith.maximumf %88, %92 : vector<12x144xf32>
      %c0_72 = arith.constant 0 : index
      %c0_73 = arith.constant 0 : index
      %c0_74 = arith.constant 0 : index
      %94 = vector.load %arg5[%c0_72, %c0_73, %c0_74] : memref<2x144x72xbf16, #tpu.memory_space<vmem>>, vector<1x144x72xbf16>
      %95 = vector.shape_cast %94 : vector<1x144x72xbf16> to vector<144x72xbf16>
      %96 = arith.truncf %93 : vector<12x144xf32> to vector<12x144xbf16>
      %cst_75 = arith.constant dense<0.000000e+00> : vector<12x72xf32>
      %97 = tpu.matmul %96, %95, %cst_75 {dimension_numbers = #tpu.dot_dimension_numbers<[1], [0], [0], [1], [0, 0, 1, 1], [], []>} : vector<12x144xbf16>, vector<144x72xbf16>, vector<12x72xf32> -> vector<12x72xf32>
      %c1_76 = arith.constant 1 : index
      %c0_77 = arith.constant 0 : index
      %c0_78 = arith.constant 0 : index
      %98 = vector.load %arg5[%c1_76, %c0_77, %c0_78] : memref<2x144x72xbf16, #tpu.memory_space<vmem>>, vector<1x144x72xbf16>
      %99 = vector.shape_cast %98 : vector<1x144x72xbf16> to vector<144x72xbf16>
      %100 = arith.truncf %93 : vector<12x144xf32> to vector<12x144xbf16>
      %cst_79 = arith.constant dense<0.000000e+00> : vector<12x72xf32>
      %101 = tpu.matmul %100, %99, %cst_79 {dimension_numbers = #tpu.dot_dimension_numbers<[1], [0], [0], [1], [0, 0, 1, 1], [], []>} : vector<12x144xbf16>, vector<144x72xbf16>, vector<12x72xf32> -> vector<12x72xf32>
      %102 = arith.maximumf %97, %101 : vector<12x72xf32>
      %103 = vector.extract_strided_slice %102 {offsets = [0, 0], sizes = [8, 72], strides = [1, 1]} : vector<12x72xf32> to vector<8x72xf32>
      %c0_80 = arith.constant 0 : index
      %c0_81 = arith.constant 0 : index
      %c0_82 = arith.constant 0 : index
      %104 = vector.load %arg6[%c0_80, %c0_81, %c0_82] : memref<5x72x128xbf16, #tpu.memory_space<vmem>>, vector<1x72x128xbf16>
      %105 = vector.shape_cast %104 : vector<1x72x128xbf16> to vector<72x128xbf16>
      %106 = arith.truncf %103 : vector<8x72xf32> to vector<8x72xbf16>
      %cst_83 = arith.constant dense<0.000000e+00> : vector<8x128xf32>
      %107 = tpu.matmul %106, %105, %cst_83 {dimension_numbers = #tpu.dot_dimension_numbers<[1], [0], [0], [1], [0, 0, 1, 1], [], []>} : vector<8x72xbf16>, vector<72x128xbf16>, vector<8x128xf32> -> vector<8x128xf32>
      %108 = vector.extract_strided_slice %102 {offsets = [1, 0], sizes = [8, 72], strides = [1, 1]} : vector<12x72xf32> to vector<8x72xf32>
      %c1_84 = arith.constant 1 : index
      %c0_85 = arith.constant 0 : index
      %c0_86 = arith.constant 0 : index
      %109 = vector.load %arg6[%c1_84, %c0_85, %c0_86] : memref<5x72x128xbf16, #tpu.memory_space<vmem>>, vector<1x72x128xbf16>
      %110 = vector.shape_cast %109 : vector<1x72x128xbf16> to vector<72x128xbf16>
      %111 = arith.truncf %108 : vector<8x72xf32> to vector<8x72xbf16>
      %cst_87 = arith.constant dense<0.000000e+00> : vector<8x128xf32>
      %112 = tpu.matmul %111, %110, %cst_87 {dimension_numbers = #tpu.dot_dimension_numbers<[1], [0], [0], [1], [0, 0, 1, 1], [], []>} : vector<8x72xbf16>, vector<72x128xbf16>, vector<8x128xf32> -> vector<8x128xf32>
      %113 = arith.addf %107, %112 : vector<8x128xf32>
      %114 = vector.extract_strided_slice %102 {offsets = [2, 0], sizes = [8, 72], strides = [1, 1]} : vector<12x72xf32> to vector<8x72xf32>
      %c2_88 = arith.constant 2 : index
      %c0_89 = arith.constant 0 : index
      %c0_90 = arith.constant 0 : index
      %115 = vector.load %arg6[%c2_88, %c0_89, %c0_90] : memref<5x72x128xbf16, #tpu.memory_space<vmem>>, vector<1x72x128xbf16>
      %116 = vector.shape_cast %115 : vector<1x72x128xbf16> to vector<72x128xbf16>
      %117 = arith.truncf %114 : vector<8x72xf32> to vector<8x72xbf16>
      %cst_91 = arith.constant dense<0.000000e+00> : vector<8x128xf32>
      %118 = tpu.matmul %117, %116, %cst_91 {dimension_numbers = #tpu.dot_dimension_numbers<[1], [0], [0], [1], [0, 0, 1, 1], [], []>} : vector<8x72xbf16>, vector<72x128xbf16>, vector<8x128xf32> -> vector<8x128xf32>
      %119 = arith.addf %113, %118 : vector<8x128xf32>
      %120 = vector.extract_strided_slice %102 {offsets = [3, 0], sizes = [8, 72], strides = [1, 1]} : vector<12x72xf32> to vector<8x72xf32>
      %c3_92 = arith.constant 3 : index
      %c0_93 = arith.constant 0 : index
      %c0_94 = arith.constant 0 : index
      %121 = vector.load %arg6[%c3_92, %c0_93, %c0_94] : memref<5x72x128xbf16, #tpu.memory_space<vmem>>, vector<1x72x128xbf16>
      %122 = vector.shape_cast %121 : vector<1x72x128xbf16> to vector<72x128xbf16>
      %123 = arith.truncf %120 : vector<8x72xf32> to vector<8x72xbf16>
      %cst_95 = arith.constant dense<0.000000e+00> : vector<8x128xf32>
      %124 = tpu.matmul %123, %122, %cst_95 {dimension_numbers = #tpu.dot_dimension_numbers<[1], [0], [0], [1], [0, 0, 1, 1], [], []>} : vector<8x72xbf16>, vector<72x128xbf16>, vector<8x128xf32> -> vector<8x128xf32>
      %125 = arith.addf %119, %124 : vector<8x128xf32>
      %126 = vector.extract_strided_slice %102 {offsets = [4, 0], sizes = [8, 72], strides = [1, 1]} : vector<12x72xf32> to vector<8x72xf32>
      %c4_96 = arith.constant 4 : index
      %c0_97 = arith.constant 0 : index
      %c0_98 = arith.constant 0 : index
      %127 = vector.load %arg6[%c4_96, %c0_97, %c0_98] : memref<5x72x128xbf16, #tpu.memory_space<vmem>>, vector<1x72x128xbf16>
      %128 = vector.shape_cast %127 : vector<1x72x128xbf16> to vector<72x128xbf16>
      %129 = arith.truncf %126 : vector<8x72xf32> to vector<8x72xbf16>
      %cst_99 = arith.constant dense<0.000000e+00> : vector<8x128xf32>
      %130 = tpu.matmul %129, %128, %cst_99 {dimension_numbers = #tpu.dot_dimension_numbers<[1], [0], [0], [1], [0, 0, 1, 1], [], []>} : vector<8x72xbf16>, vector<72x128xbf16>, vector<8x128xf32> -> vector<8x128xf32>
      %131 = arith.addf %125, %130 : vector<8x128xf32>
      %c0_100 = arith.constant 0 : index
      %c0_101 = arith.constant 0 : index
      %132 = vector.load %arg7[%c0_100, %c0_101] : memref<1x128xf32, #tpu.memory_space<vmem>>, vector<1x128xf32>
      %133 = vector.broadcast %132 : vector<1x128xf32> to vector<8x128xf32>
      %134 = arith.addf %131, %133 : vector<8x128xf32>
      %cst_102 = arith.constant 0.000000e+00 : f32
      %135 = vector.broadcast %cst_102 : f32 to vector<8x128xf32>
      %136 = arith.maximumf %134, %135 : vector<8x128xf32>
      %c0_103 = arith.constant 0 : index
      %c0_104 = arith.constant 0 : index
      %c0_105 = arith.constant 0 : index
      %137 = vector.load %arg8[%c0_103, %c0_104, %c0_105] : memref<2x4x8xbf16, #tpu.memory_space<vmem>>, vector<1x4x8xbf16>
      %138 = vector.shape_cast %137 : vector<1x4x8xbf16> to vector<4x8xbf16>
      %139 = arith.truncf %136 : vector<8x128xf32> to vector<8x128xbf16>
      %cst_106 = arith.constant dense<0.000000e+00> : vector<4x128xf32>
      %140 = tpu.matmul %138, %139, %cst_106 {dimension_numbers = #tpu.dot_dimension_numbers<[1], [0], [0], [1], [0, 0, 1, 1], [], []>} : vector<4x8xbf16>, vector<8x128xbf16>, vector<4x128xf32> -> vector<4x128xf32>
      %c1_107 = arith.constant 1 : index
      %c0_108 = arith.constant 0 : index
      %c0_109 = arith.constant 0 : index
      %141 = vector.load %arg8[%c1_107, %c0_108, %c0_109] : memref<2x4x8xbf16, #tpu.memory_space<vmem>>, vector<1x4x8xbf16>
      %142 = vector.shape_cast %141 : vector<1x4x8xbf16> to vector<4x8xbf16>
      %143 = arith.truncf %136 : vector<8x128xf32> to vector<8x128xbf16>
      %cst_110 = arith.constant dense<0.000000e+00> : vector<4x128xf32>
      %144 = tpu.matmul %142, %143, %cst_110 {dimension_numbers = #tpu.dot_dimension_numbers<[1], [0], [0], [1], [0, 0, 1, 1], [], []>} : vector<4x8xbf16>, vector<8x128xbf16>, vector<4x128xf32> -> vector<4x128xf32>
      %145 = arith.maximumf %140, %144 : vector<4x128xf32>
      %c0_111 = arith.constant 0 : index
      %c0_112 = arith.constant 0 : index
      %c0_113 = arith.constant 0 : index
      %146 = vector.load %arg9[%c0_111, %c0_112, %c0_113] : memref<2x128x64xbf16, #tpu.memory_space<vmem>>, vector<1x128x64xbf16>
      %147 = vector.shape_cast %146 : vector<1x128x64xbf16> to vector<128x64xbf16>
      %148 = arith.truncf %145 : vector<4x128xf32> to vector<4x128xbf16>
      %cst_114 = arith.constant dense<0.000000e+00> : vector<4x64xf32>
      %149 = tpu.matmul %148, %147, %cst_114 {dimension_numbers = #tpu.dot_dimension_numbers<[1], [0], [0], [1], [0, 0, 1, 1], [], []>} : vector<4x128xbf16>, vector<128x64xbf16>, vector<4x64xf32> -> vector<4x64xf32>
      %c1_115 = arith.constant 1 : index
      %c0_116 = arith.constant 0 : index
      %c0_117 = arith.constant 0 : index
      %150 = vector.load %arg9[%c1_115, %c0_116, %c0_117] : memref<2x128x64xbf16, #tpu.memory_space<vmem>>, vector<1x128x64xbf16>
      %151 = vector.shape_cast %150 : vector<1x128x64xbf16> to vector<128x64xbf16>
      %152 = arith.truncf %145 : vector<4x128xf32> to vector<4x128xbf16>
      %cst_118 = arith.constant dense<0.000000e+00> : vector<4x64xf32>
      %153 = tpu.matmul %152, %151, %cst_118 {dimension_numbers = #tpu.dot_dimension_numbers<[1], [0], [0], [1], [0, 0, 1, 1], [], []>} : vector<4x128xbf16>, vector<128x64xbf16>, vector<4x64xf32> -> vector<4x64xf32>
      %154 = arith.maximumf %149, %153 : vector<4x64xf32>
      %155 = arith.index_cast %arg18 : i32 to index
      %c0_119 = arith.constant 0 : index
      %c0_120 = arith.constant 0 : index
      %156 = vector.load %arg17[%155, %c0_119, %c0_120] : memref<8x4x64xf32, #tpu.memory_space<vmem>>, vector<1x4x64xf32>
      %157 = vector.shape_cast %156 : vector<1x4x64xf32> to vector<4x64xf32>
      %158 = vector.shape_cast %154 : vector<4x64xf32> to vector<1x4x64xf32>
      tpu.vector_store %arg17[%155, %c0_119, %c0_120], %158 {strides = array<i32>} : memref<8x4x64xf32, #tpu.memory_space<vmem>>, vector<1x4x64xf32>,
    }
    %c8_i32_0 = arith.constant 8 : i32
    %c0 = arith.constant 0 : index
    %c0_1 = arith.constant 0 : index
    %c0_2 = arith.constant 0 : index
    %1 = vector.load %arg17[%c0, %c0_1, %c0_2] : memref<8x4x64xf32, #tpu.memory_space<vmem>>, vector<8x1x64xf32>
    %2 = vector.shape_cast %1 : vector<8x1x64xf32> to vector<8x64xf32>
    %c0_3 = arith.constant 0 : index
    %c0_4 = arith.constant 0 : index
    %c0_5 = arith.constant 0 : index
    %3 = vector.load %arg10[%c0_3, %c0_4, %c0_5] : memref<4x64x120xbf16, #tpu.memory_space<vmem>>, vector<1x64x120xbf16>
    %4 = vector.shape_cast %3 : vector<1x64x120xbf16> to vector<64x120xbf16>
    %5 = arith.truncf %2 : vector<8x64xf32> to vector<8x64xbf16>
    %cst = arith.constant dense<0.000000e+00> : vector<8x120xf32>
    %6 = tpu.matmul %5, %4, %cst {dimension_numbers = #tpu.dot_dimension_numbers<[1], [0], [0], [1], [0, 0, 1, 1], [], []>} : vector<8x64xbf16>, vector<64x120xbf16>, vector<8x120xf32> -> vector<8x120xf32>
    %c0_6 = arith.constant 0 : index
    %c1 = arith.constant 1 : index
    %c0_7 = arith.constant 0 : index
    %7 = vector.load %arg17[%c0_6, %c1, %c0_7] : memref<8x4x64xf32, #tpu.memory_space<vmem>>, vector<8x1x64xf32>
    %8 = vector.shape_cast %7 : vector<8x1x64xf32> to vector<8x64xf32>
    %c1_8 = arith.constant 1 : index
    %c0_9 = arith.constant 0 : index
    %c0_10 = arith.constant 0 : index
    %9 = vector.load %arg10[%c1_8, %c0_9, %c0_10] : memref<4x64x120xbf16, #tpu.memory_space<vmem>>, vector<1x64x120xbf16>
    %10 = vector.shape_cast %9 : vector<1x64x120xbf16> to vector<64x120xbf16>
    %11 = arith.truncf %8 : vector<8x64xf32> to vector<8x64xbf16>
    %cst_11 = arith.constant dense<0.000000e+00> : vector<8x120xf32>
    %12 = tpu.matmul %11, %10, %cst_11 {dimension_numbers = #tpu.dot_dimension_numbers<[1], [0], [0], [1], [0, 0, 1, 1], [], []>} : vector<8x64xbf16>, vector<64x120xbf16>, vector<8x120xf32> -> vector<8x120xf32>
    %13 = arith.addf %6, %12 : vector<8x120xf32>
    %c0_12 = arith.constant 0 : index
    %c2 = arith.constant 2 : index
    %c0_13 = arith.constant 0 : index
    %14 = vector.load %arg17[%c0_12, %c2, %c0_13] : memref<8x4x64xf32, #tpu.memory_space<vmem>>, vector<8x1x64xf32>
    %15 = vector.shape_cast %14 : vector<8x1x64xf32> to vector<8x64xf32>
    %c2_14 = arith.constant 2 : index
    %c0_15 = arith.constant 0 : index
    %c0_16 = arith.constant 0 : index
    %16 = vector.load %arg10[%c2_14, %c0_15, %c0_16] : memref<4x64x120xbf16, #tpu.memory_space<vmem>>, vector<1x64x120xbf16>
    %17 = vector.shape_cast %16 : vector<1x64x120xbf16> to vector<64x120xbf16>
    %18 = arith.truncf %15 : vector<8x64xf32> to vector<8x64xbf16>
    %cst_17 = arith.constant dense<0.000000e+00> : vector<8x120xf32>
    %19 = tpu.matmul %18, %17, %cst_17 {dimension_numbers = #tpu.dot_dimension_numbers<[1], [0], [0], [1], [0, 0, 1, 1], [], []>} : vector<8x64xbf16>, vector<64x120xbf16>, vector<8x120xf32> -> vector<8x120xf32>
    %20 = arith.addf %13, %19 : vector<8x120xf32>
    %c0_18 = arith.constant 0 : index
    %c3 = arith.constant 3 : index
    %c0_19 = arith.constant 0 : index
    %21 = vector.load %arg17[%c0_18, %c3, %c0_19] : memref<8x4x64xf32, #tpu.memory_space<vmem>>, vector<8x1x64xf32>
    %22 = vector.shape_cast %21 : vector<8x1x64xf32> to vector<8x64xf32>
    %c3_20 = arith.constant 3 : index
    %c0_21 = arith.constant 0 : index
    %c0_22 = arith.constant 0 : index
    %23 = vector.load %arg10[%c3_20, %c0_21, %c0_22] : memref<4x64x120xbf16, #tpu.memory_space<vmem>>, vector<1x64x120xbf16>
    %24 = vector.shape_cast %23 : vector<1x64x120xbf16> to vector<64x120xbf16>
    %25 = arith.truncf %22 : vector<8x64xf32> to vector<8x64xbf16>
    %cst_23 = arith.constant dense<0.000000e+00> : vector<8x120xf32>
    %26 = tpu.matmul %25, %24, %cst_23 {dimension_numbers = #tpu.dot_dimension_numbers<[1], [0], [0], [1], [0, 0, 1, 1], [], []>} : vector<8x64xbf16>, vector<64x120xbf16>, vector<8x120xf32> -> vector<8x120xf32>
    %27 = arith.addf %20, %26 : vector<8x120xf32>
    %c0_24 = arith.constant 0 : index
    %c0_25 = arith.constant 0 : index
    %28 = vector.load %arg11[%c0_24, %c0_25] : memref<1x120xf32, #tpu.memory_space<vmem>>, vector<1x120xf32>
    %29 = vector.broadcast %28 : vector<1x120xf32> to vector<8x120xf32>
    %30 = arith.addf %27, %29 : vector<8x120xf32>
    %cst_26 = arith.constant 0.000000e+00 : f32
    %31 = vector.broadcast %cst_26 : f32 to vector<8x120xf32>
    %32 = arith.maximumf %30, %31 : vector<8x120xf32>
    %c0_27 = arith.constant 0 : index
    %c0_28 = arith.constant 0 : index
    %33 = vector.load %arg12[%c0_27, %c0_28] : memref<120x84xbf16, #tpu.memory_space<vmem>>, vector<120x84xbf16>
    %34 = arith.truncf %32 : vector<8x120xf32> to vector<8x120xbf16>
    %cst_29 = arith.constant dense<0.000000e+00> : vector<8x84xf32>
    %35 = tpu.matmul %34, %33, %cst_29 {dimension_numbers = #tpu.dot_dimension_numbers<[1], [0], [0], [1], [0, 0, 1, 1], [], []>} : vector<8x120xbf16>, vector<120x84xbf16>, vector<8x84xf32> -> vector<8x84xf32>
    %c0_30 = arith.constant 0 : index
    %c0_31 = arith.constant 0 : index
    %36 = vector.load %arg13[%c0_30, %c0_31] : memref<1x84xf32, #tpu.memory_space<vmem>>, vector<1x84xf32>
    %37 = vector.broadcast %36 : vector<1x84xf32> to vector<8x84xf32>
    %38 = arith.addf %35, %37 : vector<8x84xf32>
    %cst_32 = arith.constant 0.000000e+00 : f32
    %39 = vector.broadcast %cst_32 : f32 to vector<8x84xf32>
    %40 = arith.maximumf %38, %39 : vector<8x84xf32>
    %c0_33 = arith.constant 0 : index
    %c0_34 = arith.constant 0 : index
    %41 = vector.load %arg14[%c0_33, %c0_34] : memref<84x128xbf16, #tpu.memory_space<vmem>>, vector<84x128xbf16>
    %42 = arith.truncf %40 : vector<8x84xf32> to vector<8x84xbf16>
    %cst_35 = arith.constant dense<0.000000e+00> : vector<8x128xf32>
    %43 = tpu.matmul %42, %41, %cst_35 {dimension_numbers = #tpu.dot_dimension_numbers<[1], [0], [0], [1], [0, 0, 1, 1], [], []>} : vector<8x84xbf16>, vector<84x128xbf16>, vector<8x128xf32> -> vector<8x128xf32>
    %c0_36 = arith.constant 0 : index
    %c0_37 = arith.constant 0 : index
    %44 = vector.load %arg15[%c0_36, %c0_37] : memref<1x128xf32, #tpu.memory_space<vmem>>, vector<1x128xf32>
    %45 = vector.broadcast %44 : vector<1x128xf32> to vector<8x128xf32>
    %46 = arith.addf %43, %45 : vector<8x128xf32>
    %c0_38 = arith.constant 0 : index
    %c0_39 = arith.constant 0 : index
    %47 = vector.load %arg16[%c0_38, %c0_39] : memref<8x128xf32, #tpu.memory_space<vmem>>, vector<8x128xf32>
    tpu.vector_store %arg16[%c0_38, %c0_39], %46 {strides = array<i32>} : memref<8x128xf32, #tpu.memory_space<vmem>>, vector<8x128xf32>,
    return
  }
  func.func @transform_0(%arg0: i32) -> (i32, i32, i32) {
    %c0_i32 = arith.constant 0 : i32
    %c0_i32_0 = arith.constant 0 : i32
    %c0_i32_1 = arith.constant 0 : i32
    return %arg0, %c0_i32, %c0_i32_0 : i32, i32, i32
  }
  func.func @transform_1(%arg0: i32) -> (i32, i32, i32) {
    %c0_i32 = arith.constant 0 : i32
    %c0_i32_0 = arith.constant 0 : i32
    %c0_i32_1 = arith.constant 0 : i32
    %c0_i32_2 = arith.constant 0 : i32
    return %c0_i32, %c0_i32_0, %c0_i32_1 : i32, i32, i32
  }
  func.func @transform_2(%arg0: i32) -> (i32, i32) {
    %c0_i32 = arith.constant 0 : i32
    %c0_i32_0 = arith.constant 0 : i32
    %c0_i32_1 = arith.constant 0 : i32
    return %c0_i32, %c0_i32_0 : i32, i32
  }
  func.func @transform_3(%arg0: i32) -> (i32, i32, i32) {
    %c0_i32 = arith.constant 0 : i32
    %c0_i32_0 = arith.constant 0 : i32
    %c0_i32_1 = arith.constant 0 : i32
    %c0_i32_2 = arith.constant 0 : i32
    return %c0_i32, %c0_i32_0, %c0_i32_1 : i32, i32, i32
  }
  func.func @transform_4(%arg0: i32) -> (i32, i32, i32) {
    %c0_i32 = arith.constant 0 : i32
    %c0_i32_0 = arith.constant 0 : i32
    %c0_i32_1 = arith.constant 0 : i32
    %c0_i32_2 = arith.constant 0 : i32
    return %c0_i32, %c0_i32_0, %c0_i32_1 : i32, i32, i32
  }
  func.func @transform_5(%arg0: i32) -> (i32, i32, i32) {
    %c0_i32 = arith.constant 0 : i32
    %c0_i32_0 = arith.constant 0 : i32
    %c0_i32_1 = arith.constant 0 : i32
    %c0_i32_2 = arith.constant 0 : i32
    return %c0_i32, %c0_i32_0, %c0_i32_1 : i32, i32, i32
  }
  func.func @transform_6(%arg0: i32) -> (i32, i32) {
    %c0_i32 = arith.constant 0 : i32
    %c0_i32_0 = arith.constant 0 : i32
    %c0_i32_1 = arith.constant 0 : i32
    return %c0_i32, %c0_i32_0 : i32, i32
  }
  func.func @transform_7(%arg0: i32) -> (i32, i32, i32) {
    %c0_i32 = arith.constant 0 : i32
    %c0_i32_0 = arith.constant 0 : i32
    %c0_i32_1 = arith.constant 0 : i32
    %c0_i32_2 = arith.constant 0 : i32
    return %c0_i32, %c0_i32_0, %c0_i32_1 : i32, i32, i32
  }
  func.func @transform_8(%arg0: i32) -> (i32, i32, i32) {
    %c0_i32 = arith.constant 0 : i32
    %c0_i32_0 = arith.constant 0 : i32
    %c0_i32_1 = arith.constant 0 : i32
    %c0_i32_2 = arith.constant 0 : i32
    return %c0_i32, %c0_i32_0, %c0_i32_1 : i32, i32, i32
  }
  func.func @transform_9(%arg0: i32) -> (i32, i32, i32) {
    %c0_i32 = arith.constant 0 : i32
    %c0_i32_0 = arith.constant 0 : i32
    %c0_i32_1 = arith.constant 0 : i32
    %c0_i32_2 = arith.constant 0 : i32
    return %c0_i32, %c0_i32_0, %c0_i32_1 : i32, i32, i32
  }
  func.func @transform_10(%arg0: i32) -> (i32, i32) {
    %c0_i32 = arith.constant 0 : i32
    %c0_i32_0 = arith.constant 0 : i32
    %c0_i32_1 = arith.constant 0 : i32
    return %c0_i32, %c0_i32_0 : i32, i32
  }
  func.func @transform_11(%arg0: i32) -> (i32, i32) {
    %c0_i32 = arith.constant 0 : i32
    %c0_i32_0 = arith.constant 0 : i32
    %c0_i32_1 = arith.constant 0 : i32
    return %c0_i32, %c0_i32_0 : i32, i32
  }
  func.func @transform_12(%arg0: i32) -> (i32, i32) {
    %c0_i32 = arith.constant 0 : i32
    %c0_i32_0 = arith.constant 0 : i32
    %c0_i32_1 = arith.constant 0 : i32
    return %c0_i32, %c0_i32_0 : i32, i32
  }
  func.func @transform_13(%arg0: i32) -> (i32, i32) {
    %c0_i32 = arith.constant 0 : i32
    %c0_i32_0 = arith.constant 0 : i32
    %c0_i32_1 = arith.constant 0 : i32
    return %c0_i32, %c0_i32_0 : i32, i32
  }
  func.func @transform_14(%arg0: i32) -> (i32, i32) {
    %c0_i32 = arith.constant 0 : i32
    %c0_i32_0 = arith.constant 0 : i32
    %c0_i32_1 = arith.constant 0 : i32
    return %c0_i32, %c0_i32_0 : i32, i32
  }
  func.func @transform_15(%arg0: i32) -> (i32, i32) {
    %c0_i32 = arith.constant 0 : i32
    %c0_i32_0 = arith.constant 0 : i32
    return %arg0, %c0_i32 : i32, i32
  }
}

</mosaic_0001>

<llo_original>
// kernel: net_forward.1
$region0: #{net_forward.1}
  #allocation0 [shape = 'u32[]', space=smem, size = 0x4, offset = 0x4, fixed_abs, tag = 'smem constant byte address 0x4 - core index']
  #allocation1 [shape = 'u32[144,128]{1,0:T(1,128)}', space=vmem, size = 0x12000, scoped, tag = 'internal scratch']
  #allocation2 [shape = 'f32[8,4,64]{2,1,0:T(4,128)}', space=vmem, size = 0x4000, scoped, tag = 'scratch operand']
  %s0 = inlined_call_operand.vmem [shape: f32[24,28,28], index: 0, kind: input, shape index: {}]
  %s1 = inlined_call_operand.vmem [shape: bf16[5,28,144], index: 1, kind: input, shape index: {}]
  %s2 = inlined_call_operand.vmem [shape: f32[1,144], index: 2, kind: input, shape index: {}]
  %s3 = inlined_call_operand.vmem [shape: bf16[2,12,24], index: 3, kind: input, shape index: {}]
  %s4 = inlined_call_operand.vmem [shape: bf16[2,144,72], index: 4, kind: input, shape index: {}]
  %s5 = inlined_call_operand.vmem [shape: bf16[5,72,128], index: 5, kind: input, shape index: {}]
  %s6 = inlined_call_operand.vmem [shape: f32[1,128], index: 6, kind: input, shape index: {}]
  %s7 = inlined_call_operand.vmem [shape: bf16[2,4,8], index: 7, kind: input, shape index: {}]
  %s8 = inlined_call_operand.vmem [shape: bf16[2,128,64], index: 8, kind: input, shape index: {}]
  %s9 = inlined_call_operand.vmem [shape: bf16[4,64,120], index: 9, kind: input, shape index: {}]
  %s10 = inlined_call_operand.vmem [shape: f32[1,120], index: 10, kind: input, shape index: {}]
  %s11 = inlined_call_operand.vmem [shape: bf16[120,84], index: 11, kind: input, shape index: {}]
  %s12 = inlined_call_operand.vmem [shape: f32[1,84], index: 12, kind: input, shape index: {}]
  %s13 = inlined_call_operand.vmem [shape: bf16[84,128], index: 13, kind: input, shape index: {}]
  %s14 = inlined_call_operand.vmem [shape: f32[1,128], index: 14, kind: input, shape index: {}]
  %s15 = inlined_call_operand.vmem [shape: f32[24,128], index: 15, kind: output, shape index: {}]
  %s16 = sld [smem:[#allocation0]]
  $region100: #{net_forward.1} parent=0
    _
  %s18 = ssub.s32 1, %s16
  %s19 = scalar_select 0, %s18, %s16
  loop: start=0, step=1, limit=5
  $region2: #{net_forward.1} parent=0 // loop_pre_header
    _
  $region3: #{net_forward.1} parent=0 // loop_header
    %s21 = sphi 0, %s25
    %p22 = scmp.ge.s32.totalorder %s21, 5
    %s31 = sphi 0, %s33
    %s34 = sphi 0, %s31
    %s35 = sphi 0, %s34
    %s51 = sphi 0, %s35
    %s55 = sphi 0, %s55
    %s57 = sphi 0, %s55
    %s58 = sphi 0, %s57
    %s72 = sphi 0, %s58
    %s76 = sphi 0, %s76
    %s78 = sphi 0, %s76
    %s79 = sphi 0, %s78
    %s93 = sphi 0, %s79
    %s97 = sphi 0, %s97
    %s99 = sphi 0, %s97
    %s100 = sphi 0, %s99
    %s114 = sphi 0, %s100
    %s118 = sphi 0, %s118
    %s120 = sphi 0, %s118
    %s121 = sphi 0, %s120
    %s135 = sphi 0, %s121
    %s139 = sphi 0, %s139
    %s141 = sphi 0, %s139
    %s142 = sphi 0, %s141
    %s156 = sphi 0, %s142
    %s160 = sphi 0, %s160
    %s162 = sphi 0, %s160
    %s163 = sphi 0, %s162
    %s177 = sphi 0, %s163
    %s181 = sphi 0, %s181
    %s183 = sphi 0, %s181
    %s184 = sphi 0, %s183
    %s198 = sphi 0, %s184
    %s202 = sphi 0, %s202
    %s204 = sphi 0, %s202
    %s205 = sphi 0, %s204
    %s219 = sphi 0, %s205
    %s223 = sphi 0, %s223
    %s225 = sphi 0, %s223
    %s226 = sphi 0, %s225
    %s240 = sphi 0, %s226
    %s244 = sphi 0, %s244
    %s246 = sphi 0, %s244
    %s247 = sphi 0, %s246
    %s261 = sphi 0, %s247
    %s265 = sphi 0, %s265
    %s267 = sphi 0, %s265
    %s268 = sphi 0, %s267
    %s282 = sphi 0, %s268
    %s286 = sphi 0, %s286
    %s288 = sphi 0, %s286
    %s289 = sphi 0, %s288
    %s303 = sphi 0, %s289
    %s307 = sphi 0, %s307
    %s309 = sphi 0, %s307
    %s310 = sphi 0, %s309
    %s324 = sphi 0, %s310
    %s328 = sphi 0, %s328
    %s330 = sphi 0, %s328
    %s331 = sphi 0, %s330
    %s345 = sphi 0, %s331
    %s351 = sphi 0, %s353
    %s354 = sphi 0, %s351
    %s355 = sphi 0, %s354
    %s371 = sphi 0, %s355
  $region4: #{net_forward.1} parent=0 // loop_header_branch
    %24 = sbr.rel (%p22) target = $region8
  $region5: #{net_forward.1} parent=0 // loop_body
    %s26 = ssub.s32 %s21, 1
    %s27 = ssub.s32 %s21, 2
    %s28 = sadd.s32 %s21, 1
    %s29 = ssub.s32 %s21, %s28
    %p30 = scmp.eq.s32.totalorder %s29, 0
    %s32 = sadd.s32 %s31, 1
    %s33 = scalar_select %p30, %s31, %s32
    %p36 = pneg %p30
    %p37 = scmp.eq.s32.totalorder %s21, 2
    %p38 = por %p36, %p37
    %p39 = scmp.ne.s32.totalorder %s31, %s34
    %p40 = scmp.eq.s32.totalorder %s21, 0
    %p41 = por %p39, %p40
    %p42 = scmp.ne.s32.totalorder %s31, %s34
    %p43 = scmp.eq.s32.totalorder %s26, 2
    %p44 = por %p42, %p43
    %p45 = scmp.ne.s32.totalorder %s34, %s35
    %p46 = scmp.eq.s32.totalorder %s26, 0
    %p47 = por %p45, %p46
    %p48 = scmp.ne.s32.totalorder %s34, %s35
    %p49 = scmp.eq.s32.totalorder %s27, 2
    %p50 = por %p48, %p49
    %p52 = scmp.ne.s32.totalorder %s35, %s51
    %p53 = scmp.eq.s32.totalorder %s27, 0
    %p54 = por %p52, %p53
    %s56 = sadd.s32 %s55, 1
    %p59 = scmp.eq.s32.totalorder %s21, 2
    %p60 = scmp.ne.s32.totalorder %s55, %s57
    %p61 = scmp.eq.s32.totalorder %s21, 0
    %p62 = por %p60, %p61
    %p63 = scmp.ne.s32.totalorder %s55, %s57
    %p64 = scmp.eq.s32.totalorder %s26, 2
    %p65 = por %p63, %p64
    %p66 = scmp.ne.s32.totalorder %s57, %s58
    %p67 = scmp.eq.s32.totalorder %s26, 0
    %p68 = por %p66, %p67
    %p69 = scmp.ne.s32.totalorder %s57, %s58
    %p70 = scmp.eq.s32.totalorder %s27, 2
    %p71 = por %p69, %p70
    %p73 = scmp.ne.s32.totalorder %s58, %s72
    %p74 = scmp.eq.s32.totalorder %s27, 0
    %p75 = por %p73, %p74
    %s77 = sadd.s32 %s76, 1
    %p80 = scmp.eq.s32.totalorder %s21, 2
    %p81 = scmp.ne.s32.totalorder %s76, %s78
    %p82 = scmp.eq.s32.totalorder %s21, 0
    %p83 = por %p81, %p82
    %p84 = scmp.ne.s32.totalorder %s76, %s78
    %p85 = scmp.eq.s32.totalorder %s26, 2
    %p86 = por %p84, %p85
    %p87 = scmp.ne.s32.totalorder %s78, %s79
    %p88 = scmp.eq.s32.totalorder %s26, 0
    %p89 = por %p87, %p88
    %p90 = scmp.ne.s32.totalorder %s78, %s79
    %p91 = scmp.eq.s32.totalorder %s27, 2
    %p92 = por %p90, %p91
    %p94 = scmp.ne.s32.totalorder %s79, %s93
    %p95 = scmp.eq.s32.totalorder %s27, 0
    %p96 = por %p94, %p95
    %s98 = sadd.s32 %s97, 1
    %p101 = scmp.eq.s32.totalorder %s21, 2
    %p102 = scmp.ne.s32.totalorder %s97, %s99
    %p103 = scmp.eq.s32.totalorder %s21, 0
    %p104 = por %p102, %p103
    %p105 = scmp.ne.s32.totalorder %s97, %s99
    %p106 = scmp.eq.s32.totalorder %s26, 2
    %p107 = por %p105, %p106
    %p108 = scmp.ne.s32.totalorder %s99, %s100
    %p109 = scmp.eq.s32.totalorder %s26, 0
    %p110 = por %p108, %p109
    %p111 = scmp.ne.s32.totalorder %s99, %s100
    %p112 = scmp.eq.s32.totalorder %s27, 2
    %p113 = por %p111, %p112
    %p115 = scmp.ne.s32.totalorder %s100, %s114
    %p116 = scmp.eq.s32.totalorder %s27, 0
    %p117 = por %p115, %p116
    %s119 = sadd.s32 %s118, 1
    %p122 = scmp.eq.s32.totalorder %s21, 2
    %p123 = scmp.ne.s32.totalorder %s118, %s120
    %p124 = scmp.eq.s32.totalorder %s21, 0
    %p125 = por %p123, %p124
    %p126 = scmp.ne.s32.totalorder %s118, %s120
    %p127 = scmp.eq.s32.totalorder %s26, 2
    %p128 = por %p126, %p127
    %p129 = scmp.ne.s32.totalorder %s120, %s121
    %p130 = scmp.eq.s32.totalorder %s26, 0
    %p131 = por %p129, %p130
    %p132 = scmp.ne.s32.totalorder %s120, %s121
    %p133 = scmp.eq.s32.totalorder %s27, 2
    %p134 = por %p132, %p133
    %p136 = scmp.ne.s32.totalorder %s121, %s135
    %p137 = scmp.eq.s32.totalorder %s27, 0
    %p138 = por %p136, %p137
    %s140 = sadd.s32 %s139, 1
    %p143 = scmp.eq.s32.totalorder %s21, 2
    %p144 = scmp.ne.s32.totalorder %s139, %s141
    %p145 = scmp.eq.s32.totalorder %s21, 0
    %p146 = por %p144, %p145
    %p147 = scmp.ne.s32.totalorder %s139, %s141
    %p148 = scmp.eq.s32.totalorder %s26, 2
    %p149 = por %p147, %p148
    %p150 = scmp.ne.s32.totalorder %s141, %s142
    %p151 = scmp.eq.s32.totalorder %s26, 0
    %p152 = por %p150, %p151
    %p153 = scmp.ne.s32.totalorder %s141, %s142
    %p154 = scmp.eq.s32.totalorder %s27, 2
    %p155 = por %p153, %p154
    %p157 = scmp.ne.s32.totalorder %s142, %s156
    %p158 = scmp.eq.s32.totalorder %s27, 0
    %p159 = por %p157, %p158
    %s161 = sadd.s32 %s160, 1
    %p164 = scmp.eq.s32.totalorder %s21, 2
    %p165 = scmp.ne.s32.totalorder %s160, %s162
    %p166 = scmp.eq.s32.totalorder %s21, 0
    %p167 = por %p165, %p166
    %p168 = scmp.ne.s32.totalorder %s160, %s162
    %p169 = scmp.eq.s32.totalorder %s26, 2
    %p170 = por %p168, %p169
    %p171 = scmp.ne.s32.totalorder %s162, %s163
    %p172 = scmp.eq.s32.totalorder %s26, 0
    %p173 = por %p171, %p172
    %p174 = scmp.ne.s32.totalorder %s162, %s163
    %p175 = scmp.eq.s32.totalorder %s27, 2
    %p176 = por %p174, %p175
    %p178 = scmp.ne.s32.totalorder %s163, %s177
    %p179 = scmp.eq.s32.totalorder %s27, 0
    %p180 = por %p178, %p179
    %s182 = sadd.s32 %s181, 1
    %p185 = scmp.eq.s32.totalorder %s21, 2
    %p186 = scmp.ne.s32.totalorder %s181, %s183
    %p187 = scmp.eq.s32.totalorder %s21, 0
    %p188 = por %p186, %p187
    %p189 = scmp.ne.s32.totalorder %s181, %s183
    %p190 = scmp.eq.s32.totalorder %s26, 2
    %p191 = por %p189, %p190
    %p192 = scmp.ne.s32.totalorder %s183, %s184
    %p193 = scmp.eq.s32.totalorder %s26, 0
    %p194 = por %p192, %p193
    %p195 = scmp.ne.s32.totalorder %s183, %s184
    %p196 = scmp.eq.s32.totalorder %s27, 2
    %p197 = por %p195, %p196
    %p199 = scmp.ne.s32.totalorder %s184, %s198
    %p200 = scmp.eq.s32.totalorder %s27, 0
    %p201 = por %p199, %p200
    %s203 = sadd.s32 %s202, 1
    %p206 = scmp.eq.s32.totalorder %s21, 2
    %p207 = scmp.ne.s32.totalorder %s202, %s204
    %p208 = scmp.eq.s32.totalorder %s21, 0
    %p209 = por %p207, %p208
    %p210 = scmp.ne.s32.totalorder %s202, %s204
    %p211 = scmp.eq.s32.totalorder %s26, 2
    %p212 = por %p210, %p211
    %p213 = scmp.ne.s32.totalorder %s204, %s205
    %p214 = scmp.eq.s32.totalorder %s26, 0
    %p215 = por %p213, %p214
    %p216 = scmp.ne.s32.totalorder %s204, %s205
    %p217 = scmp.eq.s32.totalorder %s27, 2
    %p218 = por %p216, %p217
    %p220 = scmp.ne.s32.totalorder %s205, %s219
    %p221 = scmp.eq.s32.totalorder %s27, 0
    %p222 = por %p220, %p221
    %s224 = sadd.s32 %s223, 1
    %p227 = scmp.eq.s32.totalorder %s21, 2
    %p228 = scmp.ne.s32.totalorder %s223, %s225
    %p229 = scmp.eq.s32.totalorder %s21, 0
    %p230 = por %p228, %p229
    %p231 = scmp.ne.s32.totalorder %s223, %s225
    %p232 = scmp.eq.s32.totalorder %s26, 2
    %p233 = por %p231, %p232
    %p234 = scmp.ne.s32.totalorder %s225, %s226
    %p235 = scmp.eq.s32.totalorder %s26, 0
    %p236 = por %p234, %p235
    %p237 = scmp.ne.s32.totalorder %s225, %s226
    %p238 = scmp.eq.s32.totalorder %s27, 2
    %p239 = por %p237, %p238
    %p241 = scmp.ne.s32.totalorder %s226, %s240
    %p242 = scmp.eq.s32.totalorder %s27, 0
    %p243 = por %p241, %p242
    %s245 = sadd.s32 %s244, 1
    %p248 = scmp.eq.s32.totalorder %s21, 2
    %p249 = scmp.ne.s32.totalorder %s244, %s246
    %p250 = scmp.eq.s32.totalorder %s21, 0
    %p251 = por %p249, %p250
    %p252 = scmp.ne.s32.totalorder %s244, %s246
    %p253 = scmp.eq.s32.totalorder %s26, 2
    %p254 = por %p252, %p253
    %p255 = scmp.ne.s32.totalorder %s246, %s247
    %p256 = scmp.eq.s32.totalorder %s26, 0
    %p257 = por %p255, %p256
    %p258 = scmp.ne.s32.totalorder %s246, %s247
    %p259 = scmp.eq.s32.totalorder %s27, 2
    %p260 = por %p258, %p259
    %p262 = scmp.ne.s32.totalorder %s247, %s261
    %p263 = scmp.eq.s32.totalorder %s27, 0
    %p264 = por %p262, %p263
    %s266 = sadd.s32 %s265, 1
    %p269 = scmp.eq.s32.totalorder %s21, 2
    %p270 = scmp.ne.s32.totalorder %s265, %s267
    %p271 = scmp.eq.s32.totalorder %s21, 0
    %p272 = por %p270, %p271
    %p273 = scmp.ne.s32.totalorder %s265, %s267
    %p274 = scmp.eq.s32.totalorder %s26, 2
    %p275 = por %p273, %p274
    %p276 = scmp.ne.s32.totalorder %s267, %s268
    %p277 = scmp.eq.s32.totalorder %s26, 0
    %p278 = por %p276, %p277
    %p279 = scmp.ne.s32.totalorder %s267, %s268
    %p280 = scmp.eq.s32.totalorder %s27, 2
    %p281 = por %p279, %p280
    %p283 = scmp.ne.s32.totalorder %s268, %s282
    %p284 = scmp.eq.s32.totalorder %s27, 0
    %p285 = por %p283, %p284
    %s287 = sadd.s32 %s286, 1
    %p290 = scmp.eq.s32.totalorder %s21, 2
    %p291 = scmp.ne.s32.totalorder %s286, %s288
    %p292 = scmp.eq.s32.totalorder %s21, 0
    %p293 = por %p291, %p292
    %p294 = scmp.ne.s32.totalorder %s286, %s288
    %p295 = scmp.eq.s32.totalorder %s26, 2
    %p296 = por %p294, %p295
    %p297 = scmp.ne.s32.totalorder %s288, %s289
    %p298 = scmp.eq.s32.totalorder %s26, 0
    %p299 = por %p297, %p298
    %p300 = scmp.ne.s32.totalorder %s288, %s289
    %p301 = scmp.eq.s32.totalorder %s27, 2
    %p302 = por %p300, %p301
    %p304 = scmp.ne.s32.totalorder %s289, %s303
    %p305 = scmp.eq.s32.totalorder %s27, 0
    %p306 = por %p304, %p305
    %s308 = sadd.s32 %s307, 1
    %p311 = scmp.eq.s32.totalorder %s21, 2
    %p312 = scmp.ne.s32.totalorder %s307, %s309
    %p313 = scmp.eq.s32.totalorder %s21, 0
    %p314 = por %p312, %p313
    %p315 = scmp.ne.s32.totalorder %s307, %s309
    %p316 = scmp.eq.s32.totalorder %s26, 2
    %p317 = por %p315, %p316
    %p318 = scmp.ne.s32.totalorder %s309, %s310
    %p319 = scmp.eq.s32.totalorder %s26, 0
    %p320 = por %p318, %p319
    %p321 = scmp.ne.s32.totalorder %s309, %s310
    %p322 = scmp.eq.s32.totalorder %s27, 2
    %p323 = por %p321, %p322
    %p325 = scmp.ne.s32.totalorder %s310, %s324
    %p326 = scmp.eq.s32.totalorder %s27, 0
    %p327 = por %p325, %p326
    %s329 = sadd.s32 %s328, 1
    %p332 = scmp.eq.s32.totalorder %s21, 2
    %p333 = scmp.ne.s32.totalorder %s328, %s330
    %p334 = scmp.eq.s32.totalorder %s21, 0
    %p335 = por %p333, %p334
    %p336 = scmp.ne.s32.totalorder %s328, %s330
    %p337 = scmp.eq.s32.totalorder %s26, 2
    %p338 = por %p336, %p337
    %p339 = scmp.ne.s32.totalorder %s330, %s331
    %p340 = scmp.eq.s32.totalorder %s26, 0
    %p341 = por %p339, %p340
    %p342 = scmp.ne.s32.totalorder %s330, %s331
    %p343 = scmp.eq.s32.totalorder %s27, 2
    %p344 = por %p342, %p343
    %p346 = scmp.ne.s32.totalorder %s331, %s345
    %p347 = scmp.eq.s32.totalorder %s27, 0
    %p348 = por %p346, %p347
    %s349 = ssub.s32 %s21, %s28
    %p350 = scmp.eq.s32.totalorder %s349, 0
    %s352 = sadd.s32 %s351, 1
    %s353 = scalar_select %p350, %s351, %s352
    %p356 = pneg %p350
    %p357 = scmp.eq.s32.totalorder %s21, 2
    %p358 = por %p356, %p357
    %p359 = scmp.ne.s32.totalorder %s351, %s354
    %p360 = scmp.eq.s32.totalorder %s21, 0
    %p361 = por %p359, %p360
    %p362 = scmp.ne.s32.totalorder %s351, %s354
    %p363 = scmp.eq.s32.totalorder %s26, 2
    %p364 = por %p362, %p363
    %p365 = scmp.ne.s32.totalorder %s354, %s355
    %p366 = scmp.eq.s32.totalorder %s26, 0
    %p367 = por %p365, %p366
    %p368 = scmp.ne.s32.totalorder %s354, %s355
    %p369 = scmp.eq.s32.totalorder %s27, 2
    %p370 = por %p368, %p369
    %p372 = scmp.ne.s32.totalorder %s355, %s371
    %p373 = scmp.eq.s32.totalorder %s27, 0
    %p374 = por %p372, %p373
    %p375 = scmp.le.s32.totalorder 1, %s21
    %p376 = scmp.lt.s32.totalorder %s21, 4
    %p377 = pnand %p375, %p376
    %p378 = pneg %p377
    // Predicated region
    $region9: #{net_forward.1} parent=5 // pred_check
      _
    $region10: #{net_forward.1} parent=5 // pred_check_branch
      %380 = sbr.rel (%p377) target = $region12
    $region11: #{net_forward.1} parent=5 // pred_region
      %s381 = ssub.s32 %s21, 1
      // Predicated region
      $region13: #{net_forward.1} parent=11 // pred_check
        %p382 = pneg %p68
      $region14: #{net_forward.1} parent=11 // pred_check_branch
        %384 = sbr.rel (%p382) target = $region16
      $region15: #{net_forward.1} parent=11 // pred_region
        _
      $region16: #{net_forward.1} parent=11 // pred_fallthru
        _
      // Predicated region
      $region17: #{net_forward.1} parent=11 // pred_check
        %p385 = pneg %p89
      $region18: #{net_forward.1} parent=11 // pred_check_branch
        %387 = sbr.rel (%p385) target = $region20
      $region19: #{net_forward.1} parent=11 // pred_region
        _
      $region20: #{net_forward.1} parent=11 // pred_fallthru
        _
      // Predicated region
      $region21: #{net_forward.1} parent=11 // pred_check
        %p388 = pneg %p110
      $region22: #{net_forward.1} parent=11 // pred_check_branch
        %390 = sbr.rel (%p388) target = $region24
      $region23: #{net_forward.1} parent=11 // pred_region
        _
      $region24: #{net_forward.1} parent=11 // pred_fallthru
        _
      // Predicated region
      $region25: #{net_forward.1} parent=11 // pred_check
        %p391 = pneg %p131
      $region26: #{net_forward.1} parent=11 // pred_check_branch
        %393 = sbr.rel (%p391) target = $region28
      $region27: #{net_forward.1} parent=11 // pred_region
        _
      $region28: #{net_forward.1} parent=11 // pred_fallthru
        _
      // Predicated region
      $region29: #{net_forward.1} parent=11 // pred_check
        %p394 = pneg %p152
      $region30: #{net_forward.1} parent=11 // pred_check_branch
        %396 = sbr.rel (%p394) target = $region32
      $region31: #{net_forward.1} parent=11 // pred_region
        _
      $region32: #{net_forward.1} parent=11 // pred_fallthru
        _
      // Predicated region
      $region33: #{net_forward.1} parent=11 // pred_check
        %p397 = pneg %p173
      $region34: #{net_forward.1} parent=11 // pred_check_branch
        %399 = sbr.rel (%p397) target = $region36
      $region35: #{net_forward.1} parent=11 // pred_region
        _
      $region36: #{net_forward.1} parent=11 // pred_fallthru
        _
      // Predicated region
      $region37: #{net_forward.1} parent=11 // pred_check
        %p400 = pneg %p194
      $region38: #{net_forward.1} parent=11 // pred_check_branch
        %402 = sbr.rel (%p400) target = $region40
      $region39: #{net_forward.1} parent=11 // pred_region
        _
      $region40: #{net_forward.1} parent=11 // pred_fallthru
        _
      // Predicated region
      $region41: #{net_forward.1} parent=11 // pred_check
        %p403 = pneg %p215
      $region42: #{net_forward.1} parent=11 // pred_check_branch
        %405 = sbr.rel (%p403) target = $region44
      $region43: #{net_forward.1} parent=11 // pred_region
        _
      $region44: #{net_forward.1} parent=11 // pred_fallthru
        _
      // Predicated region
      $region45: #{net_forward.1} parent=11 // pred_check
        %p406 = pneg %p236
      $region46: #{net_forward.1} parent=11 // pred_check_branch
        %408 = sbr.rel (%p406) target = $region48
      $region47: #{net_forward.1} parent=11 // pred_region
        _
      $region48: #{net_forward.1} parent=11 // pred_fallthru
        _
      // Predicated region
      $region49: #{net_forward.1} parent=11 // pred_check
        %p409 = pneg %p257
      $region50: #{net_forward.1} parent=11 // pred_check_branch
        %411 = sbr.rel (%p409) target = $region52
      $region51: #{net_forward.1} parent=11 // pred_region
        _
      $region52: #{net_forward.1} parent=11 // pred_fallthru
        _
      // Predicated region
      $region53: #{net_forward.1} parent=11 // pred_check
        %p412 = pneg %p278
      $region54: #{net_forward.1} parent=11 // pred_check_branch
        %414 = sbr.rel (%p412) target = $region56
      $region55: #{net_forward.1} parent=11 // pred_region
        _
      $region56: #{net_forward.1} parent=11 // pred_fallthru
        _
      // Predicated region
      $region57: #{net_forward.1} parent=11 // pred_check
        %p415 = pneg %p299
      $region58: #{net_forward.1} parent=11 // pred_check_branch
        %417 = sbr.rel (%p415) target = $region60
      $region59: #{net_forward.1} parent=11 // pred_region
        _
      $region60: #{net_forward.1} parent=11 // pred_fallthru
        _
      // Predicated region
      $region61: #{net_forward.1} parent=11 // pred_check
        %p418 = pneg %p320
      $region62: #{net_forward.1} parent=11 // pred_check_branch
        %420 = sbr.rel (%p418) target = $region64
      $region63: #{net_forward.1} parent=11 // pred_region
        _
      $region64: #{net_forward.1} parent=11 // pred_fallthru
        _
      // Predicated region
      $region65: #{net_forward.1} parent=11 // pred_check
        %p421 = pneg %p341
      $region66: #{net_forward.1} parent=11 // pred_check_branch
        %423 = sbr.rel (%p421) target = $region68
      $region67: #{net_forward.1} parent=11 // pred_region
        _
      $region68: #{net_forward.1} parent=11 // pred_fallthru
        _
    $region12: #{net_forward.1} parent=5 // pred_fallthru
      _
    %p424 = scmp.lt.s32.totalorder %s21, 3
    // Predicated region
    $region69: #{net_forward.1} parent=5 // pred_check
      %p425 = pneg %p424
    $region70: #{net_forward.1} parent=5 // pred_check_branch
      %427 = sbr.rel (%p425) target = $region72
    $region71: #{net_forward.1} parent=5 // pred_region
      // Predicated region
      $region73: #{net_forward.1} parent=71 // pred_check
        %p428 = pneg %p41
      $region74: #{net_forward.1} parent=71 // pred_check_branch
        %430 = sbr.rel (%p428) target = $region76
      $region75: #{net_forward.1} parent=71 // pred_region
        %s431 = smul.u32 8, %s21
        %p432 = scmp.lt.s32.totalorder %s431, 23
        %s433 = scalar_select %p432, %s431, 23
        %s434 = smul.addr %s433, 4
        %s435 = smul.addr %s434, 8
        %s436 = scalar_lea.vmem %s0, %s435
        %s437 = smul.u32 8, %s21
      $region76: #{net_forward.1} parent=71 // pred_fallthru
        _
    $region72: #{net_forward.1} parent=5 // pred_fallthru
      _
    %p438 = scmp.le.s32.totalorder 1, %s21
    %p439 = scmp.lt.s32.totalorder %s21, 4
    %p440 = pnand %p438, %p439
    %p441 = pneg %p440
    // Predicated region
    $region77: #{net_forward.1} parent=5 // pred_check
      _
    $region78: #{net_forward.1} parent=5 // pred_check_branch
      %443 = sbr.rel (%p440) target = $region80
    $region79: #{net_forward.1} parent=5 // pred_region
      %s444 = ssub.s32 %s21, 1
      %s445 = smul.u32 8, %s26
      %p446 = scmp.lt.s32.totalorder %s445, 23
      %s447 = scalar_select %p446, %s445, 23
      %s448 = smul.addr %s447, 4
      %s449 = smul.addr %s448, 8
      %s450 = scalar_lea.vmem %s0, %s449
      %p451 = pneg %p47
      %p452 = pneg %p44
      %p453 = pneg %p68
      %p454 = pneg %p65
      %p455 = pneg %p89
      %p456 = pneg %p86
      %p457 = pneg %p110
      %p458 = pneg %p107
      %p459 = pneg %p131
      %p460 = pneg %p128
      %p461 = pneg %p152
      %p462 = pneg %p149
      %p463 = pneg %p173
      %p464 = pneg %p170
      %p465 = pneg %p194
      %p466 = pneg %p191
      %p467 = pneg %p215
      %p468 = pneg %p212
      %p469 = pneg %p236
      %p470 = pneg %p233
      %p471 = pneg %p257
      %p472 = pneg %p254
      %p473 = pneg %p278
      %p474 = pneg %p275
      %p475 = pneg %p299
      %p476 = pneg %p296
      %p477 = pneg %p320
      %p478 = pneg %p317
      %p479 = pneg %p341
      %p480 = pneg %p338
      %p481 = pneg %p367
      %p482 = pneg %p364
      %p483 = scmp.lt.s32.totalorder %s26, 2
      %s484 = scalar_select %p483, %s26, 2
      %s485 = smul.addr %s484, 8
      %s486 = scalar_lea.vmem %s15, %s485
      %s487 = smul.u32 8, %s26
      %p488 = scmp.lt.s32.totalorder %s487, 23
      %s489 = scalar_select %p488, %s487, 23
      %s490 = smul.addr %s489, 4
      %s491 = smul.addr %s490, 8
      %s492 = scalar_lea.vmem %s0, %s491
      %s493 = smul.u32 8, %s26
      %p494 = scmp.lt.s32.totalorder %s26, 2
      %s495 = scalar_select %p494, %s26, 2
      %s496 = smul.addr %s495, 8
      %s497 = scalar_lea.vmem %s15, %s496
      loop: start=0, step=1, limit=8
      $region81: #{net_forward.1} parent=79 // loop_pre_header
        _
      $region82: #{net_forward.1} parent=79 // loop_header
        %s500 = sphi 0, %s504
        %p501 = scmp.ge.s32.totalorder %s500, 8
      $region83: #{net_forward.1} parent=79 // loop_header_branch
        %503 = sbr.rel (%p501) target = $region87
      $region84: #{net_forward.1} parent=79 // loop_body
        %s505 = smul.u32 %s500, 32
        %s506 = scalar_lea.vmem %s492, %s505
        %v507 = vld [vmem:[%s506] sm:$0xff]
        %v508 = vld [vmem:[%s506 + $0x8] sm:$0xff]
        %v509 = vld [vmem:[%s506 + $0x10] sm:$0xff]
        %v510 = vld [vmem:[%s506 + $0x18] sm:$0xf]
        %v511 = vld [vmem:[%s1] sm:$0xff]
        %v512 = vld [vmem:[%s1 + $0x8] sm:$0xff]
        %v513 = vld [vmem:[%s1 + $0x10] sm:$0xff]
        %v514 = vld [vmem:[%s1 + $0x18] sm:$0x33]
        %v515 = vpack.c.bf16 %v508, %v507
        %v516 = vpack.c.bf16 %v509, %v509
        %s517 = scalar_lea.vmem %s1, 32
        %v518 = vld [vmem:[%s517] sm:$0xff]
        %v519 = vld [vmem:[%s517 + $0x8] sm:$0xff]
        %v520 = vld [vmem:[%s517 + $0x10] sm:$0xff]
        %v521 = vld [vmem:[%s517 + $0x18] sm:$0x33]
        %v522 = vpack.c.bf16 %v510, %v509
        %vm523 = vsmask.f32 7424
        %v525 = vshrl.u32 %v515, 16
        %v527 = vshll.u32 %v515, 16
        %v529 = vrot.slane %v527, 1
        %v530 = vor.u32 %v525, %v529
        %v532 = vshll.u32 %v522, 16
        %v534 = vrot.slane %v532, 1
        %v535 = vsel %vm523, %v530, %v534
        %v536 = vshrl.u32 %v522, 16
        %v538 = vor.u32 %v536, %v534
        %v543 = vunpack.c.l.b16 %v518
        %v544 = vunpack.c.h.b16 %v518
        %v545 = vunpack.c.l.b16 %v519
        %v546 = vunpack.c.h.b16 %v519
        %v547 = vunpack.c.l.b16 %v520
        %v548 = vunpack.c.h.b16 %v520
        %v549 = vunpack.c.l.b16 %v521
        %v550 = vunpack.c.h.b16 %v521
        %v551 = vpack.c.b16 %v545, %v543
        %v552 = vpack.c.b16 %v546, %v544
        %v553 = vpack.c.b16 %v549, %v547
        %v554 = vpack.c.b16 %v550, %v548
        %vm557 = vcmask 228352
        %v559 = vsel %vm557, %v535, 0
        %v562 = vsel %vm557, %v538, 0
        %vm564 = vcmask 1045504
        %v566 = vsel %vm564, %v553, 0
        %v569 = vsel %vm564, %v554, 0
        %571 = vmatprep.subr.bf16.mxu0 %v552
        %572 = vmatpush1.bf16.msra.mxu0 %v551
        %573 = vmatprep.subr.bf16.mxu0 %v569
        %574 = vmatpush1.bf16.msra.mxu0 %v566
        %575 = vmatprep.subr.bf16.mxu0 0
        %576 = vmatpush1.bf16.msra.mxu0 0
        %577 = vmatprep.subr.bf16.mxu0 0
        %578 = vmatpush1.bf16.msra.mxu0 0
        %579 = vmatprep.subr.bf16.mxu0 0
        %580 = vmatpush1.bf16.msra.mxu0 0
        %581 = vmatprep.subr.bf16.mxu0 0
        %582 = vmatpush1.bf16.msra.mxu0 0
        %583 = vmatprep.subr.bf16.mxu0 0
        %584 = vmatpush1.bf16.msra.mxu0 0
        %585 = vmatprep.subr.bf16.mxu0 0
        %586 = vmatpush1.bf16.msra.mxu0 0
        %587 = vmatprep.subr.bf16.mxu0 0
        %588 = vmatpush1.bf16.msra.mxu0 0
        %589 = vmatprep.subr.bf16.mxu0 0
        %590 = vmatpush1.bf16.msra.mxu0 0
        %591 = vmatprep.subr.bf16.mxu0 0
        %592 = vmatpush1.bf16.msra.mxu0 0
        %593 = vmatprep.subr.bf16.mxu0 0
        %594 = vmatpush1.bf16.msra.mxu0 0
        %595 = vmatprep.subr.bf16.mxu0 0
        %596 = vmatpush1.bf16.msra.mxu0 0
        %597 = vmatprep.subr.bf16.mxu0 0
        %598 = vmatpush1.bf16.msra.mxu0 0
        %599 = vmatprep.subr.bf16.mxu0 0
        %600 = vmatpush1.bf16.msra.mxu0 0
        %601 = vmatprep.subr.bf16.mxu0 0
        %602 = vmatpush1.bf16.msra.mxu0 0
        %603 = vmatprep.mubr.bf16.mxu0 0
        %604 = vmatmul.mubr.bf16.gmra.mrb[0].mxu0 %v559
        %v605 = vpop.f32.mrb[0].mxu0
        %v606 = vadd.f32 0.0, %v605
        %v607 = vpop.f32.mrb[0].mxu0
        %v608 = vadd.f32 0.0, %v607
        %v609 = vpop.f32.mrb[0].mxu0
        %v610 = vadd.f32 0.0, %v609
        %v611 = vpop.f32.mrb[0].mxu0
        %v612 = vadd.f32 0.0, %v611
        %613 = vmatprep.mubr.bf16.mxu0 0
        %614 = vmatmul.mubr.bf16.gmra.mrb[0].mxu0 %v562
        %v615 = vpop.f32.mrb[0].mxu0
        %v616 = vadd.f32 0.0, %v615
        %v617 = vpop.f32.mrb[0].mxu0
        %v618 = vadd.f32 0.0, %v617
        %v619 = vpop.f32.mrb[0].mxu0
        %v620 = vpop.f32.mrb[0].mxu0
        %621 = vdwg.mxu0
        %v626 = vunpack.c.l.b16 %v511
        %v627 = vunpack.c.h.b16 %v511
        %v628 = vunpack.c.l.b16 %v512
        %v629 = vunpack.c.h.b16 %v512
        %v630 = vunpack.c.l.b16 %v513
        %v631 = vunpack.c.h.b16 %v513
        %v632 = vunpack.c.l.b16 %v514
        %v633 = vunpack.c.h.b16 %v514
        %v634 = vpack.c.b16 %v628, %v626
        %v635 = vpack.c.b16 %v629, %v627
        %v636 = vpack.c.b16 %v632, %v630
        %v637 = vpack.c.b16 %v633, %v631
        %v640 = vsel %vm557, %v515, 0
        %v643 = vsel %vm557, %v516, 0
        %v646 = vsel %vm564, %v636, 0
        %v649 = vsel %vm564, %v637, 0
        %651 = vmatprep.subr.bf16.mxu0 %v635
        %652 = vmatpush1.bf16.msra.mxu0 %v634
        %653 = vmatprep.subr.bf16.mxu0 %v649
        %654 = vmatpush1.bf16.msra.mxu0 %v646
        %655 = vmatprep.subr.bf16.mxu0 0
        %656 = vmatpush1.bf16.msra.mxu0 0
        %657 = vmatprep.subr.bf16.mxu0 0
        %658 = vmatpush1.bf16.msra.mxu0 0
        %659 = vmatprep.subr.bf16.mxu0 0
        %660 = vmatpush1.bf16.msra.mxu0 0
        %661 = vmatprep.subr.bf16.mxu0 0
        %662 = vmatpush1.bf16.msra.mxu0 0
        %663 = vmatprep.subr.bf16.mxu0 0
        %664 = vmatpush1.bf16.msra.mxu0 0
        %665 = vmatprep.subr.bf16.mxu0 0
        %666 = vmatpush1.bf16.msra.mxu0 0
        %667 = vmatprep.subr.bf16.mxu0 0
        %668 = vmatpush1.bf16.msra.mxu0 0
        %669 = vmatprep.subr.bf16.mxu0 0
        %670 = vmatpush1.bf16.msra.mxu0 0
        %671 = vmatprep.subr.bf16.mxu0 0
        %672 = vmatpush1.bf16.msra.mxu0 0
        %673 = vmatprep.subr.bf16.mxu0 0
        %674 = vmatpush1.bf16.msra.mxu0 0
        %675 = vmatprep.subr.bf16.mxu0 0
        %676 = vmatpush1.bf16.msra.mxu0 0
        %677 = vmatprep.subr.bf16.mxu0 0
        %678 = vmatpush1.bf16.msra.mxu0 0
        %679 = vmatprep.subr.bf16.mxu0 0
        %680 = vmatpush1.bf16.msra.mxu0 0
        %681 = vmatprep.subr.bf16.mxu0 0
        %682 = vmatpush1.bf16.msra.mxu0 0
        %683 = vmatprep.mubr.bf16.mxu0 0
        %684 = vmatmul.mubr.bf16.gmra.mrb[0].mxu0 %v640
        %v685 = vpop.f32.mrb[0].mxu0
        %v686 = vadd.f32 %v606, %v685
        %v687 = vpop.f32.mrb[0].mxu0
        %v688 = vadd.f32 %v608, %v687
        %v689 = vpop.f32.mrb[0].mxu0
        %v690 = vadd.f32 %v610, %v689
        %v691 = vpop.f32.mrb[0].mxu0
        %v692 = vadd.f32 %v612, %v691
        %693 = vmatprep.mubr.bf16.mxu0 0
        %694 = vmatmul.mubr.bf16.gmra.mrb[0].mxu0 %v643
        %v695 = vpop.f32.mrb[0].mxu0
        %v696 = vadd.f32 %v616, %v695
        %v697 = vpop.f32.mrb[0].mxu0
        %v698 = vadd.f32 %v618, %v697
        %v699 = vpop.f32.mrb[0].mxu0
        %v700 = vpop.f32.mrb[0].mxu0
        %701 = vdwg.mxu0
        %s702 = scalar_lea.vmem %s1, 64
        %v703 = vld [vmem:[%s702] sm:$0xff]
        %v704 = vld [vmem:[%s702 + $0x8] sm:$0xff]
        %v705 = vld [vmem:[%s702 + $0x10] sm:$0xff]
        %v706 = vld [vmem:[%s702 + $0x18] sm:$0x33]
        %vm709 = vcmask 1046528
        %v710 = vrot.slane %v515, 1
        %v711 = vrot.slane %v522, 1
        %v712 = vsel %vm709, %v710, %v711
        %v717 = vunpack.c.l.b16 %v703
        %v718 = vunpack.c.h.b16 %v703
        %v719 = vunpack.c.l.b16 %v704
        %v720 = vunpack.c.h.b16 %v704
        %v721 = vunpack.c.l.b16 %v705
        %v722 = vunpack.c.h.b16 %v705
        %v723 = vunpack.c.l.b16 %v706
        %v724 = vunpack.c.h.b16 %v706
        %v725 = vpack.c.b16 %v719, %v717
        %v726 = vpack.c.b16 %v720, %v718
        %v727 = vpack.c.b16 %v723, %v721
        %v728 = vpack.c.b16 %v724, %v722
        %v732 = vsel %vm557, %v712, 0
        %v735 = vsel %vm557, %v711, 0
        %v738 = vsel %vm564, %v727, 0
        %v741 = vsel %vm564, %v728, 0
        %743 = vmatprep.subr.bf16.mxu0 %v726
        %744 = vmatpush1.bf16.msra.mxu0 %v725
        %745 = vmatprep.subr.bf16.mxu0 %v741
        %746 = vmatpush1.bf16.msra.mxu0 %v738
        %747 = vmatprep.subr.bf16.mxu0 0
        %748 = vmatpush1.bf16.msra.mxu0 0
        %749 = vmatprep.subr.bf16.mxu0 0
        %750 = vmatpush1.bf16.msra.mxu0 0
        %751 = vmatprep.subr.bf16.mxu0 0
        %752 = vmatpush1.bf16.msra.mxu0 0
        %753 = vmatprep.subr.bf16.mxu0 0
        %754 = vmatpush1.bf16.msra.mxu0 0
        %755 = vmatprep.subr.bf16.mxu0 0
        %756 = vmatpush1.bf16.msra.mxu0 0
        %757 = vmatprep.subr.bf16.mxu0 0
        %758 = vmatpush1.bf16.msra.mxu0 0
        %759 = vmatprep.subr.bf16.mxu0 0
        %760 = vmatpush1.bf16.msra.mxu0 0
        %761 = vmatprep.subr.bf16.mxu0 0
        %762 = vmatpush1.bf16.msra.mxu0 0
        %763 = vmatprep.subr.bf16.mxu0 0
        %764 = vmatpush1.bf16.msra.mxu0 0
        %765 = vmatprep.subr.bf16.mxu0 0
        %766 = vmatpush1.bf16.msra.mxu0 0
        %767 = vmatprep.subr.bf16.mxu0 0
        %768 = vmatpush1.bf16.msra.mxu0 0
        %769 = vmatprep.subr.bf16.mxu0 0
        %770 = vmatpush1.bf16.msra.mxu0 0
        %771 = vmatprep.subr.bf16.mxu0 0
        %772 = vmatpush1.bf16.msra.mxu0 0
        %773 = vmatprep.subr.bf16.mxu0 0
        %774 = vmatpush1.bf16.msra.mxu0 0
        %775 = vmatprep.mubr.bf16.mxu0 0
        %776 = vmatmul.mubr.bf16.gmra.mrb[0].mxu0 %v732
        %v777 = vpop.f32.mrb[0].mxu0
        %v778 = vadd.f32 0.0, %v777
        %v779 = vpop.f32.mrb[0].mxu0
        %v780 = vadd.f32 0.0, %v779
        %v781 = vpop.f32.mrb[0].mxu0
        %v782 = vadd.f32 0.0, %v781
        %v783 = vpop.f32.mrb[0].mxu0
        %v784 = vadd.f32 0.0, %v783
        %785 = vmatprep.mubr.bf16.mxu0 0
        %786 = vmatmul.mubr.bf16.gmra.mrb[0].mxu0 %v735
        %v787 = vpop.f32.mrb[0].mxu0
        %v788 = vadd.f32 0.0, %v787
        %v789 = vpop.f32.mrb[0].mxu0
        %v790 = vadd.f32 0.0, %v789
        %v791 = vpop.f32.mrb[0].mxu0
        %v792 = vpop.f32.mrb[0].mxu0
        %793 = vdwg.mxu0
        %v794 = vadd.f32 %v686, %v778
        %v795 = vadd.f32 %v688, %v780
        %v796 = vadd.f32 %v690, %v782
        %v797 = vadd.f32 %v692, %v784
        %v798 = vadd.f32 %v696, %v788
        %v799 = vadd.f32 %v698, %v790
        %s800 = scalar_lea.vmem %s1, 96
        %v801 = vld [vmem:[%s800] sm:$0xff]
        %v802 = vld [vmem:[%s800 + $0x8] sm:$0xff]
        %v803 = vld [vmem:[%s800 + $0x10] sm:$0xff]
        %v804 = vld [vmem:[%s800 + $0x18] sm:$0x33]
        %vm805 = vsmask.f32 6400
        %v806 = vrot.slane %v525, 1
        %v807 = vrot.slane %v527, 2
        %v808 = vor.u32 %v806, %v807
        %v809 = vrot.slane %v536, 1
        %v810 = vrot.slane %v532, 2
        %v811 = vor.u32 %v809, %v810
        %v812 = vsel %vm805, %v808, %v811
        %v817 = vunpack.c.l.b16 %v801
        %v818 = vunpack.c.h.b16 %v801
        %v819 = vunpack.c.l.b16 %v802
        %v820 = vunpack.c.h.b16 %v802
        %v821 = vunpack.c.l.b16 %v803
        %v822 = vunpack.c.h.b16 %v803
        %v823 = vunpack.c.l.b16 %v804
        %v824 = vunpack.c.h.b16 %v804
        %v825 = vpack.c.b16 %v819, %v817
        %v826 = vpack.c.b16 %v820, %v818
        %v827 = vpack.c.b16 %v823, %v821
        %v828 = vpack.c.b16 %v824, %v822
        %v832 = vsel %vm557, %v812, 0
        %v835 = vsel %vm557, %v811, 0
        %v838 = vsel %vm564, %v827, 0
        %v841 = vsel %vm564, %v828, 0
        %843 = vmatprep.subr.bf16.mxu0 %v826
        %844 = vmatpush1.bf16.msra.mxu0 %v825
        %845 = vmatprep.subr.bf16.mxu0 %v841
        %846 = vmatpush1.bf16.msra.mxu0 %v838
        %847 = vmatprep.subr.bf16.mxu0 0
        %848 = vmatpush1.bf16.msra.mxu0 0
        %849 = vmatprep.subr.bf16.mxu0 0
        %850 = vmatpush1.bf16.msra.mxu0 0
        %851 = vmatprep.subr.bf16.mxu0 0
        %852 = vmatpush1.bf16.msra.mxu0 0
        %853 = vmatprep.subr.bf16.mxu0 0
        %854 = vmatpush1.bf16.msra.mxu0 0
        %855 = vmatprep.subr.bf16.mxu0 0
        %856 = vmatpush1.bf16.msra.mxu0 0
        %857 = vmatprep.subr.bf16.mxu0 0
        %858 = vmatpush1.bf16.msra.mxu0 0
        %859 = vmatprep.subr.bf16.mxu0 0
        %860 = vmatpush1.bf16.msra.mxu0 0
        %861 = vmatprep.subr.bf16.mxu0 0
        %862 = vmatpush1.bf16.msra.mxu0 0
        %863 = vmatprep.subr.bf16.mxu0 0
        %864 = vmatpush1.bf16.msra.mxu0 0
        %865 = vmatprep.subr.bf16.mxu0 0
        %866 = vmatpush1.bf16.msra.mxu0 0
        %867 = vmatprep.subr.bf16.mxu0 0
        %868 = vmatpush1.bf16.msra.mxu0 0
        %869 = vmatprep.subr.bf16.mxu0 0
        %870 = vmatpush1.bf16.msra.mxu0 0
        %871 = vmatprep.subr.bf16.mxu0 0
        %872 = vmatpush1.bf16.msra.mxu0 0
        %873 = vmatprep.subr.bf16.mxu0 0
        %874 = vmatpush1.bf16.msra.mxu0 0
        %875 = vmatprep.mubr.bf16.mxu0 0
        %876 = vmatmul.mubr.bf16.gmra.mrb[0].mxu0 %v832
        %v877 = vpop.f32.mrb[0].mxu0
        %v878 = vadd.f32 0.0, %v877
        %v879 = vpop.f32.mrb[0].mxu0
        %v880 = vadd.f32 0.0, %v879
        %v881 = vpop.f32.mrb[0].mxu0
        %v882 = vadd.f32 0.0, %v881
        %v883 = vpop.f32.mrb[0].mxu0
        %v884 = vadd.f32 0.0, %v883
        %885 = vmatprep.mubr.bf16.mxu0 0
        %886 = vmatmul.mubr.bf16.gmra.mrb[0].mxu0 %v835
        %v887 = vpop.f32.mrb[0].mxu0
        %v888 = vadd.f32 0.0, %v887
        %v889 = vpop.f32.mrb[0].mxu0
        %v890 = vadd.f32 0.0, %v889
        %v891 = vpop.f32.mrb[0].mxu0
        %v892 = vpop.f32.mrb[0].mxu0
        %893 = vdwg.mxu0
        %v894 = vadd.f32 %v794, %v878
        %v895 = vadd.f32 %v795, %v880
        %v896 = vadd.f32 %v796, %v882
        %v897 = vadd.f32 %v797, %v884
        %v898 = vadd.f32 %v798, %v888
        %v899 = vadd.f32 %v799, %v890
        %s900 = scalar_lea.vmem %s1, 128
        %v901 = vld [vmem:[%s900] sm:$0xff]
        %v902 = vld [vmem:[%s900 + $0x8] sm:$0xff]
        %v903 = vld [vmem:[%s900 + $0x10] sm:$0xff]
        %v904 = vld [vmem:[%s900 + $0x18] sm:$0x33]
        %vm905 = vcmask 1045504
        %v906 = vrot.slane %v515, 2
        %v907 = vrot.slane %v522, 2
        %v908 = vsel %vm905, %v906, %v907
        %v913 = vunpack.c.l.b16 %v901
        %v914 = vunpack.c.h.b16 %v901
        %v915 = vunpack.c.l.b16 %v902
        %v916 = vunpack.c.h.b16 %v902
        %v917 = vunpack.c.l.b16 %v903
        %v918 = vunpack.c.h.b16 %v903
        %v919 = vunpack.c.l.b16 %v904
        %v920 = vunpack.c.h.b16 %v904
        %v921 = vpack.c.b16 %v915, %v913
        %v922 = vpack.c.b16 %v916, %v914
        %v923 = vpack.c.b16 %v919, %v917
        %v924 = vpack.c.b16 %v920, %v918
        %v928 = vsel %vm557, %v908, 0
        %v931 = vsel %vm557, %v907, 0
        %v934 = vsel %vm564, %v923, 0
        %v937 = vsel %vm564, %v924, 0
        %939 = vmatprep.subr.bf16.mxu0 %v922
        %940 = vmatpush1.bf16.msra.mxu0 %v921
        %941 = vmatprep.subr.bf16.mxu0 %v937
        %942 = vmatpush1.bf16.msra.mxu0 %v934
        %943 = vmatprep.subr.bf16.mxu0 0
        %944 = vmatpush1.bf16.msra.mxu0 0
        %945 = vmatprep.subr.bf16.mxu0 0
        %946 = vmatpush1.bf16.msra.mxu0 0
        %947 = vmatprep.subr.bf16.mxu0 0
        %948 = vmatpush1.bf16.msra.mxu0 0
        %949 = vmatprep.subr.bf16.mxu0 0
        %950 = vmatpush1.bf16.msra.mxu0 0
        %951 = vmatprep.subr.bf16.mxu0 0
        %952 = vmatpush1.bf16.msra.mxu0 0
        %953 = vmatprep.subr.bf16.mxu0 0
        %954 = vmatpush1.bf16.msra.mxu0 0
        %955 = vmatprep.subr.bf16.mxu0 0
        %956 = vmatpush1.bf16.msra.mxu0 0
        %957 = vmatprep.subr.bf16.mxu0 0
        %958 = vmatpush1.bf16.msra.mxu0 0
        %959 = vmatprep.subr.bf16.mxu0 0
        %960 = vmatpush1.bf16.msra.mxu0 0
        %961 = vmatprep.subr.bf16.mxu0 0
        %962 = vmatpush1.bf16.msra.mxu0 0
        %963 = vmatprep.subr.bf16.mxu0 0
        %964 = vmatpush1.bf16.msra.mxu0 0
        %965 = vmatprep.subr.bf16.mxu0 0
        %966 = vmatpush1.bf16.msra.mxu0 0
        %967 = vmatprep.subr.bf16.mxu0 0
        %968 = vmatpush1.bf16.msra.mxu0 0
        %969 = vmatprep.subr.bf16.mxu0 0
        %970 = vmatpush1.bf16.msra.mxu0 0
        %971 = vmatprep.mubr.bf16.mxu0 0
        %972 = vmatmul.mubr.bf16.gmra.mrb[0].mxu0 %v928
        %v973 = vpop.f32.mrb[0].mxu0
        %v974 = vadd.f32 0.0, %v973
        %v975 = vpop.f32.mrb[0].mxu0
        %v976 = vadd.f32 0.0, %v975
        %v977 = vpop.f32.mrb[0].mxu0
        %v978 = vadd.f32 0.0, %v977
        %v979 = vpop.f32.mrb[0].mxu0
        %v980 = vadd.f32 0.0, %v979
        %981 = vmatprep.mubr.bf16.mxu0 0
        %982 = vmatmul.mubr.bf16.gmra.mrb[0].mxu0 %v931
        %v983 = vpop.f32.mrb[0].mxu0
        %v984 = vadd.f32 0.0, %v983
        %v985 = vpop.f32.mrb[0].mxu0
        %v986 = vadd.f32 0.0, %v985
        %v987 = vpop.f32.mrb[0].mxu0
        %v988 = vpop.f32.mrb[0].mxu0
        %989 = vdwg.mxu0
        %v990 = vadd.f32 %v894, %v974
        %v991 = vadd.f32 %v895, %v976
        %v992 = vadd.f32 %v896, %v978
        %v993 = vadd.f32 %v897, %v980
        %v994 = vadd.f32 %v898, %v984
        %v995 = vadd.f32 %v899, %v986
        %v996 = vld [vmem:[%s2] sm:$0x3]
        %v998 = vlaneseq
        %v999 = vshrl.u32 %v998, 7
        %v1000 = vsub.s32 0, %v999
        %v1001 = vrot.slane %v996, %v1000
        %v1002 = vlaneseq
        %v1003 = vshrl.u32 %v1002, 7
        %v1004 = vsub.s32 1, %v1003
        %v1005 = vrot.slane %v996, %v1004
        %v1008 = vadd.f32 %v990, %v1001
        %v1009 = vadd.f32 %v991, %v1005
        %v1010 = vadd.f32 %v992, %v1001
        %v1011 = vadd.f32 %v993, %v1005
        %v1012 = vadd.f32 %v994, %v1001
        %v1013 = vadd.f32 %v995, %v1005
        %v1014 = vmax.f32 %v1008, 0.0
        %v1015 = vmax.f32 %v1009, 0.0
        %v1016 = vmax.f32 %v1010, 0.0
        %v1017 = vmax.f32 %v1011, 0.0
        %v1018 = vmax.f32 %v1012, 0.0
        %v1019 = vmax.f32 %v1013, 0.0
        %v1020 = vld [vmem:[%s3] sm:$0xf]
        %v1021 = vld [vmem:[%s3 + $0x4] sm:$0x3]
        %v1022 = vpack.c.bf16 %v1016, %v1014
        %v1023 = vpack.c.bf16 %v1017, %v1015
        %v1024 = vpack.c.bf16 %v1018, %v1018
        %v1025 = vpack.c.bf16 %v1019, %v1019
        %v1028 = vunpack.c.l.b16 %v1020
        %v1029 = vunpack.c.l.b16 %v1021
        %v1030 = vpack.c.b16 %v1029, %v1028
        %vm1031 = vcmask 195584
        %v1033 = vsel %vm1031, %v1030, 0
        %vm1035 = vcmask 1043456
        %v1037 = vsel %vm1035, %v1024, 0
        %v1040 = vsel %vm1035, %v1025, 0
        %1042 = vmatprep.subr.bf16.mxu0 %v1023
        %1043 = vmatpush1.bf16.msra.mxu0 %v1022
        %1044 = vmatprep.subr.bf16.mxu0 %v1040
        %1045 = vmatpush1.bf16.msra.mxu0 %v1037
        %1046 = vmatprep.subr.bf16.mxu0 0
        %1047 = vmatpush1.bf16.msra.mxu0 0
        %1048 = vmatprep.subr.bf16.mxu0 0
        %1049 = vmatpush1.bf16.msra.mxu0 0
        %1050 = vmatprep.subr.bf16.mxu0 0
        %1051 = vmatpush1.bf16.msra.mxu0 0
        %1052 = vmatprep.subr.bf16.mxu0 0
        %1053 = vmatpush1.bf16.msra.mxu0 0
        %1054 = vmatprep.subr.bf16.mxu0 0
        %1055 = vmatpush1.bf16.msra.mxu0 0
        %1056 = vmatprep.subr.bf16.mxu0 0
        %1057 = vmatpush1.bf16.msra.mxu0 0
        %1058 = vmatprep.subr.bf16.mxu0 0
        %1059 = vmatpush1.bf16.msra.mxu0 0
        %1060 = vmatprep.subr.bf16.mxu0 0
        %1061 = vmatpush1.bf16.msra.mxu0 0
        %1062 = vmatprep.subr.bf16.mxu0 0
        %1063 = vmatpush1.bf16.msra.mxu0 0
        %1064 = vmatprep.subr.bf16.mxu0 0
        %1065 = vmatpush1.bf16.msra.mxu0 0
        %1066 = vmatprep.subr.bf16.mxu0 0
        %1067 = vmatpush1.bf16.msra.mxu0 0
        %1068 = vmatprep.subr.bf16.mxu0 0
        %1069 = vmatpush1.bf16.msra.mxu0 0
        %1070 = vmatprep.subr.bf16.mxu0 0
        %1071 = vmatpush1.bf16.msra.mxu0 0
        %1072 = vmatprep.subr.bf16.mxu0 0
        %1073 = vmatpush1.bf16.msra.mxu0 0
        %1074 = vmatprep.mubr.bf16.mxu0 0
        %1075 = vmatmul.mubr.bf16.gmra.mrb[0].mxu0 %v1033
        %v1076 = vpop.f32.mrb[0].mxu0
        %v1077 = vadd.f32 0.0, %v1076
        %v1078 = vpop.f32.mrb[0].mxu0
        %v1079 = vadd.f32 0.0, %v1078
        %v1080 = vpop.f32.mrb[0].mxu0
        %v1081 = vadd.f32 0.0, %v1080
        %v1082 = vpop.f32.mrb[0].mxu0
        %v1083 = vadd.f32 0.0, %v1082
        %1084 = vdwg.mxu0
        %s1085 = scalar_lea.vmem %s3, 8
        %v1086 = vld [vmem:[%s1085] sm:$0xf]
        %v1087 = vld [vmem:[%s1085 + $0x4] sm:$0x3]
        %v1090 = vunpack.c.l.b16 %v1086
        %v1091 = vunpack.c.l.b16 %v1087
        %v1092 = vpack.c.b16 %v1091, %v1090
        %v1094 = vsel %vm1031, %v1092, 0
        %1096 = vmatprep.subr.bf16.mxu0 %v1023
        %1097 = vmatpush1.bf16.msra.mxu0 %v1022
        %1098 = vmatprep.subr.bf16.mxu0 %v1040
        %1099 = vmatpush1.bf16.msra.mxu0 %v1037
        %1100 = vmatprep.subr.bf16.mxu0 0
        %1101 = vmatpush1.bf16.msra.mxu0 0
        %1102 = vmatprep.subr.bf16.mxu0 0
        %1103 = vmatpush1.bf16.msra.mxu0 0
        %1104 = vmatprep.subr.bf16.mxu0 0
        %1105 = vmatpush1.bf16.msra.mxu0 0
        %1106 = vmatprep.subr.bf16.mxu0 0
        %1107 = vmatpush1.bf16.msra.mxu0 0
        %1108 = vmatprep.subr.bf16.mxu0 0
        %1109 = vmatpush1.bf16.msra.mxu0 0
        %1110 = vmatprep.subr.bf16.mxu0 0
        %1111 = vmatpush1.bf16.msra.mxu0 0
        %1112 = vmatprep.subr.bf16.mxu0 0
        %1113 = vmatpush1.bf16.msra.mxu0 0
        %1114 = vmatprep.subr.bf16.mxu0 0
        %1115 = vmatpush1.bf16.msra.mxu0 0
        %1116 = vmatprep.subr.bf16.mxu0 0
        %1117 = vmatpush1.bf16.msra.mxu0 0
        %1118 = vmatprep.subr.bf16.mxu0 0
        %1119 = vmatpush1.bf16.msra.mxu0 0
        %1120 = vmatprep.subr.bf16.mxu0 0
        %1121 = vmatpush1.bf16.msra.mxu0 0
        %1122 = vmatprep.subr.bf16.mxu0 0
        %1123 = vmatpush1.bf16.msra.mxu0 0
        %1124 = vmatprep.subr.bf16.mxu0 0
        %1125 = vmatpush1.bf16.msra.mxu0 0
        %1126 = vmatprep.subr.bf16.mxu0 0
        %1127 = vmatpush1.bf16.msra.mxu0 0
        %1128 = vmatprep.mubr.bf16.mxu0 0
        %1129 = vmatmul.mubr.bf16.gmra.mrb[0].mxu0 %v1094
        %v1130 = vpop.f32.mrb[0].mxu0
        %v1131 = vadd.f32 0.0, %v1130
        %v1132 = vpop.f32.mrb[0].mxu0
        %v1133 = vadd.f32 0.0, %v1132
        %v1134 = vpop.f32.mrb[0].mxu0
        %v1135 = vadd.f32 0.0, %v1134
        %v1136 = vpop.f32.mrb[0].mxu0
        %v1137 = vadd.f32 0.0, %v1136
        %1138 = vdwg.mxu0
        %v1139 = vmax.f32 %v1077, %v1131
        %v1140 = vmax.f32 %v1079, %v1133
        %v1141 = vmax.f32 %v1081, %v1135
        %v1142 = vmax.f32 %v1083, %v1137
        %v1143 = vld [vmem:[%s4] sm:$0xf]
        %v1144 = vld [vmem:[%s4 + $0x4] sm:$0xf]
        %v1145 = vld [vmem:[%s4 + $0x8] sm:$0xf]
        %v1146 = vld [vmem:[%s4 + $0xc] sm:$0xf]
        %v1147 = vld [vmem:[%s4 + $0x10] sm:$0xf]
        %v1148 = vld [vmem:[%s4 + $0x14] sm:$0xf]
        %v1149 = vld [vmem:[%s4 + $0x18] sm:$0xf]
        %v1150 = vld [vmem:[%s4 + $0x1c] sm:$0xf]
        %v1151 = vld [vmem:[%s4 + $0x20] sm:$0xf]
        %v1152 = vld [vmem:[%s4 + $0x24] sm:$0xf]
        %v1153 = vld [vmem:[%s4 + $0x28] sm:$0xf]
        %v1154 = vld [vmem:[%s4 + $0x2c] sm:$0xf]
        %v1155 = vld [vmem:[%s4 + $0x30] sm:$0xf]
        %v1156 = vld [vmem:[%s4 + $0x34] sm:$0xf]
        %v1157 = vld [vmem:[%s4 + $0x38] sm:$0xf]
        %v1158 = vld [vmem:[%s4 + $0x3c] sm:$0xf]
        %v1159 = vld [vmem:[%s4 + $0x40] sm:$0xf]
        %v1160 = vld [vmem:[%s4 + $0x44] sm:$0xf]
        %v1161 = vpack.c.bf16 %v1141, %v1139
        %v1162 = vpack.c.bf16 %v1142, %v1140
        %v1181 = vunpack.c.l.b16 %v1143
        %v1182 = vunpack.c.l.b16 %v1144
        %v1183 = vunpack.c.l.b16 %v1145
        %v1184 = vunpack.c.l.b16 %v1146
        %v1185 = vunpack.c.l.b16 %v1147
        %v1186 = vunpack.c.l.b16 %v1148
        %v1187 = vunpack.c.l.b16 %v1149
        %v1188 = vunpack.c.l.b16 %v1150
        %v1189 = vunpack.c.l.b16 %v1151
        %v1190 = vunpack.c.l.b16 %v1152
        %v1191 = vunpack.c.l.b16 %v1153
        %v1192 = vunpack.c.l.b16 %v1154
        %v1193 = vunpack.c.l.b16 %v1155
        %v1194 = vunpack.c.l.b16 %v1156
        %v1195 = vunpack.c.l.b16 %v1157
        %v1196 = vunpack.c.l.b16 %v1158
        %v1197 = vunpack.c.l.b16 %v1159
        %v1198 = vunpack.c.l.b16 %v1160
        %v1199 = vpack.c.b16 %v1182, %v1181
        %v1200 = vpack.c.b16 %v1184, %v1183
        %v1201 = vpack.c.b16 %v1186, %v1185
        %v1202 = vpack.c.b16 %v1188, %v1187
        %v1203 = vpack.c.b16 %v1190, %v1189
        %v1204 = vpack.c.b16 %v1192, %v1191
        %v1205 = vpack.c.b16 %v1194, %v1193
        %v1206 = vpack.c.b16 %v1196, %v1195
        %v1207 = vpack.c.b16 %v1198, %v1197
        %vm1217 = vcmask 130048
        %v1219 = vsel %vm1217, %v1162, 0
        %1221 = vmatprep.subr.bf16.mxu0 0
        %1222 = vmatpush1.bf16.msra.mxu0 %v1199
        %1223 = vmatprep.subr.bf16.mxu0 0
        %1224 = vmatpush1.bf16.msra.mxu0 %v1200
        %1225 = vmatprep.subr.bf16.mxu0 0
        %1226 = vmatpush1.bf16.msra.mxu0 %v1201
        %1227 = vmatprep.subr.bf16.mxu0 0
        %1228 = vmatpush1.bf16.msra.mxu0 %v1202
        %1229 = vmatprep.subr.bf16.mxu0 0
        %1230 = vmatpush1.bf16.msra.mxu0 %v1203
        %1231 = vmatprep.subr.bf16.mxu0 0
        %1232 = vmatpush1.bf16.msra.mxu0 %v1204
        %1233 = vmatprep.subr.bf16.mxu0 0
        %1234 = vmatpush1.bf16.msra.mxu0 %v1205
        %1235 = vmatprep.subr.bf16.mxu0 0
        %1236 = vmatpush1.bf16.msra.mxu0 %v1206
        %1237 = vmatprep.subr.bf16.mxu0 0
        %1238 = vmatpush1.bf16.msra.mxu0 %v1207
        %1239 = vmatprep.subr.bf16.mxu0 0
        %1240 = vmatpush1.bf16.msra.mxu0 0
        %1241 = vmatprep.subr.bf16.mxu0 0
        %1242 = vmatpush1.bf16.msra.mxu0 0
        %1243 = vmatprep.subr.bf16.mxu0 0
        %1244 = vmatpush1.bf16.msra.mxu0 0
        %1245 = vmatprep.subr.bf16.mxu0 0
        %1246 = vmatpush1.bf16.msra.mxu0 0
        %1247 = vmatprep.subr.bf16.mxu0 0
        %1248 = vmatpush1.bf16.msra.mxu0 0
        %1249 = vmatprep.subr.bf16.mxu0 0
        %1250 = vmatpush1.bf16.msra.mxu0 0
        %1251 = vmatprep.subr.bf16.mxu0 0
        %1252 = vmatpush1.bf16.msra.mxu0 0
        %1253 = vmatprep.mubr.bf16.mxu0 %v1219
        %1254 = vmatmul.mubr.bf16.gmra.mrb[0].mxu0 %v1161
        %v1255 = vpop.f32.mrb[0].mxu0
        %v1256 = vadd.f32 0.0, %v1255
        %v1257 = vpop.f32.mrb[0].mxu0
        %v1258 = vpop.f32.mrb[0].mxu0
        %v1259 = vadd.f32 0.0, %v1258
        %v1260 = vpop.f32.mrb[0].mxu0
        %1261 = vdwg.mxu0
        %s1262 = scalar_lea.vmem %s4, 72
        %v1263 = vld [vmem:[%s1262] sm:$0xf]
        %v1264 = vld [vmem:[%s1262 + $0x4] sm:$0xf]
        %v1265 = vld [vmem:[%s1262 + $0x8] sm:$0xf]
        %v1266 = vld [vmem:[%s1262 + $0xc] sm:$0xf]
        %v1267 = vld [vmem:[%s1262 + $0x10] sm:$0xf]
        %v1268 = vld [vmem:[%s1262 + $0x14] sm:$0xf]
        %v1269 = vld [vmem:[%s1262 + $0x18] sm:$0xf]
        %v1270 = vld [vmem:[%s1262 + $0x1c] sm:$0xf]
        %v1271 = vld [vmem:[%s1262 + $0x20] sm:$0xf]
        %v1272 = vld [vmem:[%s1262 + $0x24] sm:$0xf]
        %v1273 = vld [vmem:[%s1262 + $0x28] sm:$0xf]
        %v1274 = vld [vmem:[%s1262 + $0x2c] sm:$0xf]
        %v1275 = vld [vmem:[%s1262 + $0x30] sm:$0xf]
        %v1276 = vld [vmem:[%s1262 + $0x34] sm:$0xf]
        %v1277 = vld [vmem:[%s1262 + $0x38] sm:$0xf]
        %v1278 = vld [vmem:[%s1262 + $0x3c] sm:$0xf]
        %v1279 = vld [vmem:[%s1262 + $0x40] sm:$0xf]
        %v1280 = vld [vmem:[%s1262 + $0x44] sm:$0xf]
        %v1299 = vunpack.c.l.b16 %v1263
        %v1300 = vunpack.c.l.b16 %v1264
        %v1301 = vunpack.c.l.b16 %v1265
        %v1302 = vunpack.c.l.b16 %v1266
        %v1303 = vunpack.c.l.b16 %v1267
        %v1304 = vunpack.c.l.b16 %v1268
        %v1305 = vunpack.c.l.b16 %v1269
        %v1306 = vunpack.c.l.b16 %v1270
        %v1307 = vunpack.c.l.b16 %v1271
        %v1308 = vunpack.c.l.b16 %v1272
        %v1309 = vunpack.c.l.b16 %v1273
        %v1310 = vunpack.c.l.b16 %v1274
        %v1311 = vunpack.c.l.b16 %v1275
        %v1312 = vunpack.c.l.b16 %v1276
        %v1313 = vunpack.c.l.b16 %v1277
        %v1314 = vunpack.c.l.b16 %v1278
        %v1315 = vunpack.c.l.b16 %v1279
        %v1316 = vunpack.c.l.b16 %v1280
        %v1317 = vpack.c.b16 %v1300, %v1299
        %v1318 = vpack.c.b16 %v1302, %v1301
        %v1319 = vpack.c.b16 %v1304, %v1303
        %v1320 = vpack.c.b16 %v1306, %v1305
        %v1321 = vpack.c.b16 %v1308, %v1307
        %v1322 = vpack.c.b16 %v1310, %v1309
        %v1323 = vpack.c.b16 %v1312, %v1311
        %v1324 = vpack.c.b16 %v1314, %v1313
        %v1325 = vpack.c.b16 %v1316, %v1315
        %1335 = vmatprep.subr.bf16.mxu0 0
        %1336 = vmatpush1.bf16.msra.mxu0 %v1317
        %1337 = vmatprep.subr.bf16.mxu0 0
        %1338 = vmatpush1.bf16.msra.mxu0 %v1318
        %1339 = vmatprep.subr.bf16.mxu0 0
        %1340 = vmatpush1.bf16.msra.mxu0 %v1319
        %1341 = vmatprep.subr.bf16.mxu0 0
        %1342 = vmatpush1.bf16.msra.mxu0 %v1320
        %1343 = vmatprep.subr.bf16.mxu0 0
        %1344 = vmatpush1.bf16.msra.mxu0 %v1321
        %1345 = vmatprep.subr.bf16.mxu0 0
        %1346 = vmatpush1.bf16.msra.mxu0 %v1322
        %1347 = vmatprep.subr.bf16.mxu0 0
        %1348 = vmatpush1.bf16.msra.mxu0 %v1323
        %1349 = vmatprep.subr.bf16.mxu0 0
        %1350 = vmatpush1.bf16.msra.mxu0 %v1324
        %1351 = vmatprep.subr.bf16.mxu0 0
        %1352 = vmatpush1.bf16.msra.mxu0 %v1325
        %1353 = vmatprep.subr.bf16.mxu0 0
        %1354 = vmatpush1.bf16.msra.mxu0 0
        %1355 = vmatprep.subr.bf16.mxu0 0
        %1356 = vmatpush1.bf16.msra.mxu0 0
        %1357 = vmatprep.subr.bf16.mxu0 0
        %1358 = vmatpush1.bf16.msra.mxu0 0
        %1359 = vmatprep.subr.bf16.mxu0 0
        %1360 = vmatpush1.bf16.msra.mxu0 0
        %1361 = vmatprep.subr.bf16.mxu0 0
        %1362 = vmatpush1.bf16.msra.mxu0 0
        %1363 = vmatprep.subr.bf16.mxu0 0
        %1364 = vmatpush1.bf16.msra.mxu0 0
        %1365 = vmatprep.subr.bf16.mxu0 0
        %1366 = vmatpush1.bf16.msra.mxu0 0
        %1367 = vmatprep.mubr.bf16.mxu0 %v1219
        %1368 = vmatmul.mubr.bf16.gmra.mrb[0].mxu0 %v1161
        %v1369 = vpop.f32.mrb[0].mxu0
        %v1370 = vadd.f32 0.0, %v1369
        %v1371 = vpop.f32.mrb[0].mxu0
        %v1372 = vpop.f32.mrb[0].mxu0
        %v1373 = vadd.f32 0.0, %v1372
        %v1374 = vpop.f32.mrb[0].mxu0
        %1375 = vdwg.mxu0
        %v1376 = vmax.f32 %v1256, %v1370
        %v1377 = vmax.f32 %v1259, %v1373
        %v1378 = vld [vmem:[%s5] sm:$0xf]
        %v1379 = vld [vmem:[%s5 + $0x4] sm:$0xf]
        %v1380 = vld [vmem:[%s5 + $0x8] sm:$0xf]
        %v1381 = vld [vmem:[%s5 + $0xc] sm:$0xf]
        %v1382 = vld [vmem:[%s5 + $0x10] sm:$0xf]
        %v1383 = vld [vmem:[%s5 + $0x14] sm:$0xf]
        %v1384 = vld [vmem:[%s5 + $0x18] sm:$0xf]
        %v1385 = vld [vmem:[%s5 + $0x1c] sm:$0xf]
        %v1386 = vld [vmem:[%s5 + $0x20] sm:$0xf]
        %v1387 = vpack.c.bf16 %v1376, %v1376
        %s1388 = scalar_lea.vmem %s5, 36
        %v1389 = vld [vmem:[%s1388] sm:$0xf]
        %v1390 = vld [vmem:[%s1388 + $0x4] sm:$0xf]
        %v1391 = vld [vmem:[%s1388 + $0x8] sm:$0xf]
        %v1392 = vld [vmem:[%s1388 + $0xc] sm:$0xf]
        %v1393 = vld [vmem:[%s1388 + $0x10] sm:$0xf]
        %v1394 = vld [vmem:[%s1388 + $0x14] sm:$0xf]
        %v1395 = vld [vmem:[%s1388 + $0x18] sm:$0xf]
        %v1396 = vld [vmem:[%s1388 + $0x1c] sm:$0xf]
        %v1397 = vld [vmem:[%s1388 + $0x20] sm:$0xf]
        %v1398 = vpack.c.bf16 %v1377, %v1376
        %v1400 = vshrl.u32 %v1398, 16
        %v1402 = vshll.u32 %v1398, 16
        %v1404 = vrot.slane %v1402, 1
        %v1405 = vor.u32 %v1400, %v1404
        %v1415 = vunpack.c.l.b16 %v1389
        %v1416 = vunpack.c.l.b16 %v1390
        %v1417 = vunpack.c.l.b16 %v1391
        %v1418 = vunpack.c.l.b16 %v1392
        %v1419 = vunpack.c.l.b16 %v1393
        %v1420 = vunpack.c.l.b16 %v1394
        %v1421 = vunpack.c.l.b16 %v1395
        %v1422 = vunpack.c.l.b16 %v1396
        %v1423 = vunpack.c.l.b16 %v1397
        %v1424 = vpack.c.b16 %v1416, %v1415
        %v1425 = vpack.c.b16 %v1418, %v1417
        %v1426 = vpack.c.b16 %v1420, %v1419
        %v1427 = vpack.c.b16 %v1422, %v1421
        %v1428 = vpack.c.b16 %v1423, %v1423
        %vm1433 = vcmask 588800
        %v1435 = vsel %vm1433, %v1405, 0
        %v1438 = vsel %vm1035, %v1428, 0
        %1440 = vmatprep.subr.bf16.mxu0 0
        %1441 = vmatpush1.bf16.msra.mxu0 %v1424
        %1442 = vmatprep.subr.bf16.mxu0 0
        %1443 = vmatpush1.bf16.msra.mxu0 %v1425
        %1444 = vmatprep.subr.bf16.mxu0 0
        %1445 = vmatpush1.bf16.msra.mxu0 %v1426
        %1446 = vmatprep.subr.bf16.mxu0 0
        %1447 = vmatpush1.bf16.msra.mxu0 %v1427
        %1448 = vmatprep.subr.bf16.mxu0 0
        %1449 = vmatpush1.bf16.msra.mxu0 %v1438
        %1450 = vmatprep.subr.bf16.mxu0 0
        %1451 = vmatpush1.bf16.msra.mxu0 0
        %1452 = vmatprep.subr.bf16.mxu0 0
        %1453 = vmatpush1.bf16.msra.mxu0 0
        %1454 = vmatprep.subr.bf16.mxu0 0
        %1455 = vmatpush1.bf16.msra.mxu0 0
        %1456 = vmatprep.subr.bf16.mxu0 0
        %1457 = vmatpush1.bf16.msra.mxu0 0
        %1458 = vmatprep.subr.bf16.mxu0 0
        %1459 = vmatpush1.bf16.msra.mxu0 0
        %1460 = vmatprep.subr.bf16.mxu0 0
        %1461 = vmatpush1.bf16.msra.mxu0 0
        %1462 = vmatprep.subr.bf16.mxu0 0
        %1463 = vmatpush1.bf16.msra.mxu0 0
        %1464 = vmatprep.subr.bf16.mxu0 0
        %1465 = vmatpush1.bf16.msra.mxu0 0
        %1466 = vmatprep.subr.bf16.mxu0 0
        %1467 = vmatpush1.bf16.msra.mxu0 0
        %1468 = vmatprep.subr.bf16.mxu0 0
        %1469 = vmatpush1.bf16.msra.mxu0 0
        %1470 = vmatprep.subr.bf16.mxu0 0
        %1471 = vmatpush1.bf16.msra.mxu0 0
        %1472 = vmatprep.mubr.bf16.mxu0 0
        %1473 = vmatmul.mubr.bf16.gmra.mrb[0].mxu0 %v1435
        %v1474 = vpop.f32.mrb[0].mxu0
        %v1475 = vadd.f32 0.0, %v1474
        %v1476 = vpop.f32.mrb[0].mxu0
        %v1477 = vpop.f32.mrb[0].mxu0
        %v1478 = vpop.f32.mrb[0].mxu0
        %1479 = vdwg.mxu0
        %v1489 = vunpack.c.l.b16 %v1378
        %v1490 = vunpack.c.l.b16 %v1379
        %v1491 = vunpack.c.l.b16 %v1380
        %v1492 = vunpack.c.l.b16 %v1381
        %v1493 = vunpack.c.l.b16 %v1382
        %v1494 = vunpack.c.l.b16 %v1383
        %v1495 = vunpack.c.l.b16 %v1384
        %v1496 = vunpack.c.l.b16 %v1385
        %v1497 = vunpack.c.l.b16 %v1386
        %v1498 = vpack.c.b16 %v1490, %v1489
        %v1499 = vpack.c.b16 %v1492, %v1491
        %v1500 = vpack.c.b16 %v1494, %v1493
        %v1501 = vpack.c.b16 %v1496, %v1495
        %v1502 = vpack.c.b16 %v1497, %v1497
        %v1508 = vsel %vm1433, %v1387, 0
        %v1511 = vsel %vm1035, %v1502, 0
        %1513 = vmatprep.subr.bf16.mxu0 0
        %1514 = vmatpush1.bf16.msra.mxu0 %v1498
        %1515 = vmatprep.subr.bf16.mxu0 0
        %1516 = vmatpush1.bf16.msra.mxu0 %v1499
        %1517 = vmatprep.subr.bf16.mxu0 0
        %1518 = vmatpush1.bf16.msra.mxu0 %v1500
        %1519 = vmatprep.subr.bf16.mxu0 0
        %1520 = vmatpush1.bf16.msra.mxu0 %v1501
        %1521 = vmatprep.subr.bf16.mxu0 0
        %1522 = vmatpush1.bf16.msra.mxu0 %v1511
        %1523 = vmatprep.subr.bf16.mxu0 0
        %1524 = vmatpush1.bf16.msra.mxu0 0
        %1525 = vmatprep.subr.bf16.mxu0 0
        %1526 = vmatpush1.bf16.msra.mxu0 0
        %1527 = vmatprep.subr.bf16.mxu0 0
        %1528 = vmatpush1.bf16.msra.mxu0 0
        %1529 = vmatprep.subr.bf16.mxu0 0
        %1530 = vmatpush1.bf16.msra.mxu0 0
        %1531 = vmatprep.subr.bf16.mxu0 0
        %1532 = vmatpush1.bf16.msra.mxu0 0
        %1533 = vmatprep.subr.bf16.mxu0 0
        %1534 = vmatpush1.bf16.msra.mxu0 0
        %1535 = vmatprep.subr.bf16.mxu0 0
        %1536 = vmatpush1.bf16.msra.mxu0 0
        %1537 = vmatprep.subr.bf16.mxu0 0
        %1538 = vmatpush1.bf16.msra.mxu0 0
        %1539 = vmatprep.subr.bf16.mxu0 0
        %1540 = vmatpush1.bf16.msra.mxu0 0
        %1541 = vmatprep.subr.bf16.mxu0 0
        %1542 = vmatpush1.bf16.msra.mxu0 0
        %1543 = vmatprep.subr.bf16.mxu0 0
        %1544 = vmatpush1.bf16.msra.mxu0 0
        %1545 = vmatprep.mubr.bf16.mxu0 0
        %1546 = vmatmul.mubr.bf16.gmra.mrb[0].mxu0 %v1508
        %v1547 = vpop.f32.mrb[0].mxu0
        %v1548 = vadd.f32 %v1475, %v1547
        %v1549 = vpop.f32.mrb[0].mxu0
        %v1550 = vpop.f32.mrb[0].mxu0
        %v1551 = vpop.f32.mrb[0].mxu0
        %1552 = vdwg.mxu0
        %s1553 = scalar_lea.vmem %s5, 72
        %v1554 = vld [vmem:[%s1553] sm:$0xf]
        %v1555 = vld [vmem:[%s1553 + $0x4] sm:$0xf]
        %v1556 = vld [vmem:[%s1553 + $0x8] sm:$0xf]
        %v1557 = vld [vmem:[%s1553 + $0xc] sm:$0xf]
        %v1558 = vld [vmem:[%s1553 + $0x10] sm:$0xf]
        %v1559 = vld [vmem:[%s1553 + $0x14] sm:$0xf]
        %v1560 = vld [vmem:[%s1553 + $0x18] sm:$0xf]
        %v1561 = vld [vmem:[%s1553 + $0x1c] sm:$0xf]
        %v1562 = vld [vmem:[%s1553 + $0x20] sm:$0xf]
        %v1564 = vrot.slane %v1398, 1
        %v1574 = vunpack.c.l.b16 %v1554
        %v1575 = vunpack.c.l.b16 %v1555
        %v1576 = vunpack.c.l.b16 %v1556
        %v1577 = vunpack.c.l.b16 %v1557
        %v1578 = vunpack.c.l.b16 %v1558
        %v1579 = vunpack.c.l.b16 %v1559
        %v1580 = vunpack.c.l.b16 %v1560
        %v1581 = vunpack.c.l.b16 %v1561
        %v1582 = vunpack.c.l.b16 %v1562
        %v1583 = vpack.c.b16 %v1575, %v1574
        %v1584 = vpack.c.b16 %v1577, %v1576
        %v1585 = vpack.c.b16 %v1579, %v1578
        %v1586 = vpack.c.b16 %v1581, %v1580
        %v1587 = vpack.c.b16 %v1582, %v1582
        %v1593 = vsel %vm1433, %v1564, 0
        %v1596 = vsel %vm1035, %v1587, 0
        %1598 = vmatprep.subr.bf16.mxu0 0
        %1599 = vmatpush1.bf16.msra.mxu0 %v1583
        %1600 = vmatprep.subr.bf16.mxu0 0
        %1601 = vmatpush1.bf16.msra.mxu0 %v1584
        %1602 = vmatprep.subr.bf16.mxu0 0
        %1603 = vmatpush1.bf16.msra.mxu0 %v1585
        %1604 = vmatprep.subr.bf16.mxu0 0
        %1605 = vmatpush1.bf16.msra.mxu0 %v1586
        %1606 = vmatprep.subr.bf16.mxu0 0
        %1607 = vmatpush1.bf16.msra.mxu0 %v1596
        %1608 = vmatprep.subr.bf16.mxu0 0
        %1609 = vmatpush1.bf16.msra.mxu0 0
        %1610 = vmatprep.subr.bf16.mxu0 0
        %1611 = vmatpush1.bf16.msra.mxu0 0
        %1612 = vmatprep.subr.bf16.mxu0 0
        %1613 = vmatpush1.bf16.msra.mxu0 0
        %1614 = vmatprep.subr.bf16.mxu0 0
        %1615 = vmatpush1.bf16.msra.mxu0 0
        %1616 = vmatprep.subr.bf16.mxu0 0
        %1617 = vmatpush1.bf16.msra.mxu0 0
        %1618 = vmatprep.subr.bf16.mxu0 0
        %1619 = vmatpush1.bf16.msra.mxu0 0
        %1620 = vmatprep.subr.bf16.mxu0 0
        %1621 = vmatpush1.bf16.msra.mxu0 0
        %1622 = vmatprep.subr.bf16.mxu0 0
        %1623 = vmatpush1.bf16.msra.mxu0 0
        %1624 = vmatprep.subr.bf16.mxu0 0
        %1625 = vmatpush1.bf16.msra.mxu0 0
        %1626 = vmatprep.subr.bf16.mxu0 0
        %1627 = vmatpush1.bf16.msra.mxu0 0
        %1628 = vmatprep.subr.bf16.mxu0 0
        %1629 = vmatpush1.bf16.msra.mxu0 0
        %1630 = vmatprep.mubr.bf16.mxu0 0
        %1631 = vmatmul.mubr.bf16.gmra.mrb[0].mxu0 %v1593
        %v1632 = vpop.f32.mrb[0].mxu0
        %v1633 = vadd.f32 0.0, %v1632
        %v1634 = vpop.f32.mrb[0].mxu0
        %v1635 = vpop.f32.mrb[0].mxu0
        %v1636 = vpop.f32.mrb[0].mxu0
        %1637 = vdwg.mxu0
        %v1638 = vadd.f32 %v1548, %v1633
        %s1639 = scalar_lea.vmem %s5, 108
        %v1640 = vld [vmem:[%s1639] sm:$0xf]
        %v1641 = vld [vmem:[%s1639 + $0x4] sm:$0xf]
        %v1642 = vld [vmem:[%s1639 + $0x8] sm:$0xf]
        %v1643 = vld [vmem:[%s1639 + $0xc] sm:$0xf]
        %v1644 = vld [vmem:[%s1639 + $0x10] sm:$0xf]
        %v1645 = vld [vmem:[%s1639 + $0x14] sm:$0xf]
        %v1646 = vld [vmem:[%s1639 + $0x18] sm:$0xf]
        %v1647 = vld [vmem:[%s1639 + $0x1c] sm:$0xf]
        %v1648 = vld [vmem:[%s1639 + $0x20] sm:$0xf]
        %v1649 = vrot.slane %v1400, 1
        %v1650 = vrot.slane %v1402, 2
        %v1651 = vor.u32 %v1649, %v1650
        %v1661 = vunpack.c.l.b16 %v1640
        %v1662 = vunpack.c.l.b16 %v1641
        %v1663 = vunpack.c.l.b16 %v1642
        %v1664 = vunpack.c.l.b16 %v1643
        %v1665 = vunpack.c.l.b16 %v1644
        %v1666 = vunpack.c.l.b16 %v1645
        %v1667 = vunpack.c.l.b16 %v1646
        %v1668 = vunpack.c.l.b16 %v1647
        %v1669 = vunpack.c.l.b16 %v1648
        %v1670 = vpack.c.b16 %v1662, %v1661
        %v1671 = vpack.c.b16 %v1664, %v1663
        %v1672 = vpack.c.b16 %v1666, %v1665
        %v1673 = vpack.c.b16 %v1668, %v1667
        %v1674 = vpack.c.b16 %v1669, %v1669
        %v1680 = vsel %vm1433, %v1651, 0
        %v1683 = vsel %vm1035, %v1674, 0
        %1685 = vmatprep.subr.bf16.mxu0 0
        %1686 = vmatpush1.bf16.msra.mxu0 %v1670
        %1687 = vmatprep.subr.bf16.mxu0 0
        %1688 = vmatpush1.bf16.msra.mxu0 %v1671
        %1689 = vmatprep.subr.bf16.mxu0 0
        %1690 = vmatpush1.bf16.msra.mxu0 %v1672
        %1691 = vmatprep.subr.bf16.mxu0 0
        %1692 = vmatpush1.bf16.msra.mxu0 %v1673
        %1693 = vmatprep.subr.bf16.mxu0 0
        %1694 = vmatpush1.bf16.msra.mxu0 %v1683
        %1695 = vmatprep.subr.bf16.mxu0 0
        %1696 = vmatpush1.bf16.msra.mxu0 0
        %1697 = vmatprep.subr.bf16.mxu0 0
        %1698 = vmatpush1.bf16.msra.mxu0 0
        %1699 = vmatprep.subr.bf16.mxu0 0
        %1700 = vmatpush1.bf16.msra.mxu0 0
        %1701 = vmatprep.subr.bf16.mxu0 0
        %1702 = vmatpush1.bf16.msra.mxu0 0
        %1703 = vmatprep.subr.bf16.mxu0 0
        %1704 = vmatpush1.bf16.msra.mxu0 0
        %1705 = vmatprep.subr.bf16.mxu0 0
        %1706 = vmatpush1.bf16.msra.mxu0 0
        %1707 = vmatprep.subr.bf16.mxu0 0
        %1708 = vmatpush1.bf16.msra.mxu0 0
        %1709 = vmatprep.subr.bf16.mxu0 0
        %1710 = vmatpush1.bf16.msra.mxu0 0
        %1711 = vmatprep.subr.bf16.mxu0 0
        %1712 = vmatpush1.bf16.msra.mxu0 0
        %1713 = vmatprep.subr.bf16.mxu0 0
        %1714 = vmatpush1.bf16.msra.mxu0 0
        %1715 = vmatprep.subr.bf16.mxu0 0
        %1716 = vmatpush1.bf16.msra.mxu0 0
        %1717 = vmatprep.mubr.bf16.mxu0 0
        %1718 = vmatmul.mubr.bf16.gmra.mrb[0].mxu0 %v1680
        %v1719 = vpop.f32.mrb[0].mxu0
        %v1720 = vadd.f32 0.0, %v1719
        %v1721 = vpop.f32.mrb[0].mxu0
        %v1722 = vpop.f32.mrb[0].mxu0
        %v1723 = vpop.f32.mrb[0].mxu0
        %1724 = vdwg.mxu0
        %v1725 = vadd.f32 %v1638, %v1720
        %s1726 = scalar_lea.vmem %s5, 144
        %v1727 = vld [vmem:[%s1726] sm:$0xf]
        %v1728 = vld [vmem:[%s1726 + $0x4] sm:$0xf]
        %v1729 = vld [vmem:[%s1726 + $0x8] sm:$0xf]
        %v1730 = vld [vmem:[%s1726 + $0xc] sm:$0xf]
        %v1731 = vld [vmem:[%s1726 + $0x10] sm:$0xf]
        %v1732 = vld [vmem:[%s1726 + $0x14] sm:$0xf]
        %v1733 = vld [vmem:[%s1726 + $0x18] sm:$0xf]
        %v1734 = vld [vmem:[%s1726 + $0x1c] sm:$0xf]
        %v1735 = vld [vmem:[%s1726 + $0x20] sm:$0xf]
        %v1736 = vrot.slane %v1398, 2
        %v1746 = vunpack.c.l.b16 %v1727
        %v1747 = vunpack.c.l.b16 %v1728
        %v1748 = vunpack.c.l.b16 %v1729
        %v1749 = vunpack.c.l.b16 %v1730
        %v1750 = vunpack.c.l.b16 %v1731
        %v1751 = vunpack.c.l.b16 %v1732
        %v1752 = vunpack.c.l.b16 %v1733
        %v1753 = vunpack.c.l.b16 %v1734
        %v1754 = vunpack.c.l.b16 %v1735
        %v1755 = vpack.c.b16 %v1747, %v1746
        %v1756 = vpack.c.b16 %v1749, %v1748
        %v1757 = vpack.c.b16 %v1751, %v1750
        %v1758 = vpack.c.b16 %v1753, %v1752
        %v1759 = vpack.c.b16 %v1754, %v1754
        %v1765 = vsel %vm1433, %v1736, 0
        %v1768 = vsel %vm1035, %v1759, 0
        %1770 = vmatprep.subr.bf16.mxu0 0
        %1771 = vmatpush1.bf16.msra.mxu0 %v1755
        %1772 = vmatprep.subr.bf16.mxu0 0
        %1773 = vmatpush1.bf16.msra.mxu0 %v1756
        %1774 = vmatprep.subr.bf16.mxu0 0
        %1775 = vmatpush1.bf16.msra.mxu0 %v1757
        %1776 = vmatprep.subr.bf16.mxu0 0
        %1777 = vmatpush1.bf16.msra.mxu0 %v1758
        %1778 = vmatprep.subr.bf16.mxu0 0
        %1779 = vmatpush1.bf16.msra.mxu0 %v1768
        %1780 = vmatprep.subr.bf16.mxu0 0
        %1781 = vmatpush1.bf16.msra.mxu0 0
        %1782 = vmatprep.subr.bf16.mxu0 0
        %1783 = vmatpush1.bf16.msra.mxu0 0
        %1784 = vmatprep.subr.bf16.mxu0 0
        %1785 = vmatpush1.bf16.msra.mxu0 0
        %1786 = vmatprep.subr.bf16.mxu0 0
        %1787 = vmatpush1.bf16.msra.mxu0 0
        %1788 = vmatprep.subr.bf16.mxu0 0
        %1789 = vmatpush1.bf16.msra.mxu0 0
        %1790 = vmatprep.subr.bf16.mxu0 0
        %1791 = vmatpush1.bf16.msra.mxu0 0
        %1792 = vmatprep.subr.bf16.mxu0 0
        %1793 = vmatpush1.bf16.msra.mxu0 0
        %1794 = vmatprep.subr.bf16.mxu0 0
        %1795 = vmatpush1.bf16.msra.mxu0 0
        %1796 = vmatprep.subr.bf16.mxu0 0
        %1797 = vmatpush1.bf16.msra.mxu0 0
        %1798 = vmatprep.subr.bf16.mxu0 0
        %1799 = vmatpush1.bf16.msra.mxu0 0
        %1800 = vmatprep.subr.bf16.mxu0 0
        %1801 = vmatpush1.bf16.msra.mxu0 0
        %1802 = vmatprep.mubr.bf16.mxu0 0
        %1803 = vmatmul.mubr.bf16.gmra.mrb[0].mxu0 %v1765
        %v1804 = vpop.f32.mrb[0].mxu0
        %v1805 = vadd.f32 0.0, %v1804
        %v1806 = vpop.f32.mrb[0].mxu0
        %v1807 = vpop.f32.mrb[0].mxu0
        %v1808 = vpop.f32.mrb[0].mxu0
        %1809 = vdwg.mxu0
        %v1810 = vadd.f32 %v1725, %v1805
        %v1811 = vld [vmem:[%s6] sm:$0x1]
        %v1813 = vlaneseq
        %v1814 = vshrl.u32 %v1813, 7
        %v1815 = vsub.s32 0, %v1814
        %v1816 = vrot.slane %v1811, %v1815
        %v1818 = vadd.f32 %v1810, %v1816
        %v1819 = vmax.f32 %v1818, 0.0
        %v1820 = vld [vmem:[%s7] sm:$0x3]
        %v1821 = vpack.c.bf16 %v1819, %v1819
        %vm1822 = vcmask 64512
        %v1824 = vsel %vm1822, %v1820, 0
        %v1827 = vsel %vm1035, %v1821, 0
        %1829 = vmatprep.subr.bf16.mxu0 0
        %1830 = vmatpush1.bf16.msra.mxu0 %v1827
        %1831 = vmatprep.subr.bf16.mxu0 0
        %1832 = vmatpush1.bf16.msra.mxu0 0
        %1833 = vmatprep.subr.bf16.mxu0 0
        %1834 = vmatpush1.bf16.msra.mxu0 0
        %1835 = vmatprep.subr.bf16.mxu0 0
        %1836 = vmatpush1.bf16.msra.mxu0 0
        %1837 = vmatprep.subr.bf16.mxu0 0
        %1838 = vmatpush1.bf16.msra.mxu0 0
        %1839 = vmatprep.subr.bf16.mxu0 0
        %1840 = vmatpush1.bf16.msra.mxu0 0
        %1841 = vmatprep.subr.bf16.mxu0 0
        %1842 = vmatpush1.bf16.msra.mxu0 0
        %1843 = vmatprep.subr.bf16.mxu0 0
        %1844 = vmatpush1.bf16.msra.mxu0 0
        %1845 = vmatprep.subr.bf16.mxu0 0
        %1846 = vmatpush1.bf16.msra.mxu0 0
        %1847 = vmatprep.subr.bf16.mxu0 0
        %1848 = vmatpush1.bf16.msra.mxu0 0
        %1849 = vmatprep.subr.bf16.mxu0 0
        %1850 = vmatpush1.bf16.msra.mxu0 0
        %1851 = vmatprep.subr.bf16.mxu0 0
        %1852 = vmatpush1.bf16.msra.mxu0 0
        %1853 = vmatprep.subr.bf16.mxu0 0
        %1854 = vmatpush1.bf16.msra.mxu0 0
        %1855 = vmatprep.subr.bf16.mxu0 0
        %1856 = vmatpush1.bf16.msra.mxu0 0
        %1857 = vmatprep.subr.bf16.mxu0 0
        %1858 = vmatpush1.bf16.msra.mxu0 0
        %1859 = vmatprep.subr.bf16.mxu0 0
        %1860 = vmatpush1.bf16.msra.mxu0 0
        %1861 = vmatprep.mubr.bf16.mxu0 0
        %1862 = vmatmul.mubr.bf16.gmra.mrb[0].mxu0 %v1824
        %v1863 = vpop.f32.mrb[0].mxu0
        %v1864 = vadd.f32 0.0, %v1863
        %v1865 = vpop.f32.mrb[0].mxu0
        %v1866 = vpop.f32.mrb[0].mxu0
        %v1867 = vpop.f32.mrb[0].mxu0
        %1868 = vdwg.mxu0
        %s1869 = scalar_lea.vmem %s7, 2
        %v1870 = vld [vmem:[%s1869] sm:$0x3]
        %v1872 = vsel %vm1822, %v1870, 0
        %1874 = vmatprep.subr.bf16.mxu0 0
        %1875 = vmatpush1.bf16.msra.mxu0 %v1827
        %1876 = vmatprep.subr.bf16.mxu0 0
        %1877 = vmatpush1.bf16.msra.mxu0 0
        %1878 = vmatprep.subr.bf16.mxu0 0
        %1879 = vmatpush1.bf16.msra.mxu0 0
        %1880 = vmatprep.subr.bf16.mxu0 0
        %1881 = vmatpush1.bf16.msra.mxu0 0
        %1882 = vmatprep.subr.bf16.mxu0 0
        %1883 = vmatpush1.bf16.msra.mxu0 0
        %1884 = vmatprep.subr.bf16.mxu0 0
        %1885 = vmatpush1.bf16.msra.mxu0 0
        %1886 = vmatprep.subr.bf16.mxu0 0
        %1887 = vmatpush1.bf16.msra.mxu0 0
        %1888 = vmatprep.subr.bf16.mxu0 0
        %1889 = vmatpush1.bf16.msra.mxu0 0
        %1890 = vmatprep.subr.bf16.mxu0 0
        %1891 = vmatpush1.bf16.msra.mxu0 0
        %1892 = vmatprep.subr.bf16.mxu0 0
        %1893 = vmatpush1.bf16.msra.mxu0 0
        %1894 = vmatprep.subr.bf16.mxu0 0
        %1895 = vmatpush1.bf16.msra.mxu0 0
        %1896 = vmatprep.subr.bf16.mxu0 0
        %1897 = vmatpush1.bf16.msra.mxu0 0
        %1898 = vmatprep.subr.bf16.mxu0 0
        %1899 = vmatpush1.bf16.msra.mxu0 0
        %1900 = vmatprep.subr.bf16.mxu0 0
        %1901 = vmatpush1.bf16.msra.mxu0 0
        %1902 = vmatprep.subr.bf16.mxu0 0
        %1903 = vmatpush1.bf16.msra.mxu0 0
        %1904 = vmatprep.subr.bf16.mxu0 0
        %1905 = vmatpush1.bf16.msra.mxu0 0
        %1906 = vmatprep.mubr.bf16.mxu0 0
        %1907 = vmatmul.mubr.bf16.gmra.mrb[0].mxu0 %v1872
        %v1908 = vpop.f32.mrb[0].mxu0
        %v1909 = vadd.f32 0.0, %v1908
        %v1910 = vpop.f32.mrb[0].mxu0
        %v1911 = vpop.f32.mrb[0].mxu0
        %v1912 = vpop.f32.mrb[0].mxu0
        %1913 = vdwg.mxu0
        %v1914 = vmax.f32 %v1864, %v1909
        %v1915 = vld [vmem:[%s8] sm:$0xf]
        %v1916 = vld [vmem:[%s8 + $0x4] sm:$0xf]
        %v1917 = vld [vmem:[%s8 + $0x8] sm:$0xf]
        %v1918 = vld [vmem:[%s8 + $0xc] sm:$0xf]
        %v1919 = vld [vmem:[%s8 + $0x10] sm:$0xf]
        %v1920 = vld [vmem:[%s8 + $0x14] sm:$0xf]
        %v1921 = vld [vmem:[%s8 + $0x18] sm:$0xf]
        %v1922 = vld [vmem:[%s8 + $0x1c] sm:$0xf]
        %v1923 = vld [vmem:[%s8 + $0x20] sm:$0xf]
        %v1924 = vld [vmem:[%s8 + $0x24] sm:$0xf]
        %v1925 = vld [vmem:[%s8 + $0x28] sm:$0xf]
        %v1926 = vld [vmem:[%s8 + $0x2c] sm:$0xf]
        %v1927 = vld [vmem:[%s8 + $0x30] sm:$0xf]
        %v1928 = vld [vmem:[%s8 + $0x34] sm:$0xf]
        %v1929 = vld [vmem:[%s8 + $0x38] sm:$0xf]
        %v1930 = vld [vmem:[%s8 + $0x3c] sm:$0xf]
        %v1931 = vpack.c.bf16 %v1914, %v1914
        %v1948 = vunpack.c.l.b16 %v1915
        %v1949 = vunpack.c.l.b16 %v1916
        %v1950 = vunpack.c.l.b16 %v1917
        %v1951 = vunpack.c.l.b16 %v1918
        %v1952 = vunpack.c.l.b16 %v1919
        %v1953 = vunpack.c.l.b16 %v1920
        %v1954 = vunpack.c.l.b16 %v1921
        %v1955 = vunpack.c.l.b16 %v1922
        %v1956 = vunpack.c.l.b16 %v1923
        %v1957 = vunpack.c.l.b16 %v1924
        %v1958 = vunpack.c.l.b16 %v1925
        %v1959 = vunpack.c.l.b16 %v1926
        %v1960 = vunpack.c.l.b16 %v1927
        %v1961 = vunpack.c.l.b16 %v1928
        %v1962 = vunpack.c.l.b16 %v1929
        %v1963 = vunpack.c.l.b16 %v1930
        %v1964 = vpack.c.b16 %v1949, %v1948
        %v1965 = vpack.c.b16 %v1951, %v1950
        %v1966 = vpack.c.b16 %v1953, %v1952
        %v1967 = vpack.c.b16 %v1955, %v1954
        %v1968 = vpack.c.b16 %v1957, %v1956
        %v1969 = vpack.c.b16 %v1959, %v1958
        %v1970 = vpack.c.b16 %v1961, %v1960
        %v1971 = vpack.c.b16 %v1963, %v1962
        %1980 = vmatprep.subr.bf16.mxu0 0
        %1981 = vmatpush1.bf16.msra.mxu0 %v1964
        %1982 = vmatprep.subr.bf16.mxu0 0
        %1983 = vmatpush1.bf16.msra.mxu0 %v1965
        %1984 = vmatprep.subr.bf16.mxu0 0
        %1985 = vmatpush1.bf16.msra.mxu0 %v1966
        %1986 = vmatprep.subr.bf16.mxu0 0
        %1987 = vmatpush1.bf16.msra.mxu0 %v1967
        %1988 = vmatprep.subr.bf16.mxu0 0
        %1989 = vmatpush1.bf16.msra.mxu0 %v1968
        %1990 = vmatprep.subr.bf16.mxu0 0
        %1991 = vmatpush1.bf16.msra.mxu0 %v1969
        %1992 = vmatprep.subr.bf16.mxu0 0
        %1993 = vmatpush1.bf16.msra.mxu0 %v1970
        %1994 = vmatprep.subr.bf16.mxu0 0
        %1995 = vmatpush1.bf16.msra.mxu0 %v1971
        %1996 = vmatprep.subr.bf16.mxu0 0
        %1997 = vmatpush1.bf16.msra.mxu0 0
        %1998 = vmatprep.subr.bf16.mxu0 0
        %1999 = vmatpush1.bf16.msra.mxu0 0
        %2000 = vmatprep.subr.bf16.mxu0 0
        %2001 = vmatpush1.bf16.msra.mxu0 0
        %2002 = vmatprep.subr.bf16.mxu0 0
        %2003 = vmatpush1.bf16.msra.mxu0 0
        %2004 = vmatprep.subr.bf16.mxu0 0
        %2005 = vmatpush1.bf16.msra.mxu0 0
        %2006 = vmatprep.subr.bf16.mxu0 0
        %2007 = vmatpush1.bf16.msra.mxu0 0
        %2008 = vmatprep.subr.bf16.mxu0 0
        %2009 = vmatpush1.bf16.msra.mxu0 0
        %2010 = vmatprep.subr.bf16.mxu0 0
        %2011 = vmatpush1.bf16.msra.mxu0 0
        %2012 = vmatprep.mubr.bf16.mxu0 0
        %2013 = vmatmul.mubr.bf16.gmra.mrb[0].mxu0 %v1931
        %v2014 = vpop.f32.mrb[0].mxu0
        %v2015 = vadd.f32 0.0, %v2014
        %v2016 = vpop.f32.mrb[0].mxu0
        %v2017 = vpop.f32.mrb[0].mxu0
        %v2018 = vpop.f32.mrb[0].mxu0
        %2019 = vdwg.mxu0
        %s2020 = scalar_lea.vmem %s8, 64
        %v2021 = vld [vmem:[%s2020] sm:$0xf]
        %v2022 = vld [vmem:[%s2020 + $0x4] sm:$0xf]
        %v2023 = vld [vmem:[%s2020 + $0x8] sm:$0xf]
        %v2024 = vld [vmem:[%s2020 + $0xc] sm:$0xf]
        %v2025 = vld [vmem:[%s2020 + $0x10] sm:$0xf]
        %v2026 = vld [vmem:[%s2020 + $0x14] sm:$0xf]
        %v2027 = vld [vmem:[%s2020 + $0x18] sm:$0xf]
        %v2028 = vld [vmem:[%s2020 + $0x1c] sm:$0xf]
        %v2029 = vld [vmem:[%s2020 + $0x20] sm:$0xf]
        %v2030 = vld [vmem:[%s2020 + $0x24] sm:$0xf]
        %v2031 = vld [vmem:[%s2020 + $0x28] sm:$0xf]
        %v2032 = vld [vmem:[%s2020 + $0x2c] sm:$0xf]
        %v2033 = vld [vmem:[%s2020 + $0x30] sm:$0xf]
        %v2034 = vld [vmem:[%s2020 + $0x34] sm:$0xf]
        %v2035 = vld [vmem:[%s2020 + $0x38] sm:$0xf]
        %v2036 = vld [vmem:[%s2020 + $0x3c] sm:$0xf]
        %v2053 = vunpack.c.l.b16 %v2021
        %v2054 = vunpack.c.l.b16 %v2022
        %v2055 = vunpack.c.l.b16 %v2023
        %v2056 = vunpack.c.l.b16 %v2024
        %v2057 = vunpack.c.l.b16 %v2025
        %v2058 = vunpack.c.l.b16 %v2026
        %v2059 = vunpack.c.l.b16 %v2027
        %v2060 = vunpack.c.l.b16 %v2028
        %v2061 = vunpack.c.l.b16 %v2029
        %v2062 = vunpack.c.l.b16 %v2030
        %v2063 = vunpack.c.l.b16 %v2031
        %v2064 = vunpack.c.l.b16 %v2032
        %v2065 = vunpack.c.l.b16 %v2033
        %v2066 = vunpack.c.l.b16 %v2034
        %v2067 = vunpack.c.l.b16 %v2035
        %v2068 = vunpack.c.l.b16 %v2036
        %v2069 = vpack.c.b16 %v2054, %v2053
        %v2070 = vpack.c.b16 %v2056, %v2055
        %v2071 = vpack.c.b16 %v2058, %v2057
        %v2072 = vpack.c.b16 %v2060, %v2059
        %v2073 = vpack.c.b16 %v2062, %v2061
        %v2074 = vpack.c.b16 %v2064, %v2063
        %v2075 = vpack.c.b16 %v2066, %v2065
        %v2076 = vpack.c.b16 %v2068, %v2067
        %2085 = vmatprep.subr.bf16.mxu0 0
        %2086 = vmatpush1.bf16.msra.mxu0 %v2069
        %2087 = vmatprep.subr.bf16.mxu0 0
        %2088 = vmatpush1.bf16.msra.mxu0 %v2070
        %2089 = vmatprep.subr.bf16.mxu0 0
        %2090 = vmatpush1.bf16.msra.mxu0 %v2071
        %2091 = vmatprep.subr.bf16.mxu0 0
        %2092 = vmatpush1.bf16.msra.mxu0 %v2072
        %2093 = vmatprep.subr.bf16.mxu0 0
        %2094 = vmatpush1.bf16.msra.mxu0 %v2073
        %2095 = vmatprep.subr.bf16.mxu0 0
        %2096 = vmatpush1.bf16.msra.mxu0 %v2074
        %2097 = vmatprep.subr.bf16.mxu0 0
        %2098 = vmatpush1.bf16.msra.mxu0 %v2075
        %2099 = vmatprep.subr.bf16.mxu0 0
        %2100 = vmatpush1.bf16.msra.mxu0 %v2076
        %2101 = vmatprep.subr.bf16.mxu0 0
        %2102 = vmatpush1.bf16.msra.mxu0 0
        %2103 = vmatprep.subr.bf16.mxu0 0
        %2104 = vmatpush1.bf16.msra.mxu0 0
        %2105 = vmatprep.subr.bf16.mxu0 0
        %2106 = vmatpush1.bf16.msra.mxu0 0
        %2107 = vmatprep.subr.bf16.mxu0 0
        %2108 = vmatpush1.bf16.msra.mxu0 0
        %2109 = vmatprep.subr.bf16.mxu0 0
        %2110 = vmatpush1.bf16.msra.mxu0 0
        %2111 = vmatprep.subr.bf16.mxu0 0
        %2112 = vmatpush1.bf16.msra.mxu0 0
        %2113 = vmatprep.subr.bf16.mxu0 0
        %2114 = vmatpush1.bf16.msra.mxu0 0
        %2115 = vmatprep.subr.bf16.mxu0 0
        %2116 = vmatpush1.bf16.msra.mxu0 0
        %2117 = vmatprep.mubr.bf16.mxu0 0
        %2118 = vmatmul.mubr.bf16.gmra.mrb[0].mxu0 %v1931
        %v2119 = vpop.f32.mrb[0].mxu0
        %v2120 = vadd.f32 0.0, %v2119
        %v2121 = vpop.f32.mrb[0].mxu0
        %v2122 = vpop.f32.mrb[0].mxu0
        %v2123 = vpop.f32.mrb[0].mxu0
        %2124 = vdwg.mxu0
        %v2125 = vmax.f32 %v2015, %v2120
        %s2126 = smul.u32 %s500, 4
        %s2127 = scalar_lea.vmem [#allocation2], %s2126
        %vm2128 = vcmask 519168
        %2129 = vst.msk [vmem:[%s2127] sm:$0xf] %vm2128, %v2125
      $region85: #{net_forward.1} parent=79 // loop_footer
        %s504 = sadd.s32 1, %s500
      $region86: #{net_forward.1} parent=79 // loop_footer_branch
        %499 = sbr.rel target = $region82
      $region87: #{net_forward.1} parent=79 // loop_exit
        _
      %v2130 = vld [vmem:[#allocation2] sm:$0x1]
      %v2131 = vld [vmem:[#allocation2 + $0x4] sm:$0x1]
      %v2132 = vld [vmem:[#allocation2 + $0x8] sm:$0x1]
      %v2133 = vld [vmem:[#allocation2 + $0xc] sm:$0x1]
      %v2134 = vld [vmem:[#allocation2 + $0x10] sm:$0x1]
      %v2135 = vld [vmem:[#allocation2 + $0x14] sm:$0x1]
      %v2136 = vld [vmem:[#allocation2 + $0x18] sm:$0x1]
      %v2137 = vld [vmem:[#allocation2 + $0x1c] sm:$0x1]
      %v2138 = vld [vmem:[%s9] sm:$0xf]
      %v2139 = vld [vmem:[%s9 + $0x4] sm:$0xf]
      %v2140 = vld [vmem:[%s9 + $0x8] sm:$0xf]
      %v2141 = vld [vmem:[%s9 + $0xc] sm:$0xf]
      %v2142 = vld [vmem:[%s9 + $0x10] sm:$0xf]
      %v2143 = vld [vmem:[%s9 + $0x14] sm:$0xf]
      %v2144 = vld [vmem:[%s9 + $0x18] sm:$0xf]
      %v2145 = vld [vmem:[%s9 + $0x1c] sm:$0xf]
      %v2146 = vpack.c.bf16 %v2130, %v2130
      %v2147 = vpack.c.bf16 %v2131, %v2131
      %v2148 = vpack.c.bf16 %v2132, %v2132
      %v2149 = vpack.c.bf16 %v2133, %v2133
      %v2150 = vpack.c.bf16 %v2134, %v2134
      %v2151 = vpack.c.bf16 %v2135, %v2135
      %v2152 = vpack.c.bf16 %v2136, %v2136
      %v2153 = vpack.c.bf16 %v2137, %v2137
      %v2154 = vld [vmem:[#allocation2 + $0x1] sm:$0x1]
      %v2155 = vld [vmem:[#allocation2 + $0x5] sm:$0x1]
      %v2156 = vld [vmem:[#allocation2 + $0x9] sm:$0x1]
      %v2157 = vld [vmem:[#allocation2 + $0xd] sm:$0x1]
      %v2158 = vld [vmem:[#allocation2 + $0x11] sm:$0x1]
      %v2159 = vld [vmem:[#allocation2 + $0x15] sm:$0x1]
      %v2160 = vld [vmem:[#allocation2 + $0x19] sm:$0x1]
      %v2161 = vld [vmem:[#allocation2 + $0x1d] sm:$0x1]
      %s2162 = scalar_lea.vmem %s9, 32
      %v2163 = vld [vmem:[%s2162] sm:$0xf]
      %v2164 = vld [vmem:[%s2162 + $0x4] sm:$0xf]
      %v2165 = vld [vmem:[%s2162 + $0x8] sm:$0xf]
      %v2166 = vld [vmem:[%s2162 + $0xc] sm:$0xf]
      %v2167 = vld [vmem:[%s2162 + $0x10] sm:$0xf]
      %v2168 = vld [vmem:[%s2162 + $0x14] sm:$0xf]
      %v2169 = vld [vmem:[%s2162 + $0x18] sm:$0xf]
      %v2170 = vld [vmem:[%s2162 + $0x1c] sm:$0xf]
      %v2171 = vpack.c.bf16 %v2154, %v2154
      %v2172 = vpack.c.bf16 %v2155, %v2155
      %v2173 = vpack.c.bf16 %v2156, %v2156
      %v2174 = vpack.c.bf16 %v2157, %v2157
      %v2175 = vpack.c.bf16 %v2158, %v2158
      %v2176 = vpack.c.bf16 %v2159, %v2159
      %v2177 = vpack.c.bf16 %v2160, %v2160
      %v2178 = vpack.c.bf16 %v2161, %v2161
      %v2187 = vunpack.c.l.b16 %v2171
      %v2188 = vunpack.c.l.b16 %v2172
      %v2189 = vunpack.c.l.b16 %v2173
      %v2190 = vunpack.c.l.b16 %v2174
      %v2191 = vunpack.c.l.b16 %v2175
      %v2192 = vunpack.c.l.b16 %v2176
      %v2193 = vunpack.c.l.b16 %v2177
      %v2194 = vunpack.c.l.b16 %v2178
      %v2195 = vrot.slane %v2188, 7
      %vm2196 = vcmask 1041409
      %v2197 = vsel %vm2196, %v2195, %v2187
      %v2198 = vrot.slane %v2189, 6
      %vm2199 = vcmask 1042434
      %v2200 = vsel %vm2199, %v2198, %v2197
      %v2201 = vrot.slane %v2190, 5
      %vm2202 = vcmask 1043459
      %v2203 = vsel %vm2202, %v2201, %v2200
      %v2204 = vrot.slane %v2191, 4
      %vm2205 = vcmask 1044484
      %v2206 = vsel %vm2205, %v2204, %v2203
      %v2207 = vrot.slane %v2192, 3
      %vm2208 = vcmask 1045509
      %v2209 = vsel %vm2208, %v2207, %v2206
      %v2210 = vrot.slane %v2193, 2
      %vm2211 = vcmask 1046534
      %v2212 = vsel %vm2211, %v2210, %v2209
      %v2213 = vrot.slane %v2194, 1
      %vm2214 = vcmask 1047559
      %v2215 = vsel %vm2214, %v2213, %v2212
      %v2216 = vpack.c.b16 %v2215, %v2215
      %v2225 = vunpack.c.l.b16 %v2163
      %v2226 = vunpack.c.l.b16 %v2164
      %v2227 = vunpack.c.l.b16 %v2165
      %v2228 = vunpack.c.l.b16 %v2166
      %v2229 = vunpack.c.l.b16 %v2167
      %v2230 = vunpack.c.l.b16 %v2168
      %v2231 = vunpack.c.l.b16 %v2169
      %v2232 = vunpack.c.l.b16 %v2170
      %v2233 = vpack.c.b16 %v2226, %v2225
      %v2234 = vpack.c.b16 %v2228, %v2227
      %v2235 = vpack.c.b16 %v2230, %v2229
      %v2236 = vpack.c.b16 %v2232, %v2231
      %vm2241 = vcmask 523264
      %v2243 = vsel %vm2241, %v2216, 0
      %2245 = vmatprep.subr.bf16.mxu0 0
      %2246 = vmatpush1.bf16.msra.mxu0 %v2233
      %2247 = vmatprep.subr.bf16.mxu0 0
      %2248 = vmatpush1.bf16.msra.mxu0 %v2234
      %2249 = vmatprep.subr.bf16.mxu0 0
      %2250 = vmatpush1.bf16.msra.mxu0 %v2235
      %2251 = vmatprep.subr.bf16.mxu0 0
      %2252 = vmatpush1.bf16.msra.mxu0 %v2236
      %2253 = vmatprep.subr.bf16.mxu0 0
      %2254 = vmatpush1.bf16.msra.mxu0 0
      %2255 = vmatprep.subr.bf16.mxu0 0
      %2256 = vmatpush1.bf16.msra.mxu0 0
      %2257 = vmatprep.subr.bf16.mxu0 0
      %2258 = vmatpush1.bf16.msra.mxu0 0
      %2259 = vmatprep.subr.bf16.mxu0 0
      %2260 = vmatpush1.bf16.msra.mxu0 0
      %2261 = vmatprep.subr.bf16.mxu0 0
      %2262 = vmatpush1.bf16.msra.mxu0 0
      %2263 = vmatprep.subr.bf16.mxu0 0
      %2264 = vmatpush1.bf16.msra.mxu0 0
      %2265 = vmatprep.subr.bf16.mxu0 0
      %2266 = vmatpush1.bf16.msra.mxu0 0
      %2267 = vmatprep.subr.bf16.mxu0 0
      %2268 = vmatpush1.bf16.msra.mxu0 0
      %2269 = vmatprep.subr.bf16.mxu0 0
      %2270 = vmatpush1.bf16.msra.mxu0 0
      %2271 = vmatprep.subr.bf16.mxu0 0
      %2272 = vmatpush1.bf16.msra.mxu0 0
      %2273 = vmatprep.subr.bf16.mxu0 0
      %2274 = vmatpush1.bf16.msra.mxu0 0
      %2275 = vmatprep.subr.bf16.mxu0 0
      %2276 = vmatpush1.bf16.msra.mxu0 0
      %2277 = vmatprep.mubr.bf16.mxu0 0
      %2278 = vmatmul.mubr.bf16.gmra.mrb[0].mxu0 %v2243
      %v2279 = vpop.f32.mrb[0].mxu0
      %v2280 = vadd.f32 0.0, %v2279
      %v2281 = vpop.f32.mrb[0].mxu0
      %v2282 = vpop.f32.mrb[0].mxu0
      %v2283 = vpop.f32.mrb[0].mxu0
      %2284 = vdwg.mxu0
      %v2293 = vunpack.c.l.b16 %v2146
      %v2294 = vunpack.c.l.b16 %v2147
      %v2295 = vunpack.c.l.b16 %v2148
      %v2296 = vunpack.c.l.b16 %v2149
      %v2297 = vunpack.c.l.b16 %v2150
      %v2298 = vunpack.c.l.b16 %v2151
      %v2299 = vunpack.c.l.b16 %v2152
      %v2300 = vunpack.c.l.b16 %v2153
      %v2301 = vrot.slane %v2294, 7
      %v2302 = vsel %vm2196, %v2301, %v2293
      %v2303 = vrot.slane %v2295, 6
      %v2304 = vsel %vm2199, %v2303, %v2302
      %v2305 = vrot.slane %v2296, 5
      %v2306 = vsel %vm2202, %v2305, %v2304
      %v2307 = vrot.slane %v2297, 4
      %v2308 = vsel %vm2205, %v2307, %v2306
      %v2309 = vrot.slane %v2298, 3
      %v2310 = vsel %vm2208, %v2309, %v2308
      %v2311 = vrot.slane %v2299, 2
      %v2312 = vsel %vm2211, %v2311, %v2310
      %v2313 = vrot.slane %v2300, 1
      %v2314 = vsel %vm2214, %v2313, %v2312
      %v2315 = vpack.c.b16 %v2314, %v2314
      %v2324 = vunpack.c.l.b16 %v2138
      %v2325 = vunpack.c.l.b16 %v2139
      %v2326 = vunpack.c.l.b16 %v2140
      %v2327 = vunpack.c.l.b16 %v2141
      %v2328 = vunpack.c.l.b16 %v2142
      %v2329 = vunpack.c.l.b16 %v2143
      %v2330 = vunpack.c.l.b16 %v2144
      %v2331 = vunpack.c.l.b16 %v2145
      %v2332 = vpack.c.b16 %v2325, %v2324
      %v2333 = vpack.c.b16 %v2327, %v2326
      %v2334 = vpack.c.b16 %v2329, %v2328
      %v2335 = vpack.c.b16 %v2331, %v2330
      %v2341 = vsel %vm2241, %v2315, 0
      %2343 = vmatprep.subr.bf16.mxu0 0
      %2344 = vmatpush1.bf16.msra.mxu0 %v2332
      %2345 = vmatprep.subr.bf16.mxu0 0
      %2346 = vmatpush1.bf16.msra.mxu0 %v2333
      %2347 = vmatprep.subr.bf16.mxu0 0
      %2348 = vmatpush1.bf16.msra.mxu0 %v2334
      %2349 = vmatprep.subr.bf16.mxu0 0
      %2350 = vmatpush1.bf16.msra.mxu0 %v2335
      %2351 = vmatprep.subr.bf16.mxu0 0
      %2352 = vmatpush1.bf16.msra.mxu0 0
      %2353 = vmatprep.subr.bf16.mxu0 0
      %2354 = vmatpush1.bf16.msra.mxu0 0
      %2355 = vmatprep.subr.bf16.mxu0 0
      %2356 = vmatpush1.bf16.msra.mxu0 0
      %2357 = vmatprep.subr.bf16.mxu0 0
      %2358 = vmatpush1.bf16.msra.mxu0 0
      %2359 = vmatprep.subr.bf16.mxu0 0
      %2360 = vmatpush1.bf16.msra.mxu0 0
      %2361 = vmatprep.subr.bf16.mxu0 0
      %2362 = vmatpush1.bf16.msra.mxu0 0
      %2363 = vmatprep.subr.bf16.mxu0 0
      %2364 = vmatpush1.bf16.msra.mxu0 0
      %2365 = vmatprep.subr.bf16.mxu0 0
      %2366 = vmatpush1.bf16.msra.mxu0 0
      %2367 = vmatprep.subr.bf16.mxu0 0
      %2368 = vmatpush1.bf16.msra.mxu0 0
      %2369 = vmatprep.subr.bf16.mxu0 0
      %2370 = vmatpush1.bf16.msra.mxu0 0
      %2371 = vmatprep.subr.bf16.mxu0 0
      %2372 = vmatpush1.bf16.msra.mxu0 0
      %2373 = vmatprep.subr.bf16.mxu0 0
      %2374 = vmatpush1.bf16.msra.mxu0 0
      %2375 = vmatprep.mubr.bf16.mxu0 0
      %2376 = vmatmul.mubr.bf16.gmra.mrb[0].mxu0 %v2341
      %v2377 = vpop.f32.mrb[0].mxu0
      %v2378 = vadd.f32 %v2280, %v2377
      %v2379 = vpop.f32.mrb[0].mxu0
      %v2380 = vpop.f32.mrb[0].mxu0
      %v2381 = vpop.f32.mrb[0].mxu0
      %2382 = vdwg.mxu0
      %v2383 = vld [vmem:[#allocation2 + $0x2] sm:$0x1]
      %v2384 = vld [vmem:[#allocation2 + $0x6] sm:$0x1]
      %v2385 = vld [vmem:[#allocation2 + $0xa] sm:$0x1]
      %v2386 = vld [vmem:[#allocation2 + $0xe] sm:$0x1]
      %v2387 = vld [vmem:[#allocation2 + $0x12] sm:$0x1]
      %v2388 = vld [vmem:[#allocation2 + $0x16] sm:$0x1]
      %v2389 = vld [vmem:[#allocation2 + $0x1a] sm:$0x1]
      %v2390 = vld [vmem:[#allocation2 + $0x1e] sm:$0x1]
      %s2391 = scalar_lea.vmem %s9, 64
      %v2392 = vld [vmem:[%s2391] sm:$0xf]
      %v2393 = vld [vmem:[%s2391 + $0x4] sm:$0xf]
      %v2394 = vld [vmem:[%s2391 + $0x8] sm:$0xf]
      %v2395 = vld [vmem:[%s2391 + $0xc] sm:$0xf]
      %v2396 = vld [vmem:[%s2391 + $0x10] sm:$0xf]
      %v2397 = vld [vmem:[%s2391 + $0x14] sm:$0xf]
      %v2398 = vld [vmem:[%s2391 + $0x18] sm:$0xf]
      %v2399 = vld [vmem:[%s2391 + $0x1c] sm:$0xf]
      %v2400 = vpack.c.bf16 %v2383, %v2383
      %v2401 = vpack.c.bf16 %v2384, %v2384
      %v2402 = vpack.c.bf16 %v2385, %v2385
      %v2403 = vpack.c.bf16 %v2386, %v2386
      %v2404 = vpack.c.bf16 %v2387, %v2387
      %v2405 = vpack.c.bf16 %v2388, %v2388
      %v2406 = vpack.c.bf16 %v2389, %v2389
      %v2407 = vpack.c.bf16 %v2390, %v2390
      %v2416 = vunpack.c.l.b16 %v2400
      %v2417 = vunpack.c.l.b16 %v2401
      %v2418 = vunpack.c.l.b16 %v2402
      %v2419 = vunpack.c.l.b16 %v2403
      %v2420 = vunpack.c.l.b16 %v2404
      %v2421 = vunpack.c.l.b16 %v2405
      %v2422 = vunpack.c.l.b16 %v2406
      %v2423 = vunpack.c.l.b16 %v2407
      %v2424 = vrot.slane %v2417, 7
      %v2425 = vsel %vm2196, %v2424, %v2416
      %v2426 = vrot.slane %v2418, 6
      %v2427 = vsel %vm2199, %v2426, %v2425
      %v2428 = vrot.slane %v2419, 5
      %v2429 = vsel %vm2202, %v2428, %v2427
      %v2430 = vrot.slane %v2420, 4
      %v2431 = vsel %vm2205, %v2430, %v2429
      %v2432 = vrot.slane %v2421, 3
      %v2433 = vsel %vm2208, %v2432, %v2431
      %v2434 = vrot.slane %v2422, 2
      %v2435 = vsel %vm2211, %v2434, %v2433
      %v2436 = vrot.slane %v2423, 1
      %v2437 = vsel %vm2214, %v2436, %v2435
      %v2438 = vpack.c.b16 %v2437, %v2437
      %v2447 = vunpack.c.l.b16 %v2392
      %v2448 = vunpack.c.l.b16 %v2393
      %v2449 = vunpack.c.l.b16 %v2394
      %v2450 = vunpack.c.l.b16 %v2395
      %v2451 = vunpack.c.l.b16 %v2396
      %v2452 = vunpack.c.l.b16 %v2397
      %v2453 = vunpack.c.l.b16 %v2398
      %v2454 = vunpack.c.l.b16 %v2399
      %v2455 = vpack.c.b16 %v2448, %v2447
      %v2456 = vpack.c.b16 %v2450, %v2449
      %v2457 = vpack.c.b16 %v2452, %v2451
      %v2458 = vpack.c.b16 %v2454, %v2453
      %v2464 = vsel %vm2241, %v2438, 0
      %2466 = vmatprep.subr.bf16.mxu0 0
      %2467 = vmatpush1.bf16.msra.mxu0 %v2455
      %2468 = vmatprep.subr.bf16.mxu0 0
      %2469 = vmatpush1.bf16.msra.mxu0 %v2456
      %2470 = vmatprep.subr.bf16.mxu0 0
      %2471 = vmatpush1.bf16.msra.mxu0 %v2457
      %2472 = vmatprep.subr.bf16.mxu0 0
      %2473 = vmatpush1.bf16.msra.mxu0 %v2458
      %2474 = vmatprep.subr.bf16.mxu0 0
      %2475 = vmatpush1.bf16.msra.mxu0 0
      %2476 = vmatprep.subr.bf16.mxu0 0
      %2477 = vmatpush1.bf16.msra.mxu0 0
      %2478 = vmatprep.subr.bf16.mxu0 0
      %2479 = vmatpush1.bf16.msra.mxu0 0
      %2480 = vmatprep.subr.bf16.mxu0 0
      %2481 = vmatpush1.bf16.msra.mxu0 0
      %2482 = vmatprep.subr.bf16.mxu0 0
      %2483 = vmatpush1.bf16.msra.mxu0 0
      %2484 = vmatprep.subr.bf16.mxu0 0
      %2485 = vmatpush1.bf16.msra.mxu0 0
      %2486 = vmatprep.subr.bf16.mxu0 0
      %2487 = vmatpush1.bf16.msra.mxu0 0
      %2488 = vmatprep.subr.bf16.mxu0 0
      %2489 = vmatpush1.bf16.msra.mxu0 0
      %2490 = vmatprep.subr.bf16.mxu0 0
      %2491 = vmatpush1.bf16.msra.mxu0 0
      %2492 = vmatprep.subr.bf16.mxu0 0
      %2493 = vmatpush1.bf16.msra.mxu0 0
      %2494 = vmatprep.subr.bf16.mxu0 0
      %2495 = vmatpush1.bf16.msra.mxu0 0
      %2496 = vmatprep.subr.bf16.mxu0 0
      %2497 = vmatpush1.bf16.msra.mxu0 0
      %2498 = vmatprep.mubr.bf16.mxu0 0
      %2499 = vmatmul.mubr.bf16.gmra.mrb[0].mxu0 %v2464
      %v2500 = vpop.f32.mrb[0].mxu0
      %v2501 = vadd.f32 0.0, %v2500
      %v2502 = vpop.f32.mrb[0].mxu0
      %v2503 = vpop.f32.mrb[0].mxu0
      %v2504 = vpop.f32.mrb[0].mxu0
      %2505 = vdwg.mxu0
      %v2506 = vadd.f32 %v2378, %v2501
      %v2507 = vld [vmem:[#allocation2 + $0x3] sm:$0x1]
      %v2508 = vld [vmem:[#allocation2 + $0x7] sm:$0x1]
      %v2509 = vld [vmem:[#allocation2 + $0xb] sm:$0x1]
      %v2510 = vld [vmem:[#allocation2 + $0xf] sm:$0x1]
      %v2511 = vld [vmem:[#allocation2 + $0x13] sm:$0x1]
      %v2512 = vld [vmem:[#allocation2 + $0x17] sm:$0x1]
      %v2513 = vld [vmem:[#allocation2 + $0x1b] sm:$0x1]
      %v2514 = vld [vmem:[#allocation2 + $0x1f] sm:$0x1]
      %s2515 = scalar_lea.vmem %s9, 96
      %v2516 = vld [vmem:[%s2515] sm:$0xf]
      %v2517 = vld [vmem:[%s2515 + $0x4] sm:$0xf]
      %v2518 = vld [vmem:[%s2515 + $0x8] sm:$0xf]
      %v2519 = vld [vmem:[%s2515 + $0xc] sm:$0xf]
      %v2520 = vld [vmem:[%s2515 + $0x10] sm:$0xf]
      %v2521 = vld [vmem:[%s2515 + $0x14] sm:$0xf]
      %v2522 = vld [vmem:[%s2515 + $0x18] sm:$0xf]
      %v2523 = vld [vmem:[%s2515 + $0x1c] sm:$0xf]
      %v2524 = vpack.c.bf16 %v2507, %v2507
      %v2525 = vpack.c.bf16 %v2508, %v2508
      %v2526 = vpack.c.bf16 %v2509, %v2509
      %v2527 = vpack.c.bf16 %v2510, %v2510
      %v2528 = vpack.c.bf16 %v2511, %v2511
      %v2529 = vpack.c.bf16 %v2512, %v2512
      %v2530 = vpack.c.bf16 %v2513, %v2513
      %v2531 = vpack.c.bf16 %v2514, %v2514
      %v2540 = vunpack.c.l.b16 %v2524
      %v2541 = vunpack.c.l.b16 %v2525
      %v2542 = vunpack.c.l.b16 %v2526
      %v2543 = vunpack.c.l.b16 %v2527
      %v2544 = vunpack.c.l.b16 %v2528
      %v2545 = vunpack.c.l.b16 %v2529
      %v2546 = vunpack.c.l.b16 %v2530
      %v2547 = vunpack.c.l.b16 %v2531
      %v2548 = vrot.slane %v2541, 7
      %v2549 = vsel %vm2196, %v2548, %v2540
      %v2550 = vrot.slane %v2542, 6
      %v2551 = vsel %vm2199, %v2550, %v2549
      %v2552 = vrot.slane %v2543, 5
      %v2553 = vsel %vm2202, %v2552, %v2551
      %v2554 = vrot.slane %v2544, 4
      %v2555 = vsel %vm2205, %v2554, %v2553
      %v2556 = vrot.slane %v2545, 3
      %v2557 = vsel %vm2208, %v2556, %v2555
      %v2558 = vrot.slane %v2546, 2
      %v2559 = vsel %vm2211, %v2558, %v2557
      %v2560 = vrot.slane %v2547, 1
      %v2561 = vsel %vm2214, %v2560, %v2559
      %v2562 = vpack.c.b16 %v2561, %v2561
      %v2571 = vunpack.c.l.b16 %v2516
      %v2572 = vunpack.c.l.b16 %v2517
      %v2573 = vunpack.c.l.b16 %v2518
      %v2574 = vunpack.c.l.b16 %v2519
      %v2575 = vunpack.c.l.b16 %v2520
      %v2576 = vunpack.c.l.b16 %v2521
      %v2577 = vunpack.c.l.b16 %v2522
      %v2578 = vunpack.c.l.b16 %v2523
      %v2579 = vpack.c.b16 %v2572, %v2571
      %v2580 = vpack.c.b16 %v2574, %v2573
      %v2581 = vpack.c.b16 %v2576, %v2575
      %v2582 = vpack.c.b16 %v2578, %v2577
      %v2588 = vsel %vm2241, %v2562, 0
      %2590 = vmatprep.subr.bf16.mxu0 0
      %2591 = vmatpush1.bf16.msra.mxu0 %v2579
      %2592 = vmatprep.subr.bf16.mxu0 0
      %2593 = vmatpush1.bf16.msra.mxu0 %v2580
      %2594 = vmatprep.subr.bf16.mxu0 0
      %2595 = vmatpush1.bf16.msra.mxu0 %v2581
      %2596 = vmatprep.subr.bf16.mxu0 0
      %2597 = vmatpush1.bf16.msra.mxu0 %v2582
      %2598 = vmatprep.subr.bf16.mxu0 0
      %2599 = vmatpush1.bf16.msra.mxu0 0
      %2600 = vmatprep.subr.bf16.mxu0 0
      %2601 = vmatpush1.bf16.msra.mxu0 0
      %2602 = vmatprep.subr.bf16.mxu0 0
      %2603 = vmatpush1.bf16.msra.mxu0 0
      %2604 = vmatprep.subr.bf16.mxu0 0
      %2605 = vmatpush1.bf16.msra.mxu0 0
      %2606 = vmatprep.subr.bf16.mxu0 0
      %2607 = vmatpush1.bf16.msra.mxu0 0
      %2608 = vmatprep.subr.bf16.mxu0 0
      %2609 = vmatpush1.bf16.msra.mxu0 0
      %2610 = vmatprep.subr.bf16.mxu0 0
      %2611 = vmatpush1.bf16.msra.mxu0 0
      %2612 = vmatprep.subr.bf16.mxu0 0
      %2613 = vmatpush1.bf16.msra.mxu0 0
      %2614 = vmatprep.subr.bf16.mxu0 0
      %2615 = vmatpush1.bf16.msra.mxu0 0
      %2616 = vmatprep.subr.bf16.mxu0 0
      %2617 = vmatpush1.bf16.msra.mxu0 0
      %2618 = vmatprep.subr.bf16.mxu0 0
      %2619 = vmatpush1.bf16.msra.mxu0 0
      %2620 = vmatprep.subr.bf16.mxu0 0
      %2621 = vmatpush1.bf16.msra.mxu0 0
      %2622 = vmatprep.mubr.bf16.mxu0 0
      %2623 = vmatmul.mubr.bf16.gmra.mrb[0].mxu0 %v2588
      %v2624 = vpop.f32.mrb[0].mxu0
      %v2625 = vadd.f32 0.0, %v2624
      %v2626 = vpop.f32.mrb[0].mxu0
      %v2627 = vpop.f32.mrb[0].mxu0
      %v2628 = vpop.f32.mrb[0].mxu0
      %2629 = vdwg.mxu0
      %v2630 = vadd.f32 %v2506, %v2625
      %v2631 = vld [vmem:[%s10] sm:$0x1]
      %v2633 = vlaneseq
      %v2634 = vshrl.u32 %v2633, 7
      %v2635 = vsub.s32 0, %v2634
      %v2636 = vrot.slane %v2631, %v2635
      %v2638 = vadd.f32 %v2630, %v2636
      %v2639 = vmax.f32 %v2638, 0.0
      %v2640 = vld [vmem:[%s11] sm:$0xf]
      %v2641 = vld [vmem:[%s11 + $0x4] sm:$0xf]
      %v2642 = vld [vmem:[%s11 + $0x8] sm:$0xf]
      %v2643 = vld [vmem:[%s11 + $0xc] sm:$0xf]
      %v2644 = vld [vmem:[%s11 + $0x10] sm:$0xf]
      %v2645 = vld [vmem:[%s11 + $0x14] sm:$0xf]
      %v2646 = vld [vmem:[%s11 + $0x18] sm:$0xf]
      %v2647 = vld [vmem:[%s11 + $0x1c] sm:$0xf]
      %v2648 = vld [vmem:[%s11 + $0x20] sm:$0xf]
      %v2649 = vld [vmem:[%s11 + $0x24] sm:$0xf]
      %v2650 = vld [vmem:[%s11 + $0x28] sm:$0xf]
      %v2651 = vld [vmem:[%s11 + $0x2c] sm:$0xf]
      %v2652 = vld [vmem:[%s11 + $0x30] sm:$0xf]
      %v2653 = vld [vmem:[%s11 + $0x34] sm:$0xf]
      %v2654 = vld [vmem:[%s11 + $0x38] sm:$0xf]
      %v2655 = vpack.c.bf16 %v2639, %v2639
      %v2656 = vld [vmem:[%s12] sm:$0x1]
      %v2658 = vlaneseq
      %v2659 = vshrl.u32 %v2658, 7
      %v2660 = vsub.s32 0, %v2659
      %v2661 = vrot.slane %v2656, %v2660
      %v2678 = vunpack.c.l.b16 %v2640
      %v2679 = vunpack.c.l.b16 %v2641
      %v2680 = vunpack.c.l.b16 %v2642
      %v2681 = vunpack.c.l.b16 %v2643
      %v2682 = vunpack.c.l.b16 %v2644
      %v2683 = vunpack.c.l.b16 %v2645
      %v2684 = vunpack.c.l.b16 %v2646
      %v2685 = vunpack.c.l.b16 %v2647
      %v2686 = vunpack.c.l.b16 %v2648
      %v2687 = vunpack.c.l.b16 %v2649
      %v2688 = vunpack.c.l.b16 %v2650
      %v2689 = vunpack.c.l.b16 %v2651
      %v2690 = vunpack.c.l.b16 %v2652
      %v2691 = vunpack.c.l.b16 %v2653
      %v2692 = vunpack.c.l.b16 %v2654
      %v2693 = vpack.c.b16 %v2679, %v2678
      %v2694 = vpack.c.b16 %v2681, %v2680
      %v2695 = vpack.c.b16 %v2683, %v2682
      %v2696 = vpack.c.b16 %v2685, %v2684
      %v2697 = vpack.c.b16 %v2687, %v2686
      %v2698 = vpack.c.b16 %v2689, %v2688
      %v2699 = vpack.c.b16 %v2691, %v2690
      %v2700 = vpack.c.b16 %v2692, %v2692
      %vm2708 = vcmask 982016
      %v2710 = vsel %vm2708, %v2655, 0
      %vm2712 = vcmask 1043456
      %v2714 = vsel %vm2712, %v2700, 0
      %2716 = vmatprep.subr.bf16.mxu0 0
      %2717 = vmatpush1.bf16.msra.mxu0 %v2693
      %2718 = vmatprep.subr.bf16.mxu0 0
      %2719 = vmatpush1.bf16.msra.mxu0 %v2694
      %2720 = vmatprep.subr.bf16.mxu0 0
      %2721 = vmatpush1.bf16.msra.mxu0 %v2695
      %2722 = vmatprep.subr.bf16.mxu0 0
      %2723 = vmatpush1.bf16.msra.mxu0 %v2696
      %2724 = vmatprep.subr.bf16.mxu0 0
      %2725 = vmatpush1.bf16.msra.mxu0 %v2697
      %2726 = vmatprep.subr.bf16.mxu0 0
      %2727 = vmatpush1.bf16.msra.mxu0 %v2698
      %2728 = vmatprep.subr.bf16.mxu0 0
      %2729 = vmatpush1.bf16.msra.mxu0 %v2699
      %2730 = vmatprep.subr.bf16.mxu0 0
      %2731 = vmatpush1.bf16.msra.mxu0 %v2714
      %2732 = vmatprep.subr.bf16.mxu0 0
      %2733 = vmatpush1.bf16.msra.mxu0 0
      %2734 = vmatprep.subr.bf16.mxu0 0
      %2735 = vmatpush1.bf16.msra.mxu0 0
      %2736 = vmatprep.subr.bf16.mxu0 0
      %2737 = vmatpush1.bf16.msra.mxu0 0
      %2738 = vmatprep.subr.bf16.mxu0 0
      %2739 = vmatpush1.bf16.msra.mxu0 0
      %2740 = vmatprep.subr.bf16.mxu0 0
      %2741 = vmatpush1.bf16.msra.mxu0 0
      %2742 = vmatprep.subr.bf16.mxu0 0
      %2743 = vmatpush1.bf16.msra.mxu0 0
      %2744 = vmatprep.subr.bf16.mxu0 0
      %2745 = vmatpush1.bf16.msra.mxu0 0
      %2746 = vmatprep.subr.bf16.mxu0 0
      %2747 = vmatpush1.bf16.msra.mxu0 0
      %2748 = vmatprep.mubr.bf16.mxu0 0
      %2749 = vmatmul.mubr.bf16.gmra.mrb[0].mxu0 %v2710
      %v2750 = vpop.f32.mrb[0].mxu0
      %v2751 = vadd.f32 %v2661, %v2750
      %v2752 = vpop.f32.mrb[0].mxu0
      %v2753 = vpop.f32.mrb[0].mxu0
      %v2754 = vpop.f32.mrb[0].mxu0
      %2755 = vdwg.mxu0
      %v2756 = vmax.f32 %v2751, 0.0
      %v2757 = vld [vmem:[%s13] sm:$0xf]
      %v2758 = vld [vmem:[%s13 + $0x4] sm:$0xf]
      %v2759 = vld [vmem:[%s13 + $0x8] sm:$0xf]
      %v2760 = vld [vmem:[%s13 + $0xc] sm:$0xf]
      %v2761 = vld [vmem:[%s13 + $0x10] sm:$0xf]
      %v2762 = vld [vmem:[%s13 + $0x14] sm:$0xf]
      %v2763 = vld [vmem:[%s13 + $0x18] sm:$0xf]
      %v2764 = vld [vmem:[%s13 + $0x1c] sm:$0xf]
      %v2765 = vld [vmem:[%s13 + $0x20] sm:$0xf]
      %v2766 = vld [vmem:[%s13 + $0x24] sm:$0xf]
      %v2767 = vld [vmem:[%s13 + $0x28] sm:$0x3]
      %v2768 = vpack.c.bf16 %v2756, %v2756
      %v2769 = vld [vmem:[%s14] sm:$0x1]
      %v2771 = vlaneseq
      %v2772 = vshrl.u32 %v2771, 7
      %v2773 = vsub.s32 0, %v2772
      %v2774 = vrot.slane %v2769, %v2773
      %v2787 = vunpack.c.l.b16 %v2757
      %v2788 = vunpack.c.l.b16 %v2758
      %v2789 = vunpack.c.l.b16 %v2759
      %v2790 = vunpack.c.l.b16 %v2760
      %v2791 = vunpack.c.l.b16 %v2761
      %v2792 = vunpack.c.l.b16 %v2762
      %v2793 = vunpack.c.l.b16 %v2763
      %v2794 = vunpack.c.l.b16 %v2764
      %v2795 = vunpack.c.l.b16 %v2765
      %v2796 = vunpack.c.l.b16 %v2766
      %v2797 = vunpack.c.l.b16 %v2767
      %v2798 = vpack.c.b16 %v2788, %v2787
      %v2799 = vpack.c.b16 %v2790, %v2789
      %v2800 = vpack.c.b16 %v2792, %v2791
      %v2801 = vpack.c.b16 %v2794, %v2793
      %v2802 = vpack.c.b16 %v2796, %v2795
      %v2803 = vpack.c.b16 %v2797, %v2797
      %vm2809 = vcmask 687104
      %v2811 = vsel %vm2809, %v2768, 0
      %vm2813 = vcmask 1041408
      %v2815 = vsel %vm2813, %v2803, 0
      %2817 = vmatprep.subr.bf16.mxu0 0
      %2818 = vmatpush1.bf16.msra.mxu0 %v2798
      %2819 = vmatprep.subr.bf16.mxu0 0
      %2820 = vmatpush1.bf16.msra.mxu0 %v2799
      %2821 = vmatprep.subr.bf16.mxu0 0
      %2822 = vmatpush1.bf16.msra.mxu0 %v2800
      %2823 = vmatprep.subr.bf16.mxu0 0
      %2824 = vmatpush1.bf16.msra.mxu0 %v2801
      %2825 = vmatprep.subr.bf16.mxu0 0
      %2826 = vmatpush1.bf16.msra.mxu0 %v2802
      %2827 = vmatprep.subr.bf16.mxu0 0
      %2828 = vmatpush1.bf16.msra.mxu0 %v2815
      %2829 = vmatprep.subr.bf16.mxu0 0
      %2830 = vmatpush1.bf16.msra.mxu0 0
      %2831 = vmatprep.subr.bf16.mxu0 0
      %2832 = vmatpush1.bf16.msra.mxu0 0
      %2833 = vmatprep.subr.bf16.mxu0 0
      %2834 = vmatpush1.bf16.msra.mxu0 0
      %2835 = vmatprep.subr.bf16.mxu0 0
      %2836 = vmatpush1.bf16.msra.mxu0 0
      %2837 = vmatprep.subr.bf16.mxu0 0
      %2838 = vmatpush1.bf16.msra.mxu0 0
      %2839 = vmatprep.subr.bf16.mxu0 0
      %2840 = vmatpush1.bf16.msra.mxu0 0
      %2841 = vmatprep.subr.bf16.mxu0 0
      %2842 = vmatpush1.bf16.msra.mxu0 0
      %2843 = vmatprep.subr.bf16.mxu0 0
      %2844 = vmatpush1.bf16.msra.mxu0 0
      %2845 = vmatprep.subr.bf16.mxu0 0
      %2846 = vmatpush1.bf16.msra.mxu0 0
      %2847 = vmatprep.subr.bf16.mxu0 0
      %2848 = vmatpush1.bf16.msra.mxu0 0
      %2849 = vmatprep.mubr.bf16.mxu0 0
      %2850 = vmatmul.mubr.bf16.gmra.mrb[0].mxu0 %v2811
      %v2851 = vpop.f32.mrb[0].mxu0
      %v2852 = vadd.f32 %v2774, %v2851
      %v2853 = vpop.f32.mrb[0].mxu0
      %v2854 = vpop.f32.mrb[0].mxu0
      %v2855 = vpop.f32.mrb[0].mxu0
      %2856 = vdwg.mxu0
      %2857 = vst [vmem:[%s497] sm:$0xff] %v2852
      %p2858 = scmp.lt.s32.totalorder %s26, 2
      %s2859 = scalar_select %p2858, %s26, 2
      %s2860 = smul.addr %s2859, 8
      %s2861 = scalar_lea.vmem %s15, %s2860
      // Predicated region
      $region88: #{net_forward.1} parent=79 // pred_check
        %p2862 = pneg %p364
      $region89: #{net_forward.1} parent=79 // pred_check_branch
        %2864 = sbr.rel (%p2862) target = $region91
      $region90: #{net_forward.1} parent=79 // pred_region
        _
      $region91: #{net_forward.1} parent=79 // pred_fallthru
        _
    $region80: #{net_forward.1} parent=5 // pred_fallthru
      _
    %p2865 = scmp.le.s32.totalorder 2, %s21
    // Predicated region
    $region92: #{net_forward.1} parent=5 // pred_check
      %p2866 = pneg %p2865
    $region93: #{net_forward.1} parent=5 // pred_check_branch
      %2868 = sbr.rel (%p2866) target = $region95
    $region94: #{net_forward.1} parent=5 // pred_region
      %s2869 = ssub.s32 %s21, 2
      // Predicated region
      $region96: #{net_forward.1} parent=94 // pred_check
        %p2870 = pneg %p370
      $region97: #{net_forward.1} parent=94 // pred_check_branch
        %2872 = sbr.rel (%p2870) target = $region99
      $region98: #{net_forward.1} parent=94 // pred_region
        %p2873 = scmp.lt.s32.totalorder %s27, 2
        %s2874 = scalar_select %p2873, %s27, 2
        %s2875 = smul.addr %s2874, 8
        %s2876 = scalar_lea.vmem %s15, %s2875
      $region99: #{net_forward.1} parent=94 // pred_fallthru
        _
    $region95: #{net_forward.1} parent=5 // pred_fallthru
      _
  $region6: #{net_forward.1} parent=0 // loop_footer
    %s25 = sadd.s32 1, %s21
  $region7: #{net_forward.1} parent=0 // loop_footer_branch
    %20 = sbr.rel target = $region3
  $region8: #{net_forward.1} parent=0 // loop_exit
    _

</llo_original>
